<compile_context>
chip_gen: v7x
topology: tpu7x:2x2x1
jax: 0.10.0
libtpu: 0.0.40
codegen_flags: <defaults>
</compile_context>

<pallas_src>
import functools

import jax
import jax.numpy as jnp
import numpy as np
from jax.experimental import pallas as pl
from jax.experimental.pallas import tpu as pltpu


def _decoder_kernel(q_ref, k_ref, v_ref,
                    ln1_w_ref, ln1_b_ref, qkv_w_ref,
                    proj1_w_ref, proj1_b_ref,
                    ln2_w_ref, ln2_b_ref,
                    proj2_w_ref, proj2_b_ref,
                    ln3_w_ref, ln3_b_ref,
                    fc1_w_ref, fc1_b_ref, fc2_w_ref, fc2_b_ref,
                    lnf_w_ref, lnf_b_ref,
                    o_ref, *, depths, heads):
    """Whole TransformerDecoder forward for one batch element (refs are (N, C))."""
    x = q_ref[...].astype(jnp.float32)        # running "query" / residual stream
    key = k_ref[...].astype(jnp.float32)      # cross-attn key (constant per layer)
    val = v_ref[...].astype(jnp.float32)      # cross-attn value (constant per layer)

    c = x.shape[-1]
    d = c // heads
    scale = jnp.float32(1.0 / (float(d) ** 0.5))

    def layer_norm(h, gamma, beta):
        mean = jnp.mean(h, axis=-1, keepdims=True)
        cen = h - mean
        var = jnp.mean(cen * cen, axis=-1, keepdims=True)
        return cen * jax.lax.rsqrt(var + jnp.float32(1e-5)) * gamma + beta

    def gelu(h):
        # tanh approximation of GELU (see TODO above).
        k0 = jnp.float32(0.7978845608028654)   # sqrt(2/pi)
        k1 = jnp.float32(0.044715)
        return jnp.float32(0.5) * h * (jnp.float32(1.0)
                                       + jnp.tanh(k0 * (h + k1 * h * h * h)))

    def softmax(s):
        m = jnp.max(s, axis=-1, keepdims=True)
        e = jnp.exp(s - m)
        return e / jnp.sum(e, axis=-1, keepdims=True)

    # Cross-attention K/V never change across layers: slice per head and fold
    # the 1/sqrt(d) scale into K ONCE (hoisted out of the layer loop).
    key_h = [key[:, h * d:(h + 1) * d] * scale for h in range(heads)]
    val_h = [val[:, h * d:(h + 1) * d] for h in range(heads)]

    def attend(qh, kh, vh):
        # qh @ kh^T without an explicit transpose ("nt" dot_general) -> softmax -> @ vh
        s = jax.lax.dot_general(qh, kh, (((1,), (1,)), ((), ())),
                                preferred_element_type=jnp.float32)
        return jnp.dot(softmax(s), vh, preferred_element_type=jnp.float32)

    def mha_self(qkv):
        """Self-attention from the fused (N, 3C) qkv projection output."""
        outs = []
        for h in range(heads):
            qh = qkv[:, h * d:(h + 1) * d] * scale
            kh = qkv[:, c + h * d: c + (h + 1) * d]
            vh = qkv[:, 2 * c + h * d: 2 * c + (h + 1) * d]
            outs.append(attend(qh, kh, vh))
        return jnp.concatenate(outs, axis=-1)

    def mha_cross(q):
        """Cross-attention: q comes from the decoder stream, k/v are the raw inputs."""
        outs = []
        for h in range(heads):
            outs.append(attend(q[:, h * d:(h + 1) * d], key_h[h], val_h[h]))
        return jnp.concatenate(outs, axis=-1)

    for l in range(depths):
        # --- self-attention block: x = x + proj(MHSA(norm1(x))) ---
        h1 = layer_norm(x, ln1_w_ref[l], ln1_b_ref[l])
        qkv = jnp.dot(h1, qkv_w_ref[l], preferred_element_type=jnp.float32)
        a1 = mha_self(qkv)
        x = x + jnp.dot(a1, proj1_w_ref[l],
                        preferred_element_type=jnp.float32) + proj1_b_ref[l]

        # --- cross-attention block: q = norm2(x), k/v = raw inputs (no qkv proj) ---
        h2 = layer_norm(x, ln2_w_ref[l], ln2_b_ref[l])
        a2 = mha_cross(h2)
        x = x + jnp.dot(a2, proj2_w_ref[l],
                        preferred_element_type=jnp.float32) + proj2_b_ref[l]

        # --- FFN block: x = x + fc2(gelu(fc1(norm3(x)))) ---
        h3 = layer_norm(x, ln3_w_ref[l], ln3_b_ref[l])
        f = gelu(jnp.dot(h3, fc1_w_ref[l],
                         preferred_element_type=jnp.float32) + fc1_b_ref[l])
        x = x + jnp.dot(f, fc2_w_ref[l],
                        preferred_element_type=jnp.float32) + fc2_b_ref[l]

    # final LayerNorm (the flatten happens in the wrapper; it is a free reshape).
    x = layer_norm(x, lnf_w_ref[...], lnf_b_ref[...])
    o_ref[...] = x.astype(o_ref.dtype)


_WEIGHT_ORDER = (
    "ln1_w", "ln1_b", "qkv_w",
    "proj1_w", "proj1_b",
    "ln2_w", "ln2_b",
    "proj2_w", "proj2_b",
    "ln3_w", "ln3_b",
    "fc1_w", "fc1_b", "fc2_w", "fc2_b",
    "lnf_w", "lnf_b",
)


def transformer_decoder(query, key, value, params, *, heads):
    """query/key/value: (B, N, C) f32. Linear weights stored as (in, out).
    Returns (B, N*C) (torch.flatten(x, 1) of the normalized output)."""
    b, n, c = query.shape
    depths = params["qkv_w"].shape[0]

    weight_args = [params[name] for name in _WEIGHT_ORDER]

    def weight_spec(shape):
        rank = len(shape)
        return pl.BlockSpec(shape, lambda i, _r=rank: (0,) * _r)

    seq_spec = pl.BlockSpec((pl.Squeezed(), n, c), lambda i: (i, 0, 0))

    kernel = functools.partial(_decoder_kernel, depths=depths, heads=heads)

    out = pl.pallas_call(
        kernel,
        out_shape=jax.ShapeDtypeStruct((b, n, c), query.dtype),
        grid_spec=pltpu.PrefetchScalarGridSpec(
            num_scalar_prefetch=0,
            grid=(b,),
            in_specs=[seq_spec, seq_spec, seq_spec]
                     + [weight_spec(w.shape) for w in weight_args],
            out_specs=pl.BlockSpec((pl.Squeezed(), n, c), lambda i: (i, 0, 0)),
        ),
        compiler_params=pltpu.CompilerParams(
            dimension_semantics=("parallel",),
            vmem_limit_bytes=32 * 1024 * 1024),
    )(query, key, value, *weight_args)

    return out.reshape(b, n * c)


# ----------------------------- reference & test -----------------------------

def _reference(query, key, value, params, heads):
    """Pure-JAX reference matching the PyTorch forward semantics."""
    depths = params["qkv_w"].shape[0]
    b, n, c = query.shape
    d = c // heads
    scale = 1.0 / np.sqrt(d)
    hp = jax.lax.Precision.HIGHEST

    def ln(h, g, bb):
        mean = jnp.mean(h, axis=-1, keepdims=True)
        var = jnp.mean((h - mean) ** 2, axis=-1, keepdims=True)
        return (h - mean) / jnp.sqrt(var + 1e-5) * g + bb

    def gelu(h):
        return 0.5 * h * (1.0 + jnp.tanh(0.7978845608028654
                                         * (h + 0.044715 * h ** 3)))

    def mha(q, k, v):
        bq, nq, _ = q.shape
        nk = k.shape[1]
        qh = q.reshape(bq, nq, heads, d).transpose(0, 2, 1, 3)
        kh = k.reshape(bq, nk, heads, d).transpose(0, 2, 1, 3)
        vh = v.reshape(bq, nk, heads, d).transpose(0, 2, 1, 3)
        s = jnp.einsum("bhqd,bhkd->bhqk", qh, kh, precision=hp) * scale
        p = jax.nn.softmax(s, axis=-1)
        o = jnp.einsum("bhqk,bhkd->bhqd", p, vh, precision=hp)
        return o.transpose(0, 2, 1, 3).reshape(bq, nq, c)

    x = query
    for l in range(depths):
        h1 = ln(x, params["ln1_w"][l], params["ln1_b"][l])
        qkv = jnp.einsum("bnc,ck->bnk", h1, params["qkv_w"][l], precision=hp)
        qs, ks, vs = jnp.split(qkv, 3, axis=-1)
        x = x + jnp.einsum("bnc,cd->bnd", mha(qs, ks, vs),
                           params["proj1_w"][l], precision=hp) + params["proj1_b"][l]
        h2 = ln(x, params["ln2_w"][l], params["ln2_b"][l])
        x = x + jnp.einsum("bnc,cd->bnd", mha(h2, key, value),
                           params["proj2_w"][l], precision=hp) + params["proj2_b"][l]
        h3 = ln(x, params["ln3_w"][l], params["ln3_b"][l])
        f = gelu(jnp.einsum("bnc,ch->bnh", h3, params["fc1_w"][l], precision=hp)
                 + params["fc1_b"][l])
        x = x + jnp.einsum("bnh,hc->bnc", f, params["fc2_w"][l], precision=hp) \
              + params["fc2_b"][l]
    x = ln(x, params["lnf_w"][0], params["lnf_b"][0])
    return x.reshape(b, n * c)


def _init_params(rng, depths, c, ffn_ratio=4.0):
    hidden = int(c * ffn_ratio)
    ks = list(jax.random.split(rng, 17))

    def lin_w(k, fan_in, shape):          # PyTorch nn.Linear-style uniform init
        bound = 1.0 / np.sqrt(fan_in)
        return jax.random.uniform(k, shape, jnp.float32, -bound, bound)

    def norm_w(k, shape, base):           # perturbed LayerNorm affine params
        return base + 0.1 * jax.random.normal(k, shape, jnp.float32)

    return {
        "ln1_w": norm_w(ks[0], (depths, 1, c), 1.0),
        "ln1_b": norm_w(ks[1], (depths, 1, c), 0.0),
        "qkv_w": lin_w(ks[2], c, (depths, c, 3 * c)),          # bias=False
        "proj1_w": lin_w(ks[3], c, (depths, c, c)),
        "proj1_b": lin_w(ks[4], c, (depths, 1, c)),
        "ln2_w": norm_w(ks[5], (depths, 1, c), 1.0),
        "ln2_b": norm_w(ks[6], (depths, 1, c), 0.0),
        "proj2_w": lin_w(ks[7], c, (depths, c, c)),
        "proj2_b": lin_w(ks[8], c, (depths, 1, c)),
        "ln3_w": norm_w(ks[9], (depths, 1, c), 1.0),
        "ln3_b": norm_w(ks[10], (depths, 1, c), 0.0),
        "fc1_w": lin_w(ks[11], c, (depths, c, hidden)),
        "fc1_b": lin_w(ks[12], c, (depths, 1, hidden)),
        "fc2_w": lin_w(ks[13], hidden, (depths, hidden, c)),
        "fc2_b": lin_w(ks[14], hidden, (depths, 1, c)),
        "lnf_w": norm_w(ks[15], (1, c), 1.0),
        "lnf_b": norm_w(ks[16], (1, c), 0.0),
    }


if __name__ == "__main__":
    root = jax.random.PRNGKey(0)
    k_in, k_par = jax.random.split(root)
    kq, kk, kv = jax.random.split(k_in, 3)

    B, N, C, HEADS, DEPTHS = 2, 8, 32, 4, 2
    query = jax.random.normal(kq, (B, N, C), jnp.float32)
    key_t = jax.random.normal(kk, (B, N, C), jnp.float32)
    value_t = jax.random.normal(kv, (B, N, C), jnp.float32)
    params = _init_params(k_par, DEPTHS, C, ffn_ratio=4.0)

    out = transformer_decoder(query, key_t, value_t, params, heads=HEADS)
    out = jax.block_until_ready(out)
    assert out.shape == (B, N * C), out.shape

    ref = _reference(query, key_t, value_t, params, HEADS)
    np.testing.assert_allclose(np.asarray(out), np.asarray(ref),
                               atol=1e-2, rtol=1e-3)

    print("KERNEL_OK")
</pallas_src>

<mosaic_0001>
module attributes {stable_mosaic.version = 11 : i64} {
  func.func @_decoder_kernel(%arg0: i32, %arg1: memref<1x8x32xf32, #tpu.memory_space<vmem>>, %arg2: memref<1x8x32xf32, #tpu.memory_space<vmem>>, %arg3: memref<1x8x32xf32, #tpu.memory_space<vmem>>, %arg4: memref<2x1x32xf32, #tpu.memory_space<vmem>>, %arg5: memref<2x1x32xf32, #tpu.memory_space<vmem>>, %arg6: memref<2x32x96xf32, #tpu.memory_space<vmem>>, %arg7: memref<2x32x32xf32, #tpu.memory_space<vmem>>, %arg8: memref<2x1x32xf32, #tpu.memory_space<vmem>>, %arg9: memref<2x1x32xf32, #tpu.memory_space<vmem>>, %arg10: memref<2x1x32xf32, #tpu.memory_space<vmem>>, %arg11: memref<2x32x32xf32, #tpu.memory_space<vmem>>, %arg12: memref<2x1x32xf32, #tpu.memory_space<vmem>>, %arg13: memref<2x1x32xf32, #tpu.memory_space<vmem>>, %arg14: memref<2x1x32xf32, #tpu.memory_space<vmem>>, %arg15: memref<2x32x128xf32, #tpu.memory_space<vmem>>, %arg16: memref<2x1x128xf32, #tpu.memory_space<vmem>>, %arg17: memref<2x128x32xf32, #tpu.memory_space<vmem>>, %arg18: memref<2x1x32xf32, #tpu.memory_space<vmem>>, %arg19: memref<1x32xf32, #tpu.memory_space<vmem>>, %arg20: memref<1x32xf32, #tpu.memory_space<vmem>>, %arg21: memref<1x8x32xf32, #tpu.memory_space<vmem>>) attributes {dimension_semantics = [#tpu.dimension_semantics<parallel>], iteration_bounds = array<i64: 2>, scalar_prefetch = 0 : i64, scratch_operands = 0 : i64, tpu.core_type = #tpu.core_type<tc>, window_params = [{transform_indices = @transform_0, window_bounds = array<i64: 1, 8, 32>}, {transform_indices = @transform_1, window_bounds = array<i64: 1, 8, 32>}, {transform_indices = @transform_2, window_bounds = array<i64: 1, 8, 32>}, {pipeline_mode = #tpu.pipeline_mode<synchronous>, transform_indices = @transform_3, window_bounds = array<i64: 2, 1, 32>}, {pipeline_mode = #tpu.pipeline_mode<synchronous>, transform_indices = @transform_4, window_bounds = array<i64: 2, 1, 32>}, {pipeline_mode = #tpu.pipeline_mode<synchronous>, transform_indices = @transform_5, window_bounds = array<i64: 2, 32, 96>}, {pipeline_mode = #tpu.pipeline_mode<synchronous>, transform_indices = @transform_6, window_bounds = array<i64: 2, 32, 32>}, {pipeline_mode = #tpu.pipeline_mode<synchronous>, transform_indices = @transform_7, window_bounds = array<i64: 2, 1, 32>}, {pipeline_mode = #tpu.pipeline_mode<synchronous>, transform_indices = @transform_8, window_bounds = array<i64: 2, 1, 32>}, {pipeline_mode = #tpu.pipeline_mode<synchronous>, transform_indices = @transform_9, window_bounds = array<i64: 2, 1, 32>}, {pipeline_mode = #tpu.pipeline_mode<synchronous>, transform_indices = @transform_10, window_bounds = array<i64: 2, 32, 32>}, {pipeline_mode = #tpu.pipeline_mode<synchronous>, transform_indices = @transform_11, window_bounds = array<i64: 2, 1, 32>}, {pipeline_mode = #tpu.pipeline_mode<synchronous>, transform_indices = @transform_12, window_bounds = array<i64: 2, 1, 32>}, {pipeline_mode = #tpu.pipeline_mode<synchronous>, transform_indices = @transform_13, window_bounds = array<i64: 2, 1, 32>}, {pipeline_mode = #tpu.pipeline_mode<synchronous>, transform_indices = @transform_14, window_bounds = array<i64: 2, 32, 128>}, {pipeline_mode = #tpu.pipeline_mode<synchronous>, transform_indices = @transform_15, window_bounds = array<i64: 2, 1, 128>}, {pipeline_mode = #tpu.pipeline_mode<synchronous>, transform_indices = @transform_16, window_bounds = array<i64: 2, 128, 32>}, {pipeline_mode = #tpu.pipeline_mode<synchronous>, transform_indices = @transform_17, window_bounds = array<i64: 2, 1, 32>}, {pipeline_mode = #tpu.pipeline_mode<synchronous>, transform_indices = @transform_18, window_bounds = array<i64: 1, 32>}, {pipeline_mode = #tpu.pipeline_mode<synchronous>, transform_indices = @transform_19, window_bounds = array<i64: 1, 32>}, {transform_indices = @transform_20, window_bounds = array<i64: 1, 8, 32>}]} {
    %c0 = arith.constant 0 : index
    %c0_0 = arith.constant 0 : index
    %c0_1 = arith.constant 0 : index
    %0 = vector.load %arg1[%c0, %c0_0, %c0_1] : memref<1x8x32xf32, #tpu.memory_space<vmem>>, vector<1x8x32xf32>
    %1 = vector.shape_cast %0 : vector<1x8x32xf32> to vector<8x32xf32>
    %c0_2 = arith.constant 0 : index
    %c0_3 = arith.constant 0 : index
    %c0_4 = arith.constant 0 : index
    %2 = vector.load %arg2[%c0_2, %c0_3, %c0_4] : memref<1x8x32xf32, #tpu.memory_space<vmem>>, vector<1x8x32xf32>
    %3 = vector.shape_cast %2 : vector<1x8x32xf32> to vector<8x32xf32>
    %c0_5 = arith.constant 0 : index
    %c0_6 = arith.constant 0 : index
    %c0_7 = arith.constant 0 : index
    %4 = vector.load %arg3[%c0_5, %c0_6, %c0_7] : memref<1x8x32xf32, #tpu.memory_space<vmem>>, vector<1x8x32xf32>
    %5 = vector.shape_cast %4 : vector<1x8x32xf32> to vector<8x32xf32>
    %6 = vector.extract_strided_slice %3 {offsets = [0, 0], sizes = [8, 8], strides = [1, 1]} : vector<8x32xf32> to vector<8x8xf32>
    %cst = arith.constant 0.353553385 : f32
    %7 = vector.broadcast %cst : f32 to vector<8x8xf32>
    %8 = arith.mulf %6, %7 : vector<8x8xf32>
    %9 = vector.extract_strided_slice %3 {offsets = [0, 8], sizes = [8, 8], strides = [1, 1]} : vector<8x32xf32> to vector<8x8xf32>
    %cst_8 = arith.constant 0.353553385 : f32
    %10 = vector.broadcast %cst_8 : f32 to vector<8x8xf32>
    %11 = arith.mulf %9, %10 : vector<8x8xf32>
    %12 = vector.extract_strided_slice %3 {offsets = [0, 16], sizes = [8, 8], strides = [1, 1]} : vector<8x32xf32> to vector<8x8xf32>
    %cst_9 = arith.constant 0.353553385 : f32
    %13 = vector.broadcast %cst_9 : f32 to vector<8x8xf32>
    %14 = arith.mulf %12, %13 : vector<8x8xf32>
    %15 = vector.extract_strided_slice %3 {offsets = [0, 24], sizes = [8, 8], strides = [1, 1]} : vector<8x32xf32> to vector<8x8xf32>
    %cst_10 = arith.constant 0.353553385 : f32
    %16 = vector.broadcast %cst_10 : f32 to vector<8x8xf32>
    %17 = arith.mulf %15, %16 : vector<8x8xf32>
    %18 = vector.extract_strided_slice %5 {offsets = [0, 0], sizes = [8, 8], strides = [1, 1]} : vector<8x32xf32> to vector<8x8xf32>
    %19 = vector.extract_strided_slice %5 {offsets = [0, 8], sizes = [8, 8], strides = [1, 1]} : vector<8x32xf32> to vector<8x8xf32>
    %20 = vector.extract_strided_slice %5 {offsets = [0, 16], sizes = [8, 8], strides = [1, 1]} : vector<8x32xf32> to vector<8x8xf32>
    %21 = vector.extract_strided_slice %5 {offsets = [0, 24], sizes = [8, 8], strides = [1, 1]} : vector<8x32xf32> to vector<8x8xf32>
    %c0_11 = arith.constant 0 : index
    %c0_12 = arith.constant 0 : index
    %c0_13 = arith.constant 0 : index
    %22 = vector.load %arg4[%c0_11, %c0_12, %c0_13] : memref<2x1x32xf32, #tpu.memory_space<vmem>>, vector<1x1x32xf32>
    %23 = vector.shape_cast %22 : vector<1x1x32xf32> to vector<1x32xf32>
    %c0_14 = arith.constant 0 : index
    %c0_15 = arith.constant 0 : index
    %c0_16 = arith.constant 0 : index
    %24 = vector.load %arg5[%c0_14, %c0_15, %c0_16] : memref<2x1x32xf32, #tpu.memory_space<vmem>>, vector<1x1x32xf32>
    %25 = vector.shape_cast %24 : vector<1x1x32xf32> to vector<1x32xf32>
    %cst_17 = arith.constant dense<0.000000e+00> : vector<8xf32>
    %26 = vector.multi_reduction <add>, %1, %cst_17 [1] : vector<8x32xf32> to vector<8xf32>
    %27 = vector.shape_cast %26 : vector<8xf32> to vector<8x1xf32>
    %cst_18 = arith.constant 3.200000e+01 : f32
    %28 = vector.broadcast %cst_18 : f32 to vector<8x1xf32>
    %29 = arith.divf %27, %28 : vector<8x1xf32>
    %30 = vector.broadcast %29 : vector<8x1xf32> to vector<8x32xf32>
    %31 = arith.subf %1, %30 : vector<8x32xf32>
    %32 = arith.mulf %31, %31 : vector<8x32xf32>
    %cst_19 = arith.constant dense<0.000000e+00> : vector<8xf32>
    %33 = vector.multi_reduction <add>, %32, %cst_19 [1] : vector<8x32xf32> to vector<8xf32>
    %34 = vector.shape_cast %33 : vector<8xf32> to vector<8x1xf32>
    %cst_20 = arith.constant 3.200000e+01 : f32
    %35 = vector.broadcast %cst_20 : f32 to vector<8x1xf32>
    %36 = arith.divf %34, %35 : vector<8x1xf32>
    %cst_21 = arith.constant 9.99999974E-6 : f32
    %37 = vector.broadcast %cst_21 : f32 to vector<8x1xf32>
    %38 = arith.addf %36, %37 : vector<8x1xf32>
    %39 = math.rsqrt %38 : vector<8x1xf32>
    %40 = vector.broadcast %39 : vector<8x1xf32> to vector<8x32xf32>
    %41 = arith.mulf %31, %40 : vector<8x32xf32>
    %42 = vector.broadcast %23 : vector<1x32xf32> to vector<8x32xf32>
    %43 = arith.mulf %41, %42 : vector<8x32xf32>
    %44 = vector.broadcast %25 : vector<1x32xf32> to vector<8x32xf32>
    %45 = arith.addf %43, %44 : vector<8x32xf32>
    %c0_22 = arith.constant 0 : index
    %c0_23 = arith.constant 0 : index
    %c0_24 = arith.constant 0 : index
    %46 = vector.load %arg6[%c0_22, %c0_23, %c0_24] : memref<2x32x96xf32, #tpu.memory_space<vmem>>, vector<1x32x96xf32>
    %47 = vector.shape_cast %46 : vector<1x32x96xf32> to vector<32x96xf32>
    %cst_25 = arith.constant dense<0.000000e+00> : vector<8x96xf32>
    %48 = tpu.matmul %45, %47, %cst_25 {dimension_numbers = #tpu.dot_dimension_numbers<[1], [0], [0], [1], [0, 0, 1, 1], [], []>} : vector<8x32xf32>, vector<32x96xf32>, vector<8x96xf32> -> vector<8x96xf32>
    %49 = vector.extract_strided_slice %48 {offsets = [0, 0], sizes = [8, 8], strides = [1, 1]} : vector<8x96xf32> to vector<8x8xf32>
    %cst_26 = arith.constant 0.353553385 : f32
    %50 = vector.broadcast %cst_26 : f32 to vector<8x8xf32>
    %51 = arith.mulf %49, %50 : vector<8x8xf32>
    %52 = vector.extract_strided_slice %48 {offsets = [0, 32], sizes = [8, 8], strides = [1, 1]} : vector<8x96xf32> to vector<8x8xf32>
    %53 = vector.extract_strided_slice %48 {offsets = [0, 64], sizes = [8, 8], strides = [1, 1]} : vector<8x96xf32> to vector<8x8xf32>
    %cst_27 = arith.constant dense<0.000000e+00> : vector<8x8xf32>
    %54 = tpu.matmul %51, %52, %cst_27 {dimension_numbers = #tpu.dot_dimension_numbers<[1], [1], [0], [0], [0, 0, 1, 0], [], []>} : vector<8x8xf32>, vector<8x8xf32>, vector<8x8xf32> -> vector<8x8xf32>
    %cst_28 = arith.constant dense<0xFF800000> : vector<8xf32>
    %55 = vector.multi_reduction <maximumf>, %54, %cst_28 [1] : vector<8x8xf32> to vector<8xf32>
    %56 = vector.shape_cast %55 : vector<8xf32> to vector<8x1xf32>
    %57 = vector.broadcast %56 : vector<8x1xf32> to vector<8x8xf32>
    %58 = arith.subf %54, %57 : vector<8x8xf32>
    %59 = math.exp %58 : vector<8x8xf32>
    %cst_29 = arith.constant dense<0.000000e+00> : vector<8xf32>
    %60 = vector.multi_reduction <add>, %59, %cst_29 [1] : vector<8x8xf32> to vector<8xf32>
    %61 = vector.shape_cast %60 : vector<8xf32> to vector<8x1xf32>
    %62 = vector.broadcast %61 : vector<8x1xf32> to vector<8x8xf32>
    %63 = arith.divf %59, %62 : vector<8x8xf32>
    %cst_30 = arith.constant dense<0.000000e+00> : vector<8x8xf32>
    %64 = tpu.matmul %63, %53, %cst_30 {dimension_numbers = #tpu.dot_dimension_numbers<[1], [0], [0], [1], [0, 0, 1, 1], [], []>} : vector<8x8xf32>, vector<8x8xf32>, vector<8x8xf32> -> vector<8x8xf32>
    %65 = vector.extract_strided_slice %48 {offsets = [0, 8], sizes = [8, 8], strides = [1, 1]} : vector<8x96xf32> to vector<8x8xf32>
    %cst_31 = arith.constant 0.353553385 : f32
    %66 = vector.broadcast %cst_31 : f32 to vector<8x8xf32>
    %67 = arith.mulf %65, %66 : vector<8x8xf32>
    %68 = vector.extract_strided_slice %48 {offsets = [0, 40], sizes = [8, 8], strides = [1, 1]} : vector<8x96xf32> to vector<8x8xf32>
    %69 = vector.extract_strided_slice %48 {offsets = [0, 72], sizes = [8, 8], strides = [1, 1]} : vector<8x96xf32> to vector<8x8xf32>
    %cst_32 = arith.constant dense<0.000000e+00> : vector<8x8xf32>
    %70 = tpu.matmul %67, %68, %cst_32 {dimension_numbers = #tpu.dot_dimension_numbers<[1], [1], [0], [0], [0, 0, 1, 0], [], []>} : vector<8x8xf32>, vector<8x8xf32>, vector<8x8xf32> -> vector<8x8xf32>
    %cst_33 = arith.constant dense<0xFF800000> : vector<8xf32>
    %71 = vector.multi_reduction <maximumf>, %70, %cst_33 [1] : vector<8x8xf32> to vector<8xf32>
    %72 = vector.shape_cast %71 : vector<8xf32> to vector<8x1xf32>
    %73 = vector.broadcast %72 : vector<8x1xf32> to vector<8x8xf32>
    %74 = arith.subf %70, %73 : vector<8x8xf32>
    %75 = math.exp %74 : vector<8x8xf32>
    %cst_34 = arith.constant dense<0.000000e+00> : vector<8xf32>
    %76 = vector.multi_reduction <add>, %75, %cst_34 [1] : vector<8x8xf32> to vector<8xf32>
    %77 = vector.shape_cast %76 : vector<8xf32> to vector<8x1xf32>
    %78 = vector.broadcast %77 : vector<8x1xf32> to vector<8x8xf32>
    %79 = arith.divf %75, %78 : vector<8x8xf32>
    %cst_35 = arith.constant dense<0.000000e+00> : vector<8x8xf32>
    %80 = tpu.matmul %79, %69, %cst_35 {dimension_numbers = #tpu.dot_dimension_numbers<[1], [0], [0], [1], [0, 0, 1, 1], [], []>} : vector<8x8xf32>, vector<8x8xf32>, vector<8x8xf32> -> vector<8x8xf32>
    %81 = vector.extract_strided_slice %48 {offsets = [0, 16], sizes = [8, 8], strides = [1, 1]} : vector<8x96xf32> to vector<8x8xf32>
    %cst_36 = arith.constant 0.353553385 : f32
    %82 = vector.broadcast %cst_36 : f32 to vector<8x8xf32>
    %83 = arith.mulf %81, %82 : vector<8x8xf32>
    %84 = vector.extract_strided_slice %48 {offsets = [0, 48], sizes = [8, 8], strides = [1, 1]} : vector<8x96xf32> to vector<8x8xf32>
    %85 = vector.extract_strided_slice %48 {offsets = [0, 80], sizes = [8, 8], strides = [1, 1]} : vector<8x96xf32> to vector<8x8xf32>
    %cst_37 = arith.constant dense<0.000000e+00> : vector<8x8xf32>
    %86 = tpu.matmul %83, %84, %cst_37 {dimension_numbers = #tpu.dot_dimension_numbers<[1], [1], [0], [0], [0, 0, 1, 0], [], []>} : vector<8x8xf32>, vector<8x8xf32>, vector<8x8xf32> -> vector<8x8xf32>
    %cst_38 = arith.constant dense<0xFF800000> : vector<8xf32>
    %87 = vector.multi_reduction <maximumf>, %86, %cst_38 [1] : vector<8x8xf32> to vector<8xf32>
    %88 = vector.shape_cast %87 : vector<8xf32> to vector<8x1xf32>
    %89 = vector.broadcast %88 : vector<8x1xf32> to vector<8x8xf32>
    %90 = arith.subf %86, %89 : vector<8x8xf32>
    %91 = math.exp %90 : vector<8x8xf32>
    %cst_39 = arith.constant dense<0.000000e+00> : vector<8xf32>
    %92 = vector.multi_reduction <add>, %91, %cst_39 [1] : vector<8x8xf32> to vector<8xf32>
    %93 = vector.shape_cast %92 : vector<8xf32> to vector<8x1xf32>
    %94 = vector.broadcast %93 : vector<8x1xf32> to vector<8x8xf32>
    %95 = arith.divf %91, %94 : vector<8x8xf32>
    %cst_40 = arith.constant dense<0.000000e+00> : vector<8x8xf32>
    %96 = tpu.matmul %95, %85, %cst_40 {dimension_numbers = #tpu.dot_dimension_numbers<[1], [0], [0], [1], [0, 0, 1, 1], [], []>} : vector<8x8xf32>, vector<8x8xf32>, vector<8x8xf32> -> vector<8x8xf32>
    %97 = vector.extract_strided_slice %48 {offsets = [0, 24], sizes = [8, 8], strides = [1, 1]} : vector<8x96xf32> to vector<8x8xf32>
    %cst_41 = arith.constant 0.353553385 : f32
    %98 = vector.broadcast %cst_41 : f32 to vector<8x8xf32>
    %99 = arith.mulf %97, %98 : vector<8x8xf32>
    %100 = vector.extract_strided_slice %48 {offsets = [0, 56], sizes = [8, 8], strides = [1, 1]} : vector<8x96xf32> to vector<8x8xf32>
    %101 = vector.extract_strided_slice %48 {offsets = [0, 88], sizes = [8, 8], strides = [1, 1]} : vector<8x96xf32> to vector<8x8xf32>
    %cst_42 = arith.constant dense<0.000000e+00> : vector<8x8xf32>
    %102 = tpu.matmul %99, %100, %cst_42 {dimension_numbers = #tpu.dot_dimension_numbers<[1], [1], [0], [0], [0, 0, 1, 0], [], []>} : vector<8x8xf32>, vector<8x8xf32>, vector<8x8xf32> -> vector<8x8xf32>
    %cst_43 = arith.constant dense<0xFF800000> : vector<8xf32>
    %103 = vector.multi_reduction <maximumf>, %102, %cst_43 [1] : vector<8x8xf32> to vector<8xf32>
    %104 = vector.shape_cast %103 : vector<8xf32> to vector<8x1xf32>
    %105 = vector.broadcast %104 : vector<8x1xf32> to vector<8x8xf32>
    %106 = arith.subf %102, %105 : vector<8x8xf32>
    %107 = math.exp %106 : vector<8x8xf32>
    %cst_44 = arith.constant dense<0.000000e+00> : vector<8xf32>
    %108 = vector.multi_reduction <add>, %107, %cst_44 [1] : vector<8x8xf32> to vector<8xf32>
    %109 = vector.shape_cast %108 : vector<8xf32> to vector<8x1xf32>
    %110 = vector.broadcast %109 : vector<8x1xf32> to vector<8x8xf32>
    %111 = arith.divf %107, %110 : vector<8x8xf32>
    %cst_45 = arith.constant dense<0.000000e+00> : vector<8x8xf32>
    %112 = tpu.matmul %111, %101, %cst_45 {dimension_numbers = #tpu.dot_dimension_numbers<[1], [0], [0], [1], [0, 0, 1, 1], [], []>} : vector<8x8xf32>, vector<8x8xf32>, vector<8x8xf32> -> vector<8x8xf32>
    %113 = tpu.concatenate %64, %80, %96, %112 in 1 : vector<8x8xf32>, vector<8x8xf32>, vector<8x8xf32>, vector<8x8xf32> -> vector<8x32xf32>
    %c0_46 = arith.constant 0 : index
    %c0_47 = arith.constant 0 : index
    %c0_48 = arith.constant 0 : index
    %114 = vector.load %arg7[%c0_46, %c0_47, %c0_48] : memref<2x32x32xf32, #tpu.memory_space<vmem>>, vector<1x32x32xf32>
    %115 = vector.shape_cast %114 : vector<1x32x32xf32> to vector<32x32xf32>
    %cst_49 = arith.constant dense<0.000000e+00> : vector<8x32xf32>
    %116 = tpu.matmul %113, %115, %cst_49 {dimension_numbers = #tpu.dot_dimension_numbers<[1], [0], [0], [1], [0, 0, 1, 1], [], []>} : vector<8x32xf32>, vector<32x32xf32>, vector<8x32xf32> -> vector<8x32xf32>
    %117 = arith.addf %1, %116 : vector<8x32xf32>
    %c0_50 = arith.constant 0 : index
    %c0_51 = arith.constant 0 : index
    %c0_52 = arith.constant 0 : index
    %118 = vector.load %arg8[%c0_50, %c0_51, %c0_52] : memref<2x1x32xf32, #tpu.memory_space<vmem>>, vector<1x1x32xf32>
    %119 = vector.shape_cast %118 : vector<1x1x32xf32> to vector<1x32xf32>
    %120 = vector.broadcast %119 : vector<1x32xf32> to vector<8x32xf32>
    %121 = arith.addf %117, %120 : vector<8x32xf32>
    %c0_53 = arith.constant 0 : index
    %c0_54 = arith.constant 0 : index
    %c0_55 = arith.constant 0 : index
    %122 = vector.load %arg9[%c0_53, %c0_54, %c0_55] : memref<2x1x32xf32, #tpu.memory_space<vmem>>, vector<1x1x32xf32>
    %123 = vector.shape_cast %122 : vector<1x1x32xf32> to vector<1x32xf32>
    %c0_56 = arith.constant 0 : index
    %c0_57 = arith.constant 0 : index
    %c0_58 = arith.constant 0 : index
    %124 = vector.load %arg10[%c0_56, %c0_57, %c0_58] : memref<2x1x32xf32, #tpu.memory_space<vmem>>, vector<1x1x32xf32>
    %125 = vector.shape_cast %124 : vector<1x1x32xf32> to vector<1x32xf32>
    %cst_59 = arith.constant dense<0.000000e+00> : vector<8xf32>
    %126 = vector.multi_reduction <add>, %121, %cst_59 [1] : vector<8x32xf32> to vector<8xf32>
    %127 = vector.shape_cast %126 : vector<8xf32> to vector<8x1xf32>
    %cst_60 = arith.constant 3.200000e+01 : f32
    %128 = vector.broadcast %cst_60 : f32 to vector<8x1xf32>
    %129 = arith.divf %127, %128 : vector<8x1xf32>
    %130 = vector.broadcast %129 : vector<8x1xf32> to vector<8x32xf32>
    %131 = arith.subf %121, %130 : vector<8x32xf32>
    %132 = arith.mulf %131, %131 : vector<8x32xf32>
    %cst_61 = arith.constant dense<0.000000e+00> : vector<8xf32>
    %133 = vector.multi_reduction <add>, %132, %cst_61 [1] : vector<8x32xf32> to vector<8xf32>
    %134 = vector.shape_cast %133 : vector<8xf32> to vector<8x1xf32>
    %cst_62 = arith.constant 3.200000e+01 : f32
    %135 = vector.broadcast %cst_62 : f32 to vector<8x1xf32>
    %136 = arith.divf %134, %135 : vector<8x1xf32>
    %cst_63 = arith.constant 9.99999974E-6 : f32
    %137 = vector.broadcast %cst_63 : f32 to vector<8x1xf32>
    %138 = arith.addf %136, %137 : vector<8x1xf32>
    %139 = math.rsqrt %138 : vector<8x1xf32>
    %140 = vector.broadcast %139 : vector<8x1xf32> to vector<8x32xf32>
    %141 = arith.mulf %131, %140 : vector<8x32xf32>
    %142 = vector.broadcast %123 : vector<1x32xf32> to vector<8x32xf32>
    %143 = arith.mulf %141, %142 : vector<8x32xf32>
    %144 = vector.broadcast %125 : vector<1x32xf32> to vector<8x32xf32>
    %145 = arith.addf %143, %144 : vector<8x32xf32>
    %146 = vector.extract_strided_slice %145 {offsets = [0, 0], sizes = [8, 8], strides = [1, 1]} : vector<8x32xf32> to vector<8x8xf32>
    %cst_64 = arith.constant dense<0.000000e+00> : vector<8x8xf32>
    %147 = tpu.matmul %146, %8, %cst_64 {dimension_numbers = #tpu.dot_dimension_numbers<[1], [1], [0], [0], [0, 0, 1, 0], [], []>} : vector<8x8xf32>, vector<8x8xf32>, vector<8x8xf32> -> vector<8x8xf32>
    %cst_65 = arith.constant dense<0xFF800000> : vector<8xf32>
    %148 = vector.multi_reduction <maximumf>, %147, %cst_65 [1] : vector<8x8xf32> to vector<8xf32>
    %149 = vector.shape_cast %148 : vector<8xf32> to vector<8x1xf32>
    %150 = vector.broadcast %149 : vector<8x1xf32> to vector<8x8xf32>
    %151 = arith.subf %147, %150 : vector<8x8xf32>
    %152 = math.exp %151 : vector<8x8xf32>
    %cst_66 = arith.constant dense<0.000000e+00> : vector<8xf32>
    %153 = vector.multi_reduction <add>, %152, %cst_66 [1] : vector<8x8xf32> to vector<8xf32>
    %154 = vector.shape_cast %153 : vector<8xf32> to vector<8x1xf32>
    %155 = vector.broadcast %154 : vector<8x1xf32> to vector<8x8xf32>
    %156 = arith.divf %152, %155 : vector<8x8xf32>
    %cst_67 = arith.constant dense<0.000000e+00> : vector<8x8xf32>
    %157 = tpu.matmul %156, %18, %cst_67 {dimension_numbers = #tpu.dot_dimension_numbers<[1], [0], [0], [1], [0, 0, 1, 1], [], []>} : vector<8x8xf32>, vector<8x8xf32>, vector<8x8xf32> -> vector<8x8xf32>
    %158 = vector.extract_strided_slice %145 {offsets = [0, 8], sizes = [8, 8], strides = [1, 1]} : vector<8x32xf32> to vector<8x8xf32>
    %cst_68 = arith.constant dense<0.000000e+00> : vector<8x8xf32>
    %159 = tpu.matmul %158, %11, %cst_68 {dimension_numbers = #tpu.dot_dimension_numbers<[1], [1], [0], [0], [0, 0, 1, 0], [], []>} : vector<8x8xf32>, vector<8x8xf32>, vector<8x8xf32> -> vector<8x8xf32>
    %cst_69 = arith.constant dense<0xFF800000> : vector<8xf32>
    %160 = vector.multi_reduction <maximumf>, %159, %cst_69 [1] : vector<8x8xf32> to vector<8xf32>
    %161 = vector.shape_cast %160 : vector<8xf32> to vector<8x1xf32>
    %162 = vector.broadcast %161 : vector<8x1xf32> to vector<8x8xf32>
    %163 = arith.subf %159, %162 : vector<8x8xf32>
    %164 = math.exp %163 : vector<8x8xf32>
    %cst_70 = arith.constant dense<0.000000e+00> : vector<8xf32>
    %165 = vector.multi_reduction <add>, %164, %cst_70 [1] : vector<8x8xf32> to vector<8xf32>
    %166 = vector.shape_cast %165 : vector<8xf32> to vector<8x1xf32>
    %167 = vector.broadcast %166 : vector<8x1xf32> to vector<8x8xf32>
    %168 = arith.divf %164, %167 : vector<8x8xf32>
    %cst_71 = arith.constant dense<0.000000e+00> : vector<8x8xf32>
    %169 = tpu.matmul %168, %19, %cst_71 {dimension_numbers = #tpu.dot_dimension_numbers<[1], [0], [0], [1], [0, 0, 1, 1], [], []>} : vector<8x8xf32>, vector<8x8xf32>, vector<8x8xf32> -> vector<8x8xf32>
    %170 = vector.extract_strided_slice %145 {offsets = [0, 16], sizes = [8, 8], strides = [1, 1]} : vector<8x32xf32> to vector<8x8xf32>
    %cst_72 = arith.constant dense<0.000000e+00> : vector<8x8xf32>
    %171 = tpu.matmul %170, %14, %cst_72 {dimension_numbers = #tpu.dot_dimension_numbers<[1], [1], [0], [0], [0, 0, 1, 0], [], []>} : vector<8x8xf32>, vector<8x8xf32>, vector<8x8xf32> -> vector<8x8xf32>
    %cst_73 = arith.constant dense<0xFF800000> : vector<8xf32>
    %172 = vector.multi_reduction <maximumf>, %171, %cst_73 [1] : vector<8x8xf32> to vector<8xf32>
    %173 = vector.shape_cast %172 : vector<8xf32> to vector<8x1xf32>
    %174 = vector.broadcast %173 : vector<8x1xf32> to vector<8x8xf32>
    %175 = arith.subf %171, %174 : vector<8x8xf32>
    %176 = math.exp %175 : vector<8x8xf32>
    %cst_74 = arith.constant dense<0.000000e+00> : vector<8xf32>
    %177 = vector.multi_reduction <add>, %176, %cst_74 [1] : vector<8x8xf32> to vector<8xf32>
    %178 = vector.shape_cast %177 : vector<8xf32> to vector<8x1xf32>
    %179 = vector.broadcast %178 : vector<8x1xf32> to vector<8x8xf32>
    %180 = arith.divf %176, %179 : vector<8x8xf32>
    %cst_75 = arith.constant dense<0.000000e+00> : vector<8x8xf32>
    %181 = tpu.matmul %180, %20, %cst_75 {dimension_numbers = #tpu.dot_dimension_numbers<[1], [0], [0], [1], [0, 0, 1, 1], [], []>} : vector<8x8xf32>, vector<8x8xf32>, vector<8x8xf32> -> vector<8x8xf32>
    %182 = vector.extract_strided_slice %145 {offsets = [0, 24], sizes = [8, 8], strides = [1, 1]} : vector<8x32xf32> to vector<8x8xf32>
    %cst_76 = arith.constant dense<0.000000e+00> : vector<8x8xf32>
    %183 = tpu.matmul %182, %17, %cst_76 {dimension_numbers = #tpu.dot_dimension_numbers<[1], [1], [0], [0], [0, 0, 1, 0], [], []>} : vector<8x8xf32>, vector<8x8xf32>, vector<8x8xf32> -> vector<8x8xf32>
    %cst_77 = arith.constant dense<0xFF800000> : vector<8xf32>
    %184 = vector.multi_reduction <maximumf>, %183, %cst_77 [1] : vector<8x8xf32> to vector<8xf32>
    %185 = vector.shape_cast %184 : vector<8xf32> to vector<8x1xf32>
    %186 = vector.broadcast %185 : vector<8x1xf32> to vector<8x8xf32>
    %187 = arith.subf %183, %186 : vector<8x8xf32>
    %188 = math.exp %187 : vector<8x8xf32>
    %cst_78 = arith.constant dense<0.000000e+00> : vector<8xf32>
    %189 = vector.multi_reduction <add>, %188, %cst_78 [1] : vector<8x8xf32> to vector<8xf32>
    %190 = vector.shape_cast %189 : vector<8xf32> to vector<8x1xf32>
    %191 = vector.broadcast %190 : vector<8x1xf32> to vector<8x8xf32>
    %192 = arith.divf %188, %191 : vector<8x8xf32>
    %cst_79 = arith.constant dense<0.000000e+00> : vector<8x8xf32>
    %193 = tpu.matmul %192, %21, %cst_79 {dimension_numbers = #tpu.dot_dimension_numbers<[1], [0], [0], [1], [0, 0, 1, 1], [], []>} : vector<8x8xf32>, vector<8x8xf32>, vector<8x8xf32> -> vector<8x8xf32>
    %194 = tpu.concatenate %157, %169, %181, %193 in 1 : vector<8x8xf32>, vector<8x8xf32>, vector<8x8xf32>, vector<8x8xf32> -> vector<8x32xf32>
    %c0_80 = arith.constant 0 : index
    %c0_81 = arith.constant 0 : index
    %c0_82 = arith.constant 0 : index
    %195 = vector.load %arg11[%c0_80, %c0_81, %c0_82] : memref<2x32x32xf32, #tpu.memory_space<vmem>>, vector<1x32x32xf32>
    %196 = vector.shape_cast %195 : vector<1x32x32xf32> to vector<32x32xf32>
    %cst_83 = arith.constant dense<0.000000e+00> : vector<8x32xf32>
    %197 = tpu.matmul %194, %196, %cst_83 {dimension_numbers = #tpu.dot_dimension_numbers<[1], [0], [0], [1], [0, 0, 1, 1], [], []>} : vector<8x32xf32>, vector<32x32xf32>, vector<8x32xf32> -> vector<8x32xf32>
    %198 = arith.addf %121, %197 : vector<8x32xf32>
    %c0_84 = arith.constant 0 : index
    %c0_85 = arith.constant 0 : index
    %c0_86 = arith.constant 0 : index
    %199 = vector.load %arg12[%c0_84, %c0_85, %c0_86] : memref<2x1x32xf32, #tpu.memory_space<vmem>>, vector<1x1x32xf32>
    %200 = vector.shape_cast %199 : vector<1x1x32xf32> to vector<1x32xf32>
    %201 = vector.broadcast %200 : vector<1x32xf32> to vector<8x32xf32>
    %202 = arith.addf %198, %201 : vector<8x32xf32>
    %c0_87 = arith.constant 0 : index
    %c0_88 = arith.constant 0 : index
    %c0_89 = arith.constant 0 : index
    %203 = vector.load %arg13[%c0_87, %c0_88, %c0_89] : memref<2x1x32xf32, #tpu.memory_space<vmem>>, vector<1x1x32xf32>
    %204 = vector.shape_cast %203 : vector<1x1x32xf32> to vector<1x32xf32>
    %c0_90 = arith.constant 0 : index
    %c0_91 = arith.constant 0 : index
    %c0_92 = arith.constant 0 : index
    %205 = vector.load %arg14[%c0_90, %c0_91, %c0_92] : memref<2x1x32xf32, #tpu.memory_space<vmem>>, vector<1x1x32xf32>
    %206 = vector.shape_cast %205 : vector<1x1x32xf32> to vector<1x32xf32>
    %cst_93 = arith.constant dense<0.000000e+00> : vector<8xf32>
    %207 = vector.multi_reduction <add>, %202, %cst_93 [1] : vector<8x32xf32> to vector<8xf32>
    %208 = vector.shape_cast %207 : vector<8xf32> to vector<8x1xf32>
    %cst_94 = arith.constant 3.200000e+01 : f32
    %209 = vector.broadcast %cst_94 : f32 to vector<8x1xf32>
    %210 = arith.divf %208, %209 : vector<8x1xf32>
    %211 = vector.broadcast %210 : vector<8x1xf32> to vector<8x32xf32>
    %212 = arith.subf %202, %211 : vector<8x32xf32>
    %213 = arith.mulf %212, %212 : vector<8x32xf32>
    %cst_95 = arith.constant dense<0.000000e+00> : vector<8xf32>
    %214 = vector.multi_reduction <add>, %213, %cst_95 [1] : vector<8x32xf32> to vector<8xf32>
    %215 = vector.shape_cast %214 : vector<8xf32> to vector<8x1xf32>
    %cst_96 = arith.constant 3.200000e+01 : f32
    %216 = vector.broadcast %cst_96 : f32 to vector<8x1xf32>
    %217 = arith.divf %215, %216 : vector<8x1xf32>
    %cst_97 = arith.constant 9.99999974E-6 : f32
    %218 = vector.broadcast %cst_97 : f32 to vector<8x1xf32>
    %219 = arith.addf %217, %218 : vector<8x1xf32>
    %220 = math.rsqrt %219 : vector<8x1xf32>
    %221 = vector.broadcast %220 : vector<8x1xf32> to vector<8x32xf32>
    %222 = arith.mulf %212, %221 : vector<8x32xf32>
    %223 = vector.broadcast %204 : vector<1x32xf32> to vector<8x32xf32>
    %224 = arith.mulf %222, %223 : vector<8x32xf32>
    %225 = vector.broadcast %206 : vector<1x32xf32> to vector<8x32xf32>
    %226 = arith.addf %224, %225 : vector<8x32xf32>
    %c0_98 = arith.constant 0 : index
    %c0_99 = arith.constant 0 : index
    %c0_100 = arith.constant 0 : index
    %227 = vector.load %arg15[%c0_98, %c0_99, %c0_100] : memref<2x32x128xf32, #tpu.memory_space<vmem>>, vector<1x32x128xf32>
    %228 = vector.shape_cast %227 : vector<1x32x128xf32> to vector<32x128xf32>
    %cst_101 = arith.constant dense<0.000000e+00> : vector<8x128xf32>
    %229 = tpu.matmul %226, %228, %cst_101 {dimension_numbers = #tpu.dot_dimension_numbers<[1], [0], [0], [1], [0, 0, 1, 1], [], []>} : vector<8x32xf32>, vector<32x128xf32>, vector<8x128xf32> -> vector<8x128xf32>
    %c0_102 = arith.constant 0 : index
    %c0_103 = arith.constant 0 : index
    %c0_104 = arith.constant 0 : index
    %230 = vector.load %arg16[%c0_102, %c0_103, %c0_104] : memref<2x1x128xf32, #tpu.memory_space<vmem>>, vector<1x1x128xf32>
    %231 = vector.shape_cast %230 : vector<1x1x128xf32> to vector<1x128xf32>
    %232 = vector.broadcast %231 : vector<1x128xf32> to vector<8x128xf32>
    %233 = arith.addf %229, %232 : vector<8x128xf32>
    %cst_105 = arith.constant 5.000000e-01 : f32
    %234 = vector.broadcast %cst_105 : f32 to vector<8x128xf32>
    %235 = arith.mulf %234, %233 : vector<8x128xf32>
    %cst_106 = arith.constant 4.471500e-02 : f32
    %236 = vector.broadcast %cst_106 : f32 to vector<8x128xf32>
    %237 = arith.mulf %236, %233 : vector<8x128xf32>
    %238 = arith.mulf %237, %233 : vector<8x128xf32>
    %239 = arith.mulf %238, %233 : vector<8x128xf32>
    %240 = arith.addf %233, %239 : vector<8x128xf32>
    %cst_107 = arith.constant 0.797884583 : f32
    %241 = vector.broadcast %cst_107 : f32 to vector<8x128xf32>
    %242 = arith.mulf %241, %240 : vector<8x128xf32>
    %243 = math.tanh %242 : vector<8x128xf32>
    %cst_108 = arith.constant 1.000000e+00 : f32
    %244 = vector.broadcast %cst_108 : f32 to vector<8x128xf32>
    %245 = arith.addf %244, %243 : vector<8x128xf32>
    %246 = arith.mulf %235, %245 : vector<8x128xf32>
    %c0_109 = arith.constant 0 : index
    %c0_110 = arith.constant 0 : index
    %c0_111 = arith.constant 0 : index
    %247 = vector.load %arg17[%c0_109, %c0_110, %c0_111] : memref<2x128x32xf32, #tpu.memory_space<vmem>>, vector<1x128x32xf32>
    %248 = vector.shape_cast %247 : vector<1x128x32xf32> to vector<128x32xf32>
    %cst_112 = arith.constant dense<0.000000e+00> : vector<8x32xf32>
    %249 = tpu.matmul %246, %248, %cst_112 {dimension_numbers = #tpu.dot_dimension_numbers<[1], [0], [0], [1], [0, 0, 1, 1], [], []>} : vector<8x128xf32>, vector<128x32xf32>, vector<8x32xf32> -> vector<8x32xf32>
    %250 = arith.addf %202, %249 : vector<8x32xf32>
    %c0_113 = arith.constant 0 : index
    %c0_114 = arith.constant 0 : index
    %c0_115 = arith.constant 0 : index
    %251 = vector.load %arg18[%c0_113, %c0_114, %c0_115] : memref<2x1x32xf32, #tpu.memory_space<vmem>>, vector<1x1x32xf32>
    %252 = vector.shape_cast %251 : vector<1x1x32xf32> to vector<1x32xf32>
    %253 = vector.broadcast %252 : vector<1x32xf32> to vector<8x32xf32>
    %254 = arith.addf %250, %253 : vector<8x32xf32>
    %c1 = arith.constant 1 : index
    %c0_116 = arith.constant 0 : index
    %c0_117 = arith.constant 0 : index
    %255 = vector.load %arg4[%c1, %c0_116, %c0_117] : memref<2x1x32xf32, #tpu.memory_space<vmem>>, vector<1x1x32xf32>
    %256 = vector.shape_cast %255 : vector<1x1x32xf32> to vector<1x32xf32>
    %c1_118 = arith.constant 1 : index
    %c0_119 = arith.constant 0 : index
    %c0_120 = arith.constant 0 : index
    %257 = vector.load %arg5[%c1_118, %c0_119, %c0_120] : memref<2x1x32xf32, #tpu.memory_space<vmem>>, vector<1x1x32xf32>
    %258 = vector.shape_cast %257 : vector<1x1x32xf32> to vector<1x32xf32>
    %cst_121 = arith.constant dense<0.000000e+00> : vector<8xf32>
    %259 = vector.multi_reduction <add>, %254, %cst_121 [1] : vector<8x32xf32> to vector<8xf32>
    %260 = vector.shape_cast %259 : vector<8xf32> to vector<8x1xf32>
    %cst_122 = arith.constant 3.200000e+01 : f32
    %261 = vector.broadcast %cst_122 : f32 to vector<8x1xf32>
    %262 = arith.divf %260, %261 : vector<8x1xf32>
    %263 = vector.broadcast %262 : vector<8x1xf32> to vector<8x32xf32>
    %264 = arith.subf %254, %263 : vector<8x32xf32>
    %265 = arith.mulf %264, %264 : vector<8x32xf32>
    %cst_123 = arith.constant dense<0.000000e+00> : vector<8xf32>
    %266 = vector.multi_reduction <add>, %265, %cst_123 [1] : vector<8x32xf32> to vector<8xf32>
    %267 = vector.shape_cast %266 : vector<8xf32> to vector<8x1xf32>
    %cst_124 = arith.constant 3.200000e+01 : f32
    %268 = vector.broadcast %cst_124 : f32 to vector<8x1xf32>
    %269 = arith.divf %267, %268 : vector<8x1xf32>
    %cst_125 = arith.constant 9.99999974E-6 : f32
    %270 = vector.broadcast %cst_125 : f32 to vector<8x1xf32>
    %271 = arith.addf %269, %270 : vector<8x1xf32>
    %272 = math.rsqrt %271 : vector<8x1xf32>
    %273 = vector.broadcast %272 : vector<8x1xf32> to vector<8x32xf32>
    %274 = arith.mulf %264, %273 : vector<8x32xf32>
    %275 = vector.broadcast %256 : vector<1x32xf32> to vector<8x32xf32>
    %276 = arith.mulf %274, %275 : vector<8x32xf32>
    %277 = vector.broadcast %258 : vector<1x32xf32> to vector<8x32xf32>
    %278 = arith.addf %276, %277 : vector<8x32xf32>
    %c1_126 = arith.constant 1 : index
    %c0_127 = arith.constant 0 : index
    %c0_128 = arith.constant 0 : index
    %279 = vector.load %arg6[%c1_126, %c0_127, %c0_128] : memref<2x32x96xf32, #tpu.memory_space<vmem>>, vector<1x32x96xf32>
    %280 = vector.shape_cast %279 : vector<1x32x96xf32> to vector<32x96xf32>
    %cst_129 = arith.constant dense<0.000000e+00> : vector<8x96xf32>
    %281 = tpu.matmul %278, %280, %cst_129 {dimension_numbers = #tpu.dot_dimension_numbers<[1], [0], [0], [1], [0, 0, 1, 1], [], []>} : vector<8x32xf32>, vector<32x96xf32>, vector<8x96xf32> -> vector<8x96xf32>
    %282 = vector.extract_strided_slice %281 {offsets = [0, 0], sizes = [8, 8], strides = [1, 1]} : vector<8x96xf32> to vector<8x8xf32>
    %cst_130 = arith.constant 0.353553385 : f32
    %283 = vector.broadcast %cst_130 : f32 to vector<8x8xf32>
    %284 = arith.mulf %282, %283 : vector<8x8xf32>
    %285 = vector.extract_strided_slice %281 {offsets = [0, 32], sizes = [8, 8], strides = [1, 1]} : vector<8x96xf32> to vector<8x8xf32>
    %286 = vector.extract_strided_slice %281 {offsets = [0, 64], sizes = [8, 8], strides = [1, 1]} : vector<8x96xf32> to vector<8x8xf32>
    %cst_131 = arith.constant dense<0.000000e+00> : vector<8x8xf32>
    %287 = tpu.matmul %284, %285, %cst_131 {dimension_numbers = #tpu.dot_dimension_numbers<[1], [1], [0], [0], [0, 0, 1, 0], [], []>} : vector<8x8xf32>, vector<8x8xf32>, vector<8x8xf32> -> vector<8x8xf32>
    %cst_132 = arith.constant dense<0xFF800000> : vector<8xf32>
    %288 = vector.multi_reduction <maximumf>, %287, %cst_132 [1] : vector<8x8xf32> to vector<8xf32>
    %289 = vector.shape_cast %288 : vector<8xf32> to vector<8x1xf32>
    %290 = vector.broadcast %289 : vector<8x1xf32> to vector<8x8xf32>
    %291 = arith.subf %287, %290 : vector<8x8xf32>
    %292 = math.exp %291 : vector<8x8xf32>
    %cst_133 = arith.constant dense<0.000000e+00> : vector<8xf32>
    %293 = vector.multi_reduction <add>, %292, %cst_133 [1] : vector<8x8xf32> to vector<8xf32>
    %294 = vector.shape_cast %293 : vector<8xf32> to vector<8x1xf32>
    %295 = vector.broadcast %294 : vector<8x1xf32> to vector<8x8xf32>
    %296 = arith.divf %292, %295 : vector<8x8xf32>
    %cst_134 = arith.constant dense<0.000000e+00> : vector<8x8xf32>
    %297 = tpu.matmul %296, %286, %cst_134 {dimension_numbers = #tpu.dot_dimension_numbers<[1], [0], [0], [1], [0, 0, 1, 1], [], []>} : vector<8x8xf32>, vector<8x8xf32>, vector<8x8xf32> -> vector<8x8xf32>
    %298 = vector.extract_strided_slice %281 {offsets = [0, 8], sizes = [8, 8], strides = [1, 1]} : vector<8x96xf32> to vector<8x8xf32>
    %cst_135 = arith.constant 0.353553385 : f32
    %299 = vector.broadcast %cst_135 : f32 to vector<8x8xf32>
    %300 = arith.mulf %298, %299 : vector<8x8xf32>
    %301 = vector.extract_strided_slice %281 {offsets = [0, 40], sizes = [8, 8], strides = [1, 1]} : vector<8x96xf32> to vector<8x8xf32>
    %302 = vector.extract_strided_slice %281 {offsets = [0, 72], sizes = [8, 8], strides = [1, 1]} : vector<8x96xf32> to vector<8x8xf32>
    %cst_136 = arith.constant dense<0.000000e+00> : vector<8x8xf32>
    %303 = tpu.matmul %300, %301, %cst_136 {dimension_numbers = #tpu.dot_dimension_numbers<[1], [1], [0], [0], [0, 0, 1, 0], [], []>} : vector<8x8xf32>, vector<8x8xf32>, vector<8x8xf32> -> vector<8x8xf32>
    %cst_137 = arith.constant dense<0xFF800000> : vector<8xf32>
    %304 = vector.multi_reduction <maximumf>, %303, %cst_137 [1] : vector<8x8xf32> to vector<8xf32>
    %305 = vector.shape_cast %304 : vector<8xf32> to vector<8x1xf32>
    %306 = vector.broadcast %305 : vector<8x1xf32> to vector<8x8xf32>
    %307 = arith.subf %303, %306 : vector<8x8xf32>
    %308 = math.exp %307 : vector<8x8xf32>
    %cst_138 = arith.constant dense<0.000000e+00> : vector<8xf32>
    %309 = vector.multi_reduction <add>, %308, %cst_138 [1] : vector<8x8xf32> to vector<8xf32>
    %310 = vector.shape_cast %309 : vector<8xf32> to vector<8x1xf32>
    %311 = vector.broadcast %310 : vector<8x1xf32> to vector<8x8xf32>
    %312 = arith.divf %308, %311 : vector<8x8xf32>
    %cst_139 = arith.constant dense<0.000000e+00> : vector<8x8xf32>
    %313 = tpu.matmul %312, %302, %cst_139 {dimension_numbers = #tpu.dot_dimension_numbers<[1], [0], [0], [1], [0, 0, 1, 1], [], []>} : vector<8x8xf32>, vector<8x8xf32>, vector<8x8xf32> -> vector<8x8xf32>
    %314 = vector.extract_strided_slice %281 {offsets = [0, 16], sizes = [8, 8], strides = [1, 1]} : vector<8x96xf32> to vector<8x8xf32>
    %cst_140 = arith.constant 0.353553385 : f32
    %315 = vector.broadcast %cst_140 : f32 to vector<8x8xf32>
    %316 = arith.mulf %314, %315 : vector<8x8xf32>
    %317 = vector.extract_strided_slice %281 {offsets = [0, 48], sizes = [8, 8], strides = [1, 1]} : vector<8x96xf32> to vector<8x8xf32>
    %318 = vector.extract_strided_slice %281 {offsets = [0, 80], sizes = [8, 8], strides = [1, 1]} : vector<8x96xf32> to vector<8x8xf32>
    %cst_141 = arith.constant dense<0.000000e+00> : vector<8x8xf32>
    %319 = tpu.matmul %316, %317, %cst_141 {dimension_numbers = #tpu.dot_dimension_numbers<[1], [1], [0], [0], [0, 0, 1, 0], [], []>} : vector<8x8xf32>, vector<8x8xf32>, vector<8x8xf32> -> vector<8x8xf32>
    %cst_142 = arith.constant dense<0xFF800000> : vector<8xf32>
    %320 = vector.multi_reduction <maximumf>, %319, %cst_142 [1] : vector<8x8xf32> to vector<8xf32>
    %321 = vector.shape_cast %320 : vector<8xf32> to vector<8x1xf32>
    %322 = vector.broadcast %321 : vector<8x1xf32> to vector<8x8xf32>
    %323 = arith.subf %319, %322 : vector<8x8xf32>
    %324 = math.exp %323 : vector<8x8xf32>
    %cst_143 = arith.constant dense<0.000000e+00> : vector<8xf32>
    %325 = vector.multi_reduction <add>, %324, %cst_143 [1] : vector<8x8xf32> to vector<8xf32>
    %326 = vector.shape_cast %325 : vector<8xf32> to vector<8x1xf32>
    %327 = vector.broadcast %326 : vector<8x1xf32> to vector<8x8xf32>
    %328 = arith.divf %324, %327 : vector<8x8xf32>
    %cst_144 = arith.constant dense<0.000000e+00> : vector<8x8xf32>
    %329 = tpu.matmul %328, %318, %cst_144 {dimension_numbers = #tpu.dot_dimension_numbers<[1], [0], [0], [1], [0, 0, 1, 1], [], []>} : vector<8x8xf32>, vector<8x8xf32>, vector<8x8xf32> -> vector<8x8xf32>
    %330 = vector.extract_strided_slice %281 {offsets = [0, 24], sizes = [8, 8], strides = [1, 1]} : vector<8x96xf32> to vector<8x8xf32>
    %cst_145 = arith.constant 0.353553385 : f32
    %331 = vector.broadcast %cst_145 : f32 to vector<8x8xf32>
    %332 = arith.mulf %330, %331 : vector<8x8xf32>
    %333 = vector.extract_strided_slice %281 {offsets = [0, 56], sizes = [8, 8], strides = [1, 1]} : vector<8x96xf32> to vector<8x8xf32>
    %334 = vector.extract_strided_slice %281 {offsets = [0, 88], sizes = [8, 8], strides = [1, 1]} : vector<8x96xf32> to vector<8x8xf32>
    %cst_146 = arith.constant dense<0.000000e+00> : vector<8x8xf32>
    %335 = tpu.matmul %332, %333, %cst_146 {dimension_numbers = #tpu.dot_dimension_numbers<[1], [1], [0], [0], [0, 0, 1, 0], [], []>} : vector<8x8xf32>, vector<8x8xf32>, vector<8x8xf32> -> vector<8x8xf32>
    %cst_147 = arith.constant dense<0xFF800000> : vector<8xf32>
    %336 = vector.multi_reduction <maximumf>, %335, %cst_147 [1] : vector<8x8xf32> to vector<8xf32>
    %337 = vector.shape_cast %336 : vector<8xf32> to vector<8x1xf32>
    %338 = vector.broadcast %337 : vector<8x1xf32> to vector<8x8xf32>
    %339 = arith.subf %335, %338 : vector<8x8xf32>
    %340 = math.exp %339 : vector<8x8xf32>
    %cst_148 = arith.constant dense<0.000000e+00> : vector<8xf32>
    %341 = vector.multi_reduction <add>, %340, %cst_148 [1] : vector<8x8xf32> to vector<8xf32>
    %342 = vector.shape_cast %341 : vector<8xf32> to vector<8x1xf32>
    %343 = vector.broadcast %342 : vector<8x1xf32> to vector<8x8xf32>
    %344 = arith.divf %340, %343 : vector<8x8xf32>
    %cst_149 = arith.constant dense<0.000000e+00> : vector<8x8xf32>
    %345 = tpu.matmul %344, %334, %cst_149 {dimension_numbers = #tpu.dot_dimension_numbers<[1], [0], [0], [1], [0, 0, 1, 1], [], []>} : vector<8x8xf32>, vector<8x8xf32>, vector<8x8xf32> -> vector<8x8xf32>
    %346 = tpu.concatenate %297, %313, %329, %345 in 1 : vector<8x8xf32>, vector<8x8xf32>, vector<8x8xf32>, vector<8x8xf32> -> vector<8x32xf32>
    %c1_150 = arith.constant 1 : index
    %c0_151 = arith.constant 0 : index
    %c0_152 = arith.constant 0 : index
    %347 = vector.load %arg7[%c1_150, %c0_151, %c0_152] : memref<2x32x32xf32, #tpu.memory_space<vmem>>, vector<1x32x32xf32>
    %348 = vector.shape_cast %347 : vector<1x32x32xf32> to vector<32x32xf32>
    %cst_153 = arith.constant dense<0.000000e+00> : vector<8x32xf32>
    %349 = tpu.matmul %346, %348, %cst_153 {dimension_numbers = #tpu.dot_dimension_numbers<[1], [0], [0], [1], [0, 0, 1, 1], [], []>} : vector<8x32xf32>, vector<32x32xf32>, vector<8x32xf32> -> vector<8x32xf32>
    %350 = arith.addf %254, %349 : vector<8x32xf32>
    %c1_154 = arith.constant 1 : index
    %c0_155 = arith.constant 0 : index
    %c0_156 = arith.constant 0 : index
    %351 = vector.load %arg8[%c1_154, %c0_155, %c0_156] : memref<2x1x32xf32, #tpu.memory_space<vmem>>, vector<1x1x32xf32>
    %352 = vector.shape_cast %351 : vector<1x1x32xf32> to vector<1x32xf32>
    %353 = vector.broadcast %352 : vector<1x32xf32> to vector<8x32xf32>
    %354 = arith.addf %350, %353 : vector<8x32xf32>
    %c1_157 = arith.constant 1 : index
    %c0_158 = arith.constant 0 : index
    %c0_159 = arith.constant 0 : index
    %355 = vector.load %arg9[%c1_157, %c0_158, %c0_159] : memref<2x1x32xf32, #tpu.memory_space<vmem>>, vector<1x1x32xf32>
    %356 = vector.shape_cast %355 : vector<1x1x32xf32> to vector<1x32xf32>
    %c1_160 = arith.constant 1 : index
    %c0_161 = arith.constant 0 : index
    %c0_162 = arith.constant 0 : index
    %357 = vector.load %arg10[%c1_160, %c0_161, %c0_162] : memref<2x1x32xf32, #tpu.memory_space<vmem>>, vector<1x1x32xf32>
    %358 = vector.shape_cast %357 : vector<1x1x32xf32> to vector<1x32xf32>
    %cst_163 = arith.constant dense<0.000000e+00> : vector<8xf32>
    %359 = vector.multi_reduction <add>, %354, %cst_163 [1] : vector<8x32xf32> to vector<8xf32>
    %360 = vector.shape_cast %359 : vector<8xf32> to vector<8x1xf32>
    %cst_164 = arith.constant 3.200000e+01 : f32
    %361 = vector.broadcast %cst_164 : f32 to vector<8x1xf32>
    %362 = arith.divf %360, %361 : vector<8x1xf32>
    %363 = vector.broadcast %362 : vector<8x1xf32> to vector<8x32xf32>
    %364 = arith.subf %354, %363 : vector<8x32xf32>
    %365 = arith.mulf %364, %364 : vector<8x32xf32>
    %cst_165 = arith.constant dense<0.000000e+00> : vector<8xf32>
    %366 = vector.multi_reduction <add>, %365, %cst_165 [1] : vector<8x32xf32> to vector<8xf32>
    %367 = vector.shape_cast %366 : vector<8xf32> to vector<8x1xf32>
    %cst_166 = arith.constant 3.200000e+01 : f32
    %368 = vector.broadcast %cst_166 : f32 to vector<8x1xf32>
    %369 = arith.divf %367, %368 : vector<8x1xf32>
    %cst_167 = arith.constant 9.99999974E-6 : f32
    %370 = vector.broadcast %cst_167 : f32 to vector<8x1xf32>
    %371 = arith.addf %369, %370 : vector<8x1xf32>
    %372 = math.rsqrt %371 : vector<8x1xf32>
    %373 = vector.broadcast %372 : vector<8x1xf32> to vector<8x32xf32>
    %374 = arith.mulf %364, %373 : vector<8x32xf32>
    %375 = vector.broadcast %356 : vector<1x32xf32> to vector<8x32xf32>
    %376 = arith.mulf %374, %375 : vector<8x32xf32>
    %377 = vector.broadcast %358 : vector<1x32xf32> to vector<8x32xf32>
    %378 = arith.addf %376, %377 : vector<8x32xf32>
    %379 = vector.extract_strided_slice %378 {offsets = [0, 0], sizes = [8, 8], strides = [1, 1]} : vector<8x32xf32> to vector<8x8xf32>
    %cst_168 = arith.constant dense<0.000000e+00> : vector<8x8xf32>
    %380 = tpu.matmul %379, %8, %cst_168 {dimension_numbers = #tpu.dot_dimension_numbers<[1], [1], [0], [0], [0, 0, 1, 0], [], []>} : vector<8x8xf32>, vector<8x8xf32>, vector<8x8xf32> -> vector<8x8xf32>
    %cst_169 = arith.constant dense<0xFF800000> : vector<8xf32>
    %381 = vector.multi_reduction <maximumf>, %380, %cst_169 [1] : vector<8x8xf32> to vector<8xf32>
    %382 = vector.shape_cast %381 : vector<8xf32> to vector<8x1xf32>
    %383 = vector.broadcast %382 : vector<8x1xf32> to vector<8x8xf32>
    %384 = arith.subf %380, %383 : vector<8x8xf32>
    %385 = math.exp %384 : vector<8x8xf32>
    %cst_170 = arith.constant dense<0.000000e+00> : vector<8xf32>
    %386 = vector.multi_reduction <add>, %385, %cst_170 [1] : vector<8x8xf32> to vector<8xf32>
    %387 = vector.shape_cast %386 : vector<8xf32> to vector<8x1xf32>
    %388 = vector.broadcast %387 : vector<8x1xf32> to vector<8x8xf32>
    %389 = arith.divf %385, %388 : vector<8x8xf32>
    %cst_171 = arith.constant dense<0.000000e+00> : vector<8x8xf32>
    %390 = tpu.matmul %389, %18, %cst_171 {dimension_numbers = #tpu.dot_dimension_numbers<[1], [0], [0], [1], [0, 0, 1, 1], [], []>} : vector<8x8xf32>, vector<8x8xf32>, vector<8x8xf32> -> vector<8x8xf32>
    %391 = vector.extract_strided_slice %378 {offsets = [0, 8], sizes = [8, 8], strides = [1, 1]} : vector<8x32xf32> to vector<8x8xf32>
    %cst_172 = arith.constant dense<0.000000e+00> : vector<8x8xf32>
    %392 = tpu.matmul %391, %11, %cst_172 {dimension_numbers = #tpu.dot_dimension_numbers<[1], [1], [0], [0], [0, 0, 1, 0], [], []>} : vector<8x8xf32>, vector<8x8xf32>, vector<8x8xf32> -> vector<8x8xf32>
    %cst_173 = arith.constant dense<0xFF800000> : vector<8xf32>
    %393 = vector.multi_reduction <maximumf>, %392, %cst_173 [1] : vector<8x8xf32> to vector<8xf32>
    %394 = vector.shape_cast %393 : vector<8xf32> to vector<8x1xf32>
    %395 = vector.broadcast %394 : vector<8x1xf32> to vector<8x8xf32>
    %396 = arith.subf %392, %395 : vector<8x8xf32>
    %397 = math.exp %396 : vector<8x8xf32>
    %cst_174 = arith.constant dense<0.000000e+00> : vector<8xf32>
    %398 = vector.multi_reduction <add>, %397, %cst_174 [1] : vector<8x8xf32> to vector<8xf32>
    %399 = vector.shape_cast %398 : vector<8xf32> to vector<8x1xf32>
    %400 = vector.broadcast %399 : vector<8x1xf32> to vector<8x8xf32>
    %401 = arith.divf %397, %400 : vector<8x8xf32>
    %cst_175 = arith.constant dense<0.000000e+00> : vector<8x8xf32>
    %402 = tpu.matmul %401, %19, %cst_175 {dimension_numbers = #tpu.dot_dimension_numbers<[1], [0], [0], [1], [0, 0, 1, 1], [], []>} : vector<8x8xf32>, vector<8x8xf32>, vector<8x8xf32> -> vector<8x8xf32>
    %403 = vector.extract_strided_slice %378 {offsets = [0, 16], sizes = [8, 8], strides = [1, 1]} : vector<8x32xf32> to vector<8x8xf32>
    %cst_176 = arith.constant dense<0.000000e+00> : vector<8x8xf32>
    %404 = tpu.matmul %403, %14, %cst_176 {dimension_numbers = #tpu.dot_dimension_numbers<[1], [1], [0], [0], [0, 0, 1, 0], [], []>} : vector<8x8xf32>, vector<8x8xf32>, vector<8x8xf32> -> vector<8x8xf32>
    %cst_177 = arith.constant dense<0xFF800000> : vector<8xf32>
    %405 = vector.multi_reduction <maximumf>, %404, %cst_177 [1] : vector<8x8xf32> to vector<8xf32>
    %406 = vector.shape_cast %405 : vector<8xf32> to vector<8x1xf32>
    %407 = vector.broadcast %406 : vector<8x1xf32> to vector<8x8xf32>
    %408 = arith.subf %404, %407 : vector<8x8xf32>
    %409 = math.exp %408 : vector<8x8xf32>
    %cst_178 = arith.constant dense<0.000000e+00> : vector<8xf32>
    %410 = vector.multi_reduction <add>, %409, %cst_178 [1] : vector<8x8xf32> to vector<8xf32>
    %411 = vector.shape_cast %410 : vector<8xf32> to vector<8x1xf32>
    %412 = vector.broadcast %411 : vector<8x1xf32> to vector<8x8xf32>
    %413 = arith.divf %409, %412 : vector<8x8xf32>
    %cst_179 = arith.constant dense<0.000000e+00> : vector<8x8xf32>
    %414 = tpu.matmul %413, %20, %cst_179 {dimension_numbers = #tpu.dot_dimension_numbers<[1], [0], [0], [1], [0, 0, 1, 1], [], []>} : vector<8x8xf32>, vector<8x8xf32>, vector<8x8xf32> -> vector<8x8xf32>
    %415 = vector.extract_strided_slice %378 {offsets = [0, 24], sizes = [8, 8], strides = [1, 1]} : vector<8x32xf32> to vector<8x8xf32>
    %cst_180 = arith.constant dense<0.000000e+00> : vector<8x8xf32>
    %416 = tpu.matmul %415, %17, %cst_180 {dimension_numbers = #tpu.dot_dimension_numbers<[1], [1], [0], [0], [0, 0, 1, 0], [], []>} : vector<8x8xf32>, vector<8x8xf32>, vector<8x8xf32> -> vector<8x8xf32>
    %cst_181 = arith.constant dense<0xFF800000> : vector<8xf32>
    %417 = vector.multi_reduction <maximumf>, %416, %cst_181 [1] : vector<8x8xf32> to vector<8xf32>
    %418 = vector.shape_cast %417 : vector<8xf32> to vector<8x1xf32>
    %419 = vector.broadcast %418 : vector<8x1xf32> to vector<8x8xf32>
    %420 = arith.subf %416, %419 : vector<8x8xf32>
    %421 = math.exp %420 : vector<8x8xf32>
    %cst_182 = arith.constant dense<0.000000e+00> : vector<8xf32>
    %422 = vector.multi_reduction <add>, %421, %cst_182 [1] : vector<8x8xf32> to vector<8xf32>
    %423 = vector.shape_cast %422 : vector<8xf32> to vector<8x1xf32>
    %424 = vector.broadcast %423 : vector<8x1xf32> to vector<8x8xf32>
    %425 = arith.divf %421, %424 : vector<8x8xf32>
    %cst_183 = arith.constant dense<0.000000e+00> : vector<8x8xf32>
    %426 = tpu.matmul %425, %21, %cst_183 {dimension_numbers = #tpu.dot_dimension_numbers<[1], [0], [0], [1], [0, 0, 1, 1], [], []>} : vector<8x8xf32>, vector<8x8xf32>, vector<8x8xf32> -> vector<8x8xf32>
    %427 = tpu.concatenate %390, %402, %414, %426 in 1 : vector<8x8xf32>, vector<8x8xf32>, vector<8x8xf32>, vector<8x8xf32> -> vector<8x32xf32>
    %c1_184 = arith.constant 1 : index
    %c0_185 = arith.constant 0 : index
    %c0_186 = arith.constant 0 : index
    %428 = vector.load %arg11[%c1_184, %c0_185, %c0_186] : memref<2x32x32xf32, #tpu.memory_space<vmem>>, vector<1x32x32xf32>
    %429 = vector.shape_cast %428 : vector<1x32x32xf32> to vector<32x32xf32>
    %cst_187 = arith.constant dense<0.000000e+00> : vector<8x32xf32>
    %430 = tpu.matmul %427, %429, %cst_187 {dimension_numbers = #tpu.dot_dimension_numbers<[1], [0], [0], [1], [0, 0, 1, 1], [], []>} : vector<8x32xf32>, vector<32x32xf32>, vector<8x32xf32> -> vector<8x32xf32>
    %431 = arith.addf %354, %430 : vector<8x32xf32>
    %c1_188 = arith.constant 1 : index
    %c0_189 = arith.constant 0 : index
    %c0_190 = arith.constant 0 : index
    %432 = vector.load %arg12[%c1_188, %c0_189, %c0_190] : memref<2x1x32xf32, #tpu.memory_space<vmem>>, vector<1x1x32xf32>
    %433 = vector.shape_cast %432 : vector<1x1x32xf32> to vector<1x32xf32>
    %434 = vector.broadcast %433 : vector<1x32xf32> to vector<8x32xf32>
    %435 = arith.addf %431, %434 : vector<8x32xf32>
    %c1_191 = arith.constant 1 : index
    %c0_192 = arith.constant 0 : index
    %c0_193 = arith.constant 0 : index
    %436 = vector.load %arg13[%c1_191, %c0_192, %c0_193] : memref<2x1x32xf32, #tpu.memory_space<vmem>>, vector<1x1x32xf32>
    %437 = vector.shape_cast %436 : vector<1x1x32xf32> to vector<1x32xf32>
    %c1_194 = arith.constant 1 : index
    %c0_195 = arith.constant 0 : index
    %c0_196 = arith.constant 0 : index
    %438 = vector.load %arg14[%c1_194, %c0_195, %c0_196] : memref<2x1x32xf32, #tpu.memory_space<vmem>>, vector<1x1x32xf32>
    %439 = vector.shape_cast %438 : vector<1x1x32xf32> to vector<1x32xf32>
    %cst_197 = arith.constant dense<0.000000e+00> : vector<8xf32>
    %440 = vector.multi_reduction <add>, %435, %cst_197 [1] : vector<8x32xf32> to vector<8xf32>
    %441 = vector.shape_cast %440 : vector<8xf32> to vector<8x1xf32>
    %cst_198 = arith.constant 3.200000e+01 : f32
    %442 = vector.broadcast %cst_198 : f32 to vector<8x1xf32>
    %443 = arith.divf %441, %442 : vector<8x1xf32>
    %444 = vector.broadcast %443 : vector<8x1xf32> to vector<8x32xf32>
    %445 = arith.subf %435, %444 : vector<8x32xf32>
    %446 = arith.mulf %445, %445 : vector<8x32xf32>
    %cst_199 = arith.constant dense<0.000000e+00> : vector<8xf32>
    %447 = vector.multi_reduction <add>, %446, %cst_199 [1] : vector<8x32xf32> to vector<8xf32>
    %448 = vector.shape_cast %447 : vector<8xf32> to vector<8x1xf32>
    %cst_200 = arith.constant 3.200000e+01 : f32
    %449 = vector.broadcast %cst_200 : f32 to vector<8x1xf32>
    %450 = arith.divf %448, %449 : vector<8x1xf32>
    %cst_201 = arith.constant 9.99999974E-6 : f32
    %451 = vector.broadcast %cst_201 : f32 to vector<8x1xf32>
    %452 = arith.addf %450, %451 : vector<8x1xf32>
    %453 = math.rsqrt %452 : vector<8x1xf32>
    %454 = vector.broadcast %453 : vector<8x1xf32> to vector<8x32xf32>
    %455 = arith.mulf %445, %454 : vector<8x32xf32>
    %456 = vector.broadcast %437 : vector<1x32xf32> to vector<8x32xf32>
    %457 = arith.mulf %455, %456 : vector<8x32xf32>
    %458 = vector.broadcast %439 : vector<1x32xf32> to vector<8x32xf32>
    %459 = arith.addf %457, %458 : vector<8x32xf32>
    %c1_202 = arith.constant 1 : index
    %c0_203 = arith.constant 0 : index
    %c0_204 = arith.constant 0 : index
    %460 = vector.load %arg15[%c1_202, %c0_203, %c0_204] : memref<2x32x128xf32, #tpu.memory_space<vmem>>, vector<1x32x128xf32>
    %461 = vector.shape_cast %460 : vector<1x32x128xf32> to vector<32x128xf32>
    %cst_205 = arith.constant dense<0.000000e+00> : vector<8x128xf32>
    %462 = tpu.matmul %459, %461, %cst_205 {dimension_numbers = #tpu.dot_dimension_numbers<[1], [0], [0], [1], [0, 0, 1, 1], [], []>} : vector<8x32xf32>, vector<32x128xf32>, vector<8x128xf32> -> vector<8x128xf32>
    %c1_206 = arith.constant 1 : index
    %c0_207 = arith.constant 0 : index
    %c0_208 = arith.constant 0 : index
    %463 = vector.load %arg16[%c1_206, %c0_207, %c0_208] : memref<2x1x128xf32, #tpu.memory_space<vmem>>, vector<1x1x128xf32>
    %464 = vector.shape_cast %463 : vector<1x1x128xf32> to vector<1x128xf32>
    %465 = vector.broadcast %464 : vector<1x128xf32> to vector<8x128xf32>
    %466 = arith.addf %462, %465 : vector<8x128xf32>
    %cst_209 = arith.constant 5.000000e-01 : f32
    %467 = vector.broadcast %cst_209 : f32 to vector<8x128xf32>
    %468 = arith.mulf %467, %466 : vector<8x128xf32>
    %cst_210 = arith.constant 4.471500e-02 : f32
    %469 = vector.broadcast %cst_210 : f32 to vector<8x128xf32>
    %470 = arith.mulf %469, %466 : vector<8x128xf32>
    %471 = arith.mulf %470, %466 : vector<8x128xf32>
    %472 = arith.mulf %471, %466 : vector<8x128xf32>
    %473 = arith.addf %466, %472 : vector<8x128xf32>
    %cst_211 = arith.constant 0.797884583 : f32
    %474 = vector.broadcast %cst_211 : f32 to vector<8x128xf32>
    %475 = arith.mulf %474, %473 : vector<8x128xf32>
    %476 = math.tanh %475 : vector<8x128xf32>
    %cst_212 = arith.constant 1.000000e+00 : f32
    %477 = vector.broadcast %cst_212 : f32 to vector<8x128xf32>
    %478 = arith.addf %477, %476 : vector<8x128xf32>
    %479 = arith.mulf %468, %478 : vector<8x128xf32>
    %c1_213 = arith.constant 1 : index
    %c0_214 = arith.constant 0 : index
    %c0_215 = arith.constant 0 : index
    %480 = vector.load %arg17[%c1_213, %c0_214, %c0_215] : memref<2x128x32xf32, #tpu.memory_space<vmem>>, vector<1x128x32xf32>
    %481 = vector.shape_cast %480 : vector<1x128x32xf32> to vector<128x32xf32>
    %cst_216 = arith.constant dense<0.000000e+00> : vector<8x32xf32>
    %482 = tpu.matmul %479, %481, %cst_216 {dimension_numbers = #tpu.dot_dimension_numbers<[1], [0], [0], [1], [0, 0, 1, 1], [], []>} : vector<8x128xf32>, vector<128x32xf32>, vector<8x32xf32> -> vector<8x32xf32>
    %483 = arith.addf %435, %482 : vector<8x32xf32>
    %c1_217 = arith.constant 1 : index
    %c0_218 = arith.constant 0 : index
    %c0_219 = arith.constant 0 : index
    %484 = vector.load %arg18[%c1_217, %c0_218, %c0_219] : memref<2x1x32xf32, #tpu.memory_space<vmem>>, vector<1x1x32xf32>
    %485 = vector.shape_cast %484 : vector<1x1x32xf32> to vector<1x32xf32>
    %486 = vector.broadcast %485 : vector<1x32xf32> to vector<8x32xf32>
    %487 = arith.addf %483, %486 : vector<8x32xf32>
    %c0_220 = arith.constant 0 : index
    %c0_221 = arith.constant 0 : index
    %488 = vector.load %arg19[%c0_220, %c0_221] : memref<1x32xf32, #tpu.memory_space<vmem>>, vector<1x32xf32>
    %c0_222 = arith.constant 0 : index
    %c0_223 = arith.constant 0 : index
    %489 = vector.load %arg20[%c0_222, %c0_223] : memref<1x32xf32, #tpu.memory_space<vmem>>, vector<1x32xf32>
    %cst_224 = arith.constant dense<0.000000e+00> : vector<8xf32>
    %490 = vector.multi_reduction <add>, %487, %cst_224 [1] : vector<8x32xf32> to vector<8xf32>
    %491 = vector.shape_cast %490 : vector<8xf32> to vector<8x1xf32>
    %cst_225 = arith.constant 3.200000e+01 : f32
    %492 = vector.broadcast %cst_225 : f32 to vector<8x1xf32>
    %493 = arith.divf %491, %492 : vector<8x1xf32>
    %494 = vector.broadcast %493 : vector<8x1xf32> to vector<8x32xf32>
    %495 = arith.subf %487, %494 : vector<8x32xf32>
    %496 = arith.mulf %495, %495 : vector<8x32xf32>
    %cst_226 = arith.constant dense<0.000000e+00> : vector<8xf32>
    %497 = vector.multi_reduction <add>, %496, %cst_226 [1] : vector<8x32xf32> to vector<8xf32>
    %498 = vector.shape_cast %497 : vector<8xf32> to vector<8x1xf32>
    %cst_227 = arith.constant 3.200000e+01 : f32
    %499 = vector.broadcast %cst_227 : f32 to vector<8x1xf32>
    %500 = arith.divf %498, %499 : vector<8x1xf32>
    %cst_228 = arith.constant 9.99999974E-6 : f32
    %501 = vector.broadcast %cst_228 : f32 to vector<8x1xf32>
    %502 = arith.addf %500, %501 : vector<8x1xf32>
    %503 = math.rsqrt %502 : vector<8x1xf32>
    %504 = vector.broadcast %503 : vector<8x1xf32> to vector<8x32xf32>
    %505 = arith.mulf %495, %504 : vector<8x32xf32>
    %506 = vector.broadcast %488 : vector<1x32xf32> to vector<8x32xf32>
    %507 = arith.mulf %505, %506 : vector<8x32xf32>
    %508 = vector.broadcast %489 : vector<1x32xf32> to vector<8x32xf32>
    %509 = arith.addf %507, %508 : vector<8x32xf32>
    %c0_229 = arith.constant 0 : index
    %c0_230 = arith.constant 0 : index
    %c0_231 = arith.constant 0 : index
    %510 = vector.load %arg21[%c0_229, %c0_230, %c0_231] : memref<1x8x32xf32, #tpu.memory_space<vmem>>, vector<1x8x32xf32>
    %511 = vector.shape_cast %510 : vector<1x8x32xf32> to vector<8x32xf32>
    %512 = vector.shape_cast %509 : vector<8x32xf32> to vector<1x8x32xf32>
    tpu.vector_store %arg21[%c0_229, %c0_230, %c0_231], %512 {strides = array<i32>} : memref<1x8x32xf32, #tpu.memory_space<vmem>>, vector<1x8x32xf32>,
    return
  }
  func.func @transform_0(%arg0: i32) -> (i32, i32, i32) {
    %c0_i32 = arith.constant 0 : i32
    %c0_i32_0 = arith.constant 0 : i32
    %c0_i32_1 = arith.constant 0 : i32
    return %arg0, %c0_i32, %c0_i32_0 : i32, i32, i32
  }
  func.func @transform_1(%arg0: i32) -> (i32, i32, i32) {
    %c0_i32 = arith.constant 0 : i32
    %c0_i32_0 = arith.constant 0 : i32
    %c0_i32_1 = arith.constant 0 : i32
    return %arg0, %c0_i32, %c0_i32_0 : i32, i32, i32
  }
  func.func @transform_2(%arg0: i32) -> (i32, i32, i32) {
    %c0_i32 = arith.constant 0 : i32
    %c0_i32_0 = arith.constant 0 : i32
    %c0_i32_1 = arith.constant 0 : i32
    return %arg0, %c0_i32, %c0_i32_0 : i32, i32, i32
  }
  func.func @transform_3(%arg0: i32) -> (i32, i32, i32) {
    %c0_i32 = arith.constant 0 : i32
    %c0_i32_0 = arith.constant 0 : i32
    %c0_i32_1 = arith.constant 0 : i32
    %c0_i32_2 = arith.constant 0 : i32
    return %c0_i32, %c0_i32_0, %c0_i32_1 : i32, i32, i32
  }
  func.func @transform_4(%arg0: i32) -> (i32, i32, i32) {
    %c0_i32 = arith.constant 0 : i32
    %c0_i32_0 = arith.constant 0 : i32
    %c0_i32_1 = arith.constant 0 : i32
    %c0_i32_2 = arith.constant 0 : i32
    return %c0_i32, %c0_i32_0, %c0_i32_1 : i32, i32, i32
  }
  func.func @transform_5(%arg0: i32) -> (i32, i32, i32) {
    %c0_i32 = arith.constant 0 : i32
    %c0_i32_0 = arith.constant 0 : i32
    %c0_i32_1 = arith.constant 0 : i32
    %c0_i32_2 = arith.constant 0 : i32
    return %c0_i32, %c0_i32_0, %c0_i32_1 : i32, i32, i32
  }
  func.func @transform_6(%arg0: i32) -> (i32, i32, i32) {
    %c0_i32 = arith.constant 0 : i32
    %c0_i32_0 = arith.constant 0 : i32
    %c0_i32_1 = arith.constant 0 : i32
    %c0_i32_2 = arith.constant 0 : i32
    return %c0_i32, %c0_i32_0, %c0_i32_1 : i32, i32, i32
  }
  func.func @transform_7(%arg0: i32) -> (i32, i32, i32) {
    %c0_i32 = arith.constant 0 : i32
    %c0_i32_0 = arith.constant 0 : i32
    %c0_i32_1 = arith.constant 0 : i32
    %c0_i32_2 = arith.constant 0 : i32
    return %c0_i32, %c0_i32_0, %c0_i32_1 : i32, i32, i32
  }
  func.func @transform_8(%arg0: i32) -> (i32, i32, i32) {
    %c0_i32 = arith.constant 0 : i32
    %c0_i32_0 = arith.constant 0 : i32
    %c0_i32_1 = arith.constant 0 : i32
    %c0_i32_2 = arith.constant 0 : i32
    return %c0_i32, %c0_i32_0, %c0_i32_1 : i32, i32, i32
  }
  func.func @transform_9(%arg0: i32) -> (i32, i32, i32) {
    %c0_i32 = arith.constant 0 : i32
    %c0_i32_0 = arith.constant 0 : i32
    %c0_i32_1 = arith.constant 0 : i32
    %c0_i32_2 = arith.constant 0 : i32
    return %c0_i32, %c0_i32_0, %c0_i32_1 : i32, i32, i32
  }
  func.func @transform_10(%arg0: i32) -> (i32, i32, i32) {
    %c0_i32 = arith.constant 0 : i32
    %c0_i32_0 = arith.constant 0 : i32
    %c0_i32_1 = arith.constant 0 : i32
    %c0_i32_2 = arith.constant 0 : i32
    return %c0_i32, %c0_i32_0, %c0_i32_1 : i32, i32, i32
  }
  func.func @transform_11(%arg0: i32) -> (i32, i32, i32) {
    %c0_i32 = arith.constant 0 : i32
    %c0_i32_0 = arith.constant 0 : i32
    %c0_i32_1 = arith.constant 0 : i32
    %c0_i32_2 = arith.constant 0 : i32
    return %c0_i32, %c0_i32_0, %c0_i32_1 : i32, i32, i32
  }
  func.func @transform_12(%arg0: i32) -> (i32, i32, i32) {
    %c0_i32 = arith.constant 0 : i32
    %c0_i32_0 = arith.constant 0 : i32
    %c0_i32_1 = arith.constant 0 : i32
    %c0_i32_2 = arith.constant 0 : i32
    return %c0_i32, %c0_i32_0, %c0_i32_1 : i32, i32, i32
  }
  func.func @transform_13(%arg0: i32) -> (i32, i32, i32) {
    %c0_i32 = arith.constant 0 : i32
    %c0_i32_0 = arith.constant 0 : i32
    %c0_i32_1 = arith.constant 0 : i32
    %c0_i32_2 = arith.constant 0 : i32
    return %c0_i32, %c0_i32_0, %c0_i32_1 : i32, i32, i32
  }
  func.func @transform_14(%arg0: i32) -> (i32, i32, i32) {
    %c0_i32 = arith.constant 0 : i32
    %c0_i32_0 = arith.constant 0 : i32
    %c0_i32_1 = arith.constant 0 : i32
    %c0_i32_2 = arith.constant 0 : i32
    return %c0_i32, %c0_i32_0, %c0_i32_1 : i32, i32, i32
  }
  func.func @transform_15(%arg0: i32) -> (i32, i32, i32) {
    %c0_i32 = arith.constant 0 : i32
    %c0_i32_0 = arith.constant 0 : i32
    %c0_i32_1 = arith.constant 0 : i32
    %c0_i32_2 = arith.constant 0 : i32
    return %c0_i32, %c0_i32_0, %c0_i32_1 : i32, i32, i32
  }
  func.func @transform_16(%arg0: i32) -> (i32, i32, i32) {
    %c0_i32 = arith.constant 0 : i32
    %c0_i32_0 = arith.constant 0 : i32
    %c0_i32_1 = arith.constant 0 : i32
    %c0_i32_2 = arith.constant 0 : i32
    return %c0_i32, %c0_i32_0, %c0_i32_1 : i32, i32, i32
  }
  func.func @transform_17(%arg0: i32) -> (i32, i32, i32) {
    %c0_i32 = arith.constant 0 : i32
    %c0_i32_0 = arith.constant 0 : i32
    %c0_i32_1 = arith.constant 0 : i32
    %c0_i32_2 = arith.constant 0 : i32
    return %c0_i32, %c0_i32_0, %c0_i32_1 : i32, i32, i32
  }
  func.func @transform_18(%arg0: i32) -> (i32, i32) {
    %c0_i32 = arith.constant 0 : i32
    %c0_i32_0 = arith.constant 0 : i32
    %c0_i32_1 = arith.constant 0 : i32
    return %c0_i32, %c0_i32_0 : i32, i32
  }
  func.func @transform_19(%arg0: i32) -> (i32, i32) {
    %c0_i32 = arith.constant 0 : i32
    %c0_i32_0 = arith.constant 0 : i32
    %c0_i32_1 = arith.constant 0 : i32
    return %c0_i32, %c0_i32_0 : i32, i32
  }
  func.func @transform_20(%arg0: i32) -> (i32, i32, i32) {
    %c0_i32 = arith.constant 0 : i32
    %c0_i32_0 = arith.constant 0 : i32
    %c0_i32_1 = arith.constant 0 : i32
    return %arg0, %c0_i32, %c0_i32_0 : i32, i32, i32
  }
}

</mosaic_0001>

<llo_original>
// kernel: tpu_custom_call.1
$region0: #{tpu_custom_call.1}
  #allocation0 [shape = 'u32[]', space=smem, size = 0x4, offset = 0x4, fixed_abs, tag = 'smem constant byte address 0x4 - core index']
  #allocation1 [shape = 'u32[144,128]{1,0:T(1,128)}', space=vmem, size = 0x12000, scoped, tag = 'internal scratch']
  %s0 = inlined_call_operand.vmem [shape: f32[2,8,32], index: 0, kind: input, shape index: {}]
  %s1 = inlined_call_operand.vmem [shape: f32[2,8,32], index: 1, kind: input, shape index: {}]
  %s2 = inlined_call_operand.vmem [shape: f32[2,8,32], index: 2, kind: input, shape index: {}]
  %s3 = inlined_call_operand.vmem [shape: f32[2,1,32], index: 3, kind: input, shape index: {}]
  %s4 = inlined_call_operand.vmem [shape: f32[2,1,32], index: 4, kind: input, shape index: {}]
  %s5 = inlined_call_operand.vmem [shape: f32[2,32,96], index: 5, kind: input, shape index: {}]
  %s6 = inlined_call_operand.vmem [shape: f32[2,32,32], index: 6, kind: input, shape index: {}]
  %s7 = inlined_call_operand.vmem [shape: f32[2,1,32], index: 7, kind: input, shape index: {}]
  %s8 = inlined_call_operand.vmem [shape: f32[2,1,32], index: 8, kind: input, shape index: {}]
  %s9 = inlined_call_operand.vmem [shape: f32[2,1,32], index: 9, kind: input, shape index: {}]
  %s10 = inlined_call_operand.vmem [shape: f32[2,32,32], index: 10, kind: input, shape index: {}]
  %s11 = inlined_call_operand.vmem [shape: f32[2,1,32], index: 11, kind: input, shape index: {}]
  %s12 = inlined_call_operand.vmem [shape: f32[2,1,32], index: 12, kind: input, shape index: {}]
  %s13 = inlined_call_operand.vmem [shape: f32[2,1,32], index: 13, kind: input, shape index: {}]
  %s14 = inlined_call_operand.vmem [shape: f32[2,32,128], index: 14, kind: input, shape index: {}]
  %s15 = inlined_call_operand.vmem [shape: f32[2,1,128], index: 15, kind: input, shape index: {}]
  %s16 = inlined_call_operand.vmem [shape: f32[2,128,32], index: 16, kind: input, shape index: {}]
  %s17 = inlined_call_operand.vmem [shape: f32[2,1,32], index: 17, kind: input, shape index: {}]
  %s18 = inlined_call_operand.vmem [shape: f32[1,32], index: 18, kind: input, shape index: {}]
  %s19 = inlined_call_operand.vmem [shape: f32[1,32], index: 19, kind: input, shape index: {}]
  %s20 = inlined_call_operand.hbm [shape: f32[2,8,32], index: 20, kind: output, shape index: {}]
  %s21 = sld [smem:[#allocation0]]
  $region113: #{tpu_custom_call.1} parent=0
    _
  %s23 = ssub.s32 1, %s21
  %s24 = scalar_select 0, %s23, %s21
  $region1: #{tpu_custom_call.1} parent=0
    #allocation2 [shape = 'u8[8192]{0}', space=vmem, size = 0x2000, scoped, tag = 'output window, operand 0']
    #allocation3 [shape = 's32[2]{0}', space=sflag, size = 0x8, scoped, tag = 'scoped memory for tpu_custom_call.1']
    %25 = vsyncpa [#allocation3], 0
    %s26 = scalar_lea.sflag [#allocation3], 1
    %27 = vsyncpa %s26, 0
    loop: start=0, step=1, limit=4
    $region2: #{tpu_custom_call.1} parent=1 // loop_pre_header
      _
    $region3: #{tpu_custom_call.1} parent=1 // loop_header
      %s29 = sphi 0, %s33
      %p30 = scmp.ge.s32.totalorder %s29, 4
      %s39 = sphi 0, %s41
      %s42 = sphi 0, %s39
      %s43 = sphi 0, %s42
      %s59 = sphi 0, %s43
      %s65 = sphi 0, %s67
      %s68 = sphi 0, %s65
      %s69 = sphi 0, %s68
      %s85 = sphi 0, %s69
      %s91 = sphi 0, %s93
      %s94 = sphi 0, %s91
      %s95 = sphi 0, %s94
      %s111 = sphi 0, %s95
      %s115 = sphi 0, %s115
      %s117 = sphi 0, %s115
      %s118 = sphi 0, %s117
      %s132 = sphi 0, %s118
      %s136 = sphi 0, %s136
      %s138 = sphi 0, %s136
      %s139 = sphi 0, %s138
      %s153 = sphi 0, %s139
      %s157 = sphi 0, %s157
      %s159 = sphi 0, %s157
      %s160 = sphi 0, %s159
      %s174 = sphi 0, %s160
      %s178 = sphi 0, %s178
      %s180 = sphi 0, %s178
      %s181 = sphi 0, %s180
      %s195 = sphi 0, %s181
      %s199 = sphi 0, %s199
      %s201 = sphi 0, %s199
      %s202 = sphi 0, %s201
      %s216 = sphi 0, %s202
      %s220 = sphi 0, %s220
      %s222 = sphi 0, %s220
      %s223 = sphi 0, %s222
      %s237 = sphi 0, %s223
      %s241 = sphi 0, %s241
      %s243 = sphi 0, %s241
      %s244 = sphi 0, %s243
      %s258 = sphi 0, %s244
      %s262 = sphi 0, %s262
      %s264 = sphi 0, %s262
      %s265 = sphi 0, %s264
      %s279 = sphi 0, %s265
      %s283 = sphi 0, %s283
      %s285 = sphi 0, %s283
      %s286 = sphi 0, %s285
      %s300 = sphi 0, %s286
      %s304 = sphi 0, %s304
      %s306 = sphi 0, %s304
      %s307 = sphi 0, %s306
      %s321 = sphi 0, %s307
      %s325 = sphi 0, %s325
      %s327 = sphi 0, %s325
      %s328 = sphi 0, %s327
      %s342 = sphi 0, %s328
      %s346 = sphi 0, %s346
      %s348 = sphi 0, %s346
      %s349 = sphi 0, %s348
      %s363 = sphi 0, %s349
      %s367 = sphi 0, %s367
      %s369 = sphi 0, %s367
      %s370 = sphi 0, %s369
      %s384 = sphi 0, %s370
      %s388 = sphi 0, %s388
      %s390 = sphi 0, %s388
      %s391 = sphi 0, %s390
      %s405 = sphi 0, %s391
      %s409 = sphi 0, %s409
      %s411 = sphi 0, %s409
      %s412 = sphi 0, %s411
      %s426 = sphi 0, %s412
      %s430 = sphi 0, %s430
      %s432 = sphi 0, %s430
      %s433 = sphi 0, %s432
      %s447 = sphi 0, %s433
      %s451 = sphi 0, %s451
      %s453 = sphi 0, %s451
      %s454 = sphi 0, %s453
      %s468 = sphi 0, %s454
      %s474 = sphi 0, %s476
      %s477 = sphi 0, %s474
      %s478 = sphi 0, %s477
      %s494 = sphi 0, %s478
    $region4: #{tpu_custom_call.1} parent=1 // loop_header_branch
      %32 = sbr.rel (%p30) target = $region8
    $region5: #{tpu_custom_call.1} parent=1 // loop_body
      %s34 = ssub.s32 %s29, 1
      %s35 = ssub.s32 %s29, 2
      %s36 = sadd.s32 %s29, 1
      %s37 = ssub.s32 %s29, %s36
      %p38 = scmp.eq.s32.totalorder %s37, 0
      %s40 = sadd.s32 %s39, 1
      %s41 = scalar_select %p38, %s39, %s40
      %p44 = pneg %p38
      %p45 = scmp.eq.s32.totalorder %s29, 1
      %p46 = por %p44, %p45
      %p47 = scmp.ne.s32.totalorder %s39, %s42
      %p48 = scmp.eq.s32.totalorder %s29, 0
      %p49 = por %p47, %p48
      %p50 = scmp.ne.s32.totalorder %s39, %s42
      %p51 = scmp.eq.s32.totalorder %s34, 1
      %p52 = por %p50, %p51
      %p53 = scmp.ne.s32.totalorder %s42, %s43
      %p54 = scmp.eq.s32.totalorder %s34, 0
      %p55 = por %p53, %p54
      %p56 = scmp.ne.s32.totalorder %s42, %s43
      %p57 = scmp.eq.s32.totalorder %s35, 1
      %p58 = por %p56, %p57
      %p60 = scmp.ne.s32.totalorder %s43, %s59
      %p61 = scmp.eq.s32.totalorder %s35, 0
      %p62 = por %p60, %p61
      %s63 = ssub.s32 %s29, %s36
      %p64 = scmp.eq.s32.totalorder %s63, 0
      %s66 = sadd.s32 %s65, 1
      %s67 = scalar_select %p64, %s65, %s66
      %p70 = pneg %p64
      %p71 = scmp.eq.s32.totalorder %s29, 1
      %p72 = por %p70, %p71
      %p73 = scmp.ne.s32.totalorder %s65, %s68
      %p74 = scmp.eq.s32.totalorder %s29, 0
      %p75 = por %p73, %p74
      %p76 = scmp.ne.s32.totalorder %s65, %s68
      %p77 = scmp.eq.s32.totalorder %s34, 1
      %p78 = por %p76, %p77
      %p79 = scmp.ne.s32.totalorder %s68, %s69
      %p80 = scmp.eq.s32.totalorder %s34, 0
      %p81 = por %p79, %p80
      %p82 = scmp.ne.s32.totalorder %s68, %s69
      %p83 = scmp.eq.s32.totalorder %s35, 1
      %p84 = por %p82, %p83
      %p86 = scmp.ne.s32.totalorder %s69, %s85
      %p87 = scmp.eq.s32.totalorder %s35, 0
      %p88 = por %p86, %p87
      %s89 = ssub.s32 %s29, %s36
      %p90 = scmp.eq.s32.totalorder %s89, 0
      %s92 = sadd.s32 %s91, 1
      %s93 = scalar_select %p90, %s91, %s92
      %p96 = pneg %p90
      %p97 = scmp.eq.s32.totalorder %s29, 1
      %p98 = por %p96, %p97
      %p99 = scmp.ne.s32.totalorder %s91, %s94
      %p100 = scmp.eq.s32.totalorder %s29, 0
      %p101 = por %p99, %p100
      %p102 = scmp.ne.s32.totalorder %s91, %s94
      %p103 = scmp.eq.s32.totalorder %s34, 1
      %p104 = por %p102, %p103
      %p105 = scmp.ne.s32.totalorder %s94, %s95
      %p106 = scmp.eq.s32.totalorder %s34, 0
      %p107 = por %p105, %p106
      %p108 = scmp.ne.s32.totalorder %s94, %s95
      %p109 = scmp.eq.s32.totalorder %s35, 1
      %p110 = por %p108, %p109
      %p112 = scmp.ne.s32.totalorder %s95, %s111
      %p113 = scmp.eq.s32.totalorder %s35, 0
      %p114 = por %p112, %p113
      %s116 = sadd.s32 %s115, 1
      %p119 = scmp.eq.s32.totalorder %s29, 1
      %p120 = scmp.ne.s32.totalorder %s115, %s117
      %p121 = scmp.eq.s32.totalorder %s29, 0
      %p122 = por %p120, %p121
      %p123 = scmp.ne.s32.totalorder %s115, %s117
      %p124 = scmp.eq.s32.totalorder %s34, 1
      %p125 = por %p123, %p124
      %p126 = scmp.ne.s32.totalorder %s117, %s118
      %p127 = scmp.eq.s32.totalorder %s34, 0
      %p128 = por %p126, %p127
      %p129 = scmp.ne.s32.totalorder %s117, %s118
      %p130 = scmp.eq.s32.totalorder %s35, 1
      %p131 = por %p129, %p130
      %p133 = scmp.ne.s32.totalorder %s118, %s132
      %p134 = scmp.eq.s32.totalorder %s35, 0
      %p135 = por %p133, %p134
      %s137 = sadd.s32 %s136, 1
      %p140 = scmp.eq.s32.totalorder %s29, 1
      %p141 = scmp.ne.s32.totalorder %s136, %s138
      %p142 = scmp.eq.s32.totalorder %s29, 0
      %p143 = por %p141, %p142
      %p144 = scmp.ne.s32.totalorder %s136, %s138
      %p145 = scmp.eq.s32.totalorder %s34, 1
      %p146 = por %p144, %p145
      %p147 = scmp.ne.s32.totalorder %s138, %s139
      %p148 = scmp.eq.s32.totalorder %s34, 0
      %p149 = por %p147, %p148
      %p150 = scmp.ne.s32.totalorder %s138, %s139
      %p151 = scmp.eq.s32.totalorder %s35, 1
      %p152 = por %p150, %p151
      %p154 = scmp.ne.s32.totalorder %s139, %s153
      %p155 = scmp.eq.s32.totalorder %s35, 0
      %p156 = por %p154, %p155
      %s158 = sadd.s32 %s157, 1
      %p161 = scmp.eq.s32.totalorder %s29, 1
      %p162 = scmp.ne.s32.totalorder %s157, %s159
      %p163 = scmp.eq.s32.totalorder %s29, 0
      %p164 = por %p162, %p163
      %p165 = scmp.ne.s32.totalorder %s157, %s159
      %p166 = scmp.eq.s32.totalorder %s34, 1
      %p167 = por %p165, %p166
      %p168 = scmp.ne.s32.totalorder %s159, %s160
      %p169 = scmp.eq.s32.totalorder %s34, 0
      %p170 = por %p168, %p169
      %p171 = scmp.ne.s32.totalorder %s159, %s160
      %p172 = scmp.eq.s32.totalorder %s35, 1
      %p173 = por %p171, %p172
      %p175 = scmp.ne.s32.totalorder %s160, %s174
      %p176 = scmp.eq.s32.totalorder %s35, 0
      %p177 = por %p175, %p176
      %s179 = sadd.s32 %s178, 1
      %p182 = scmp.eq.s32.totalorder %s29, 1
      %p183 = scmp.ne.s32.totalorder %s178, %s180
      %p184 = scmp.eq.s32.totalorder %s29, 0
      %p185 = por %p183, %p184
      %p186 = scmp.ne.s32.totalorder %s178, %s180
      %p187 = scmp.eq.s32.totalorder %s34, 1
      %p188 = por %p186, %p187
      %p189 = scmp.ne.s32.totalorder %s180, %s181
      %p190 = scmp.eq.s32.totalorder %s34, 0
      %p191 = por %p189, %p190
      %p192 = scmp.ne.s32.totalorder %s180, %s181
      %p193 = scmp.eq.s32.totalorder %s35, 1
      %p194 = por %p192, %p193
      %p196 = scmp.ne.s32.totalorder %s181, %s195
      %p197 = scmp.eq.s32.totalorder %s35, 0
      %p198 = por %p196, %p197
      %s200 = sadd.s32 %s199, 1
      %p203 = scmp.eq.s32.totalorder %s29, 1
      %p204 = scmp.ne.s32.totalorder %s199, %s201
      %p205 = scmp.eq.s32.totalorder %s29, 0
      %p206 = por %p204, %p205
      %p207 = scmp.ne.s32.totalorder %s199, %s201
      %p208 = scmp.eq.s32.totalorder %s34, 1
      %p209 = por %p207, %p208
      %p210 = scmp.ne.s32.totalorder %s201, %s202
      %p211 = scmp.eq.s32.totalorder %s34, 0
      %p212 = por %p210, %p211
      %p213 = scmp.ne.s32.totalorder %s201, %s202
      %p214 = scmp.eq.s32.totalorder %s35, 1
      %p215 = por %p213, %p214
      %p217 = scmp.ne.s32.totalorder %s202, %s216
      %p218 = scmp.eq.s32.totalorder %s35, 0
      %p219 = por %p217, %p218
      %s221 = sadd.s32 %s220, 1
      %p224 = scmp.eq.s32.totalorder %s29, 1
      %p225 = scmp.ne.s32.totalorder %s220, %s222
      %p226 = scmp.eq.s32.totalorder %s29, 0
      %p227 = por %p225, %p226
      %p228 = scmp.ne.s32.totalorder %s220, %s222
      %p229 = scmp.eq.s32.totalorder %s34, 1
      %p230 = por %p228, %p229
      %p231 = scmp.ne.s32.totalorder %s222, %s223
      %p232 = scmp.eq.s32.totalorder %s34, 0
      %p233 = por %p231, %p232
      %p234 = scmp.ne.s32.totalorder %s222, %s223
      %p235 = scmp.eq.s32.totalorder %s35, 1
      %p236 = por %p234, %p235
      %p238 = scmp.ne.s32.totalorder %s223, %s237
      %p239 = scmp.eq.s32.totalorder %s35, 0
      %p240 = por %p238, %p239
      %s242 = sadd.s32 %s241, 1
      %p245 = scmp.eq.s32.totalorder %s29, 1
      %p246 = scmp.ne.s32.totalorder %s241, %s243
      %p247 = scmp.eq.s32.totalorder %s29, 0
      %p248 = por %p246, %p247
      %p249 = scmp.ne.s32.totalorder %s241, %s243
      %p250 = scmp.eq.s32.totalorder %s34, 1
      %p251 = por %p249, %p250
      %p252 = scmp.ne.s32.totalorder %s243, %s244
      %p253 = scmp.eq.s32.totalorder %s34, 0
      %p254 = por %p252, %p253
      %p255 = scmp.ne.s32.totalorder %s243, %s244
      %p256 = scmp.eq.s32.totalorder %s35, 1
      %p257 = por %p255, %p256
      %p259 = scmp.ne.s32.totalorder %s244, %s258
      %p260 = scmp.eq.s32.totalorder %s35, 0
      %p261 = por %p259, %p260
      %s263 = sadd.s32 %s262, 1
      %p266 = scmp.eq.s32.totalorder %s29, 1
      %p267 = scmp.ne.s32.totalorder %s262, %s264
      %p268 = scmp.eq.s32.totalorder %s29, 0
      %p269 = por %p267, %p268
      %p270 = scmp.ne.s32.totalorder %s262, %s264
      %p271 = scmp.eq.s32.totalorder %s34, 1
      %p272 = por %p270, %p271
      %p273 = scmp.ne.s32.totalorder %s264, %s265
      %p274 = scmp.eq.s32.totalorder %s34, 0
      %p275 = por %p273, %p274
      %p276 = scmp.ne.s32.totalorder %s264, %s265
      %p277 = scmp.eq.s32.totalorder %s35, 1
      %p278 = por %p276, %p277
      %p280 = scmp.ne.s32.totalorder %s265, %s279
      %p281 = scmp.eq.s32.totalorder %s35, 0
      %p282 = por %p280, %p281
      %s284 = sadd.s32 %s283, 1
      %p287 = scmp.eq.s32.totalorder %s29, 1
      %p288 = scmp.ne.s32.totalorder %s283, %s285
      %p289 = scmp.eq.s32.totalorder %s29, 0
      %p290 = por %p288, %p289
      %p291 = scmp.ne.s32.totalorder %s283, %s285
      %p292 = scmp.eq.s32.totalorder %s34, 1
      %p293 = por %p291, %p292
      %p294 = scmp.ne.s32.totalorder %s285, %s286
      %p295 = scmp.eq.s32.totalorder %s34, 0
      %p296 = por %p294, %p295
      %p297 = scmp.ne.s32.totalorder %s285, %s286
      %p298 = scmp.eq.s32.totalorder %s35, 1
      %p299 = por %p297, %p298
      %p301 = scmp.ne.s32.totalorder %s286, %s300
      %p302 = scmp.eq.s32.totalorder %s35, 0
      %p303 = por %p301, %p302
      %s305 = sadd.s32 %s304, 1
      %p308 = scmp.eq.s32.totalorder %s29, 1
      %p309 = scmp.ne.s32.totalorder %s304, %s306
      %p310 = scmp.eq.s32.totalorder %s29, 0
      %p311 = por %p309, %p310
      %p312 = scmp.ne.s32.totalorder %s304, %s306
      %p313 = scmp.eq.s32.totalorder %s34, 1
      %p314 = por %p312, %p313
      %p315 = scmp.ne.s32.totalorder %s306, %s307
      %p316 = scmp.eq.s32.totalorder %s34, 0
      %p317 = por %p315, %p316
      %p318 = scmp.ne.s32.totalorder %s306, %s307
      %p319 = scmp.eq.s32.totalorder %s35, 1
      %p320 = por %p318, %p319
      %p322 = scmp.ne.s32.totalorder %s307, %s321
      %p323 = scmp.eq.s32.totalorder %s35, 0
      %p324 = por %p322, %p323
      %s326 = sadd.s32 %s325, 1
      %p329 = scmp.eq.s32.totalorder %s29, 1
      %p330 = scmp.ne.s32.totalorder %s325, %s327
      %p331 = scmp.eq.s32.totalorder %s29, 0
      %p332 = por %p330, %p331
      %p333 = scmp.ne.s32.totalorder %s325, %s327
      %p334 = scmp.eq.s32.totalorder %s34, 1
      %p335 = por %p333, %p334
      %p336 = scmp.ne.s32.totalorder %s327, %s328
      %p337 = scmp.eq.s32.totalorder %s34, 0
      %p338 = por %p336, %p337
      %p339 = scmp.ne.s32.totalorder %s327, %s328
      %p340 = scmp.eq.s32.totalorder %s35, 1
      %p341 = por %p339, %p340
      %p343 = scmp.ne.s32.totalorder %s328, %s342
      %p344 = scmp.eq.s32.totalorder %s35, 0
      %p345 = por %p343, %p344
      %s347 = sadd.s32 %s346, 1
      %p350 = scmp.eq.s32.totalorder %s29, 1
      %p351 = scmp.ne.s32.totalorder %s346, %s348
      %p352 = scmp.eq.s32.totalorder %s29, 0
      %p353 = por %p351, %p352
      %p354 = scmp.ne.s32.totalorder %s346, %s348
      %p355 = scmp.eq.s32.totalorder %s34, 1
      %p356 = por %p354, %p355
      %p357 = scmp.ne.s32.totalorder %s348, %s349
      %p358 = scmp.eq.s32.totalorder %s34, 0
      %p359 = por %p357, %p358
      %p360 = scmp.ne.s32.totalorder %s348, %s349
      %p361 = scmp.eq.s32.totalorder %s35, 1
      %p362 = por %p360, %p361
      %p364 = scmp.ne.s32.totalorder %s349, %s363
      %p365 = scmp.eq.s32.totalorder %s35, 0
      %p366 = por %p364, %p365
      %s368 = sadd.s32 %s367, 1
      %p371 = scmp.eq.s32.totalorder %s29, 1
      %p372 = scmp.ne.s32.totalorder %s367, %s369
      %p373 = scmp.eq.s32.totalorder %s29, 0
      %p374 = por %p372, %p373
      %p375 = scmp.ne.s32.totalorder %s367, %s369
      %p376 = scmp.eq.s32.totalorder %s34, 1
      %p377 = por %p375, %p376
      %p378 = scmp.ne.s32.totalorder %s369, %s370
      %p379 = scmp.eq.s32.totalorder %s34, 0
      %p380 = por %p378, %p379
      %p381 = scmp.ne.s32.totalorder %s369, %s370
      %p382 = scmp.eq.s32.totalorder %s35, 1
      %p383 = por %p381, %p382
      %p385 = scmp.ne.s32.totalorder %s370, %s384
      %p386 = scmp.eq.s32.totalorder %s35, 0
      %p387 = por %p385, %p386
      %s389 = sadd.s32 %s388, 1
      %p392 = scmp.eq.s32.totalorder %s29, 1
      %p393 = scmp.ne.s32.totalorder %s388, %s390
      %p394 = scmp.eq.s32.totalorder %s29, 0
      %p395 = por %p393, %p394
      %p396 = scmp.ne.s32.totalorder %s388, %s390
      %p397 = scmp.eq.s32.totalorder %s34, 1
      %p398 = por %p396, %p397
      %p399 = scmp.ne.s32.totalorder %s390, %s391
      %p400 = scmp.eq.s32.totalorder %s34, 0
      %p401 = por %p399, %p400
      %p402 = scmp.ne.s32.totalorder %s390, %s391
      %p403 = scmp.eq.s32.totalorder %s35, 1
      %p404 = por %p402, %p403
      %p406 = scmp.ne.s32.totalorder %s391, %s405
      %p407 = scmp.eq.s32.totalorder %s35, 0
      %p408 = por %p406, %p407
      %s410 = sadd.s32 %s409, 1
      %p413 = scmp.eq.s32.totalorder %s29, 1
      %p414 = scmp.ne.s32.totalorder %s409, %s411
      %p415 = scmp.eq.s32.totalorder %s29, 0
      %p416 = por %p414, %p415
      %p417 = scmp.ne.s32.totalorder %s409, %s411
      %p418 = scmp.eq.s32.totalorder %s34, 1
      %p419 = por %p417, %p418
      %p420 = scmp.ne.s32.totalorder %s411, %s412
      %p421 = scmp.eq.s32.totalorder %s34, 0
      %p422 = por %p420, %p421
      %p423 = scmp.ne.s32.totalorder %s411, %s412
      %p424 = scmp.eq.s32.totalorder %s35, 1
      %p425 = por %p423, %p424
      %p427 = scmp.ne.s32.totalorder %s412, %s426
      %p428 = scmp.eq.s32.totalorder %s35, 0
      %p429 = por %p427, %p428
      %s431 = sadd.s32 %s430, 1
      %p434 = scmp.eq.s32.totalorder %s29, 1
      %p435 = scmp.ne.s32.totalorder %s430, %s432
      %p436 = scmp.eq.s32.totalorder %s29, 0
      %p437 = por %p435, %p436
      %p438 = scmp.ne.s32.totalorder %s430, %s432
      %p439 = scmp.eq.s32.totalorder %s34, 1
      %p440 = por %p438, %p439
      %p441 = scmp.ne.s32.totalorder %s432, %s433
      %p442 = scmp.eq.s32.totalorder %s34, 0
      %p443 = por %p441, %p442
      %p444 = scmp.ne.s32.totalorder %s432, %s433
      %p445 = scmp.eq.s32.totalorder %s35, 1
      %p446 = por %p444, %p445
      %p448 = scmp.ne.s32.totalorder %s433, %s447
      %p449 = scmp.eq.s32.totalorder %s35, 0
      %p450 = por %p448, %p449
      %s452 = sadd.s32 %s451, 1
      %p455 = scmp.eq.s32.totalorder %s29, 1
      %p456 = scmp.ne.s32.totalorder %s451, %s453
      %p457 = scmp.eq.s32.totalorder %s29, 0
      %p458 = por %p456, %p457
      %p459 = scmp.ne.s32.totalorder %s451, %s453
      %p460 = scmp.eq.s32.totalorder %s34, 1
      %p461 = por %p459, %p460
      %p462 = scmp.ne.s32.totalorder %s453, %s454
      %p463 = scmp.eq.s32.totalorder %s34, 0
      %p464 = por %p462, %p463
      %p465 = scmp.ne.s32.totalorder %s453, %s454
      %p466 = scmp.eq.s32.totalorder %s35, 1
      %p467 = por %p465, %p466
      %p469 = scmp.ne.s32.totalorder %s454, %s468
      %p470 = scmp.eq.s32.totalorder %s35, 0
      %p471 = por %p469, %p470
      %s472 = ssub.s32 %s29, %s36
      %p473 = scmp.eq.s32.totalorder %s472, 0
      %s475 = sadd.s32 %s474, 1
      %s476 = scalar_select %p473, %s474, %s475
      %p479 = pneg %p473
      %p480 = scmp.eq.s32.totalorder %s29, 1
      %p481 = por %p479, %p480
      %p482 = scmp.ne.s32.totalorder %s474, %s477
      %p483 = scmp.eq.s32.totalorder %s29, 0
      %p484 = por %p482, %p483
      %p485 = scmp.ne.s32.totalorder %s474, %s477
      %p486 = scmp.eq.s32.totalorder %s34, 1
      %p487 = por %p485, %p486
      %p488 = scmp.ne.s32.totalorder %s477, %s478
      %p489 = scmp.eq.s32.totalorder %s34, 0
      %p490 = por %p488, %p489
      %p491 = scmp.ne.s32.totalorder %s477, %s478
      %p492 = scmp.eq.s32.totalorder %s35, 1
      %p493 = por %p491, %p492
      %p495 = scmp.ne.s32.totalorder %s478, %s494
      %p496 = scmp.eq.s32.totalorder %s35, 0
      %p497 = por %p495, %p496
      %p498 = scmp.le.s32.totalorder 1, %s29
      %p499 = scmp.lt.s32.totalorder %s29, 3
      %p500 = pnand %p498, %p499
      %p501 = pneg %p500
      // Predicated region
      $region9: #{tpu_custom_call.1} parent=5 // pred_check
        _
      $region10: #{tpu_custom_call.1} parent=5 // pred_check_branch
        %503 = sbr.rel (%p500) target = $region12
      $region11: #{tpu_custom_call.1} parent=5 // pred_region
        %s504 = ssub.s32 %s29, 1
        // Predicated region
        $region13: #{tpu_custom_call.1} parent=11 // pred_check
          %p505 = pneg %p128
        $region14: #{tpu_custom_call.1} parent=11 // pred_check_branch
          %507 = sbr.rel (%p505) target = $region16
        $region15: #{tpu_custom_call.1} parent=11 // pred_region
          _
        $region16: #{tpu_custom_call.1} parent=11 // pred_fallthru
          _
        // Predicated region
        $region17: #{tpu_custom_call.1} parent=11 // pred_check
          %p508 = pneg %p149
        $region18: #{tpu_custom_call.1} parent=11 // pred_check_branch
          %510 = sbr.rel (%p508) target = $region20
        $region19: #{tpu_custom_call.1} parent=11 // pred_region
          _
        $region20: #{tpu_custom_call.1} parent=11 // pred_fallthru
          _
        // Predicated region
        $region21: #{tpu_custom_call.1} parent=11 // pred_check
          %p511 = pneg %p170
        $region22: #{tpu_custom_call.1} parent=11 // pred_check_branch
          %513 = sbr.rel (%p511) target = $region24
        $region23: #{tpu_custom_call.1} parent=11 // pred_region
          _
        $region24: #{tpu_custom_call.1} parent=11 // pred_fallthru
          _
        // Predicated region
        $region25: #{tpu_custom_call.1} parent=11 // pred_check
          %p514 = pneg %p191
        $region26: #{tpu_custom_call.1} parent=11 // pred_check_branch
          %516 = sbr.rel (%p514) target = $region28
        $region27: #{tpu_custom_call.1} parent=11 // pred_region
          _
        $region28: #{tpu_custom_call.1} parent=11 // pred_fallthru
          _
        // Predicated region
        $region29: #{tpu_custom_call.1} parent=11 // pred_check
          %p517 = pneg %p212
        $region30: #{tpu_custom_call.1} parent=11 // pred_check_branch
          %519 = sbr.rel (%p517) target = $region32
        $region31: #{tpu_custom_call.1} parent=11 // pred_region
          _
        $region32: #{tpu_custom_call.1} parent=11 // pred_fallthru
          _
        // Predicated region
        $region33: #{tpu_custom_call.1} parent=11 // pred_check
          %p520 = pneg %p233
        $region34: #{tpu_custom_call.1} parent=11 // pred_check_branch
          %522 = sbr.rel (%p520) target = $region36
        $region35: #{tpu_custom_call.1} parent=11 // pred_region
          _
        $region36: #{tpu_custom_call.1} parent=11 // pred_fallthru
          _
        // Predicated region
        $region37: #{tpu_custom_call.1} parent=11 // pred_check
          %p523 = pneg %p254
        $region38: #{tpu_custom_call.1} parent=11 // pred_check_branch
          %525 = sbr.rel (%p523) target = $region40
        $region39: #{tpu_custom_call.1} parent=11 // pred_region
          _
        $region40: #{tpu_custom_call.1} parent=11 // pred_fallthru
          _
        // Predicated region
        $region41: #{tpu_custom_call.1} parent=11 // pred_check
          %p526 = pneg %p275
        $region42: #{tpu_custom_call.1} parent=11 // pred_check_branch
          %528 = sbr.rel (%p526) target = $region44
        $region43: #{tpu_custom_call.1} parent=11 // pred_region
          _
        $region44: #{tpu_custom_call.1} parent=11 // pred_fallthru
          _
        // Predicated region
        $region45: #{tpu_custom_call.1} parent=11 // pred_check
          %p529 = pneg %p296
        $region46: #{tpu_custom_call.1} parent=11 // pred_check_branch
          %531 = sbr.rel (%p529) target = $region48
        $region47: #{tpu_custom_call.1} parent=11 // pred_region
          _
        $region48: #{tpu_custom_call.1} parent=11 // pred_fallthru
          _
        // Predicated region
        $region49: #{tpu_custom_call.1} parent=11 // pred_check
          %p532 = pneg %p317
        $region50: #{tpu_custom_call.1} parent=11 // pred_check_branch
          %534 = sbr.rel (%p532) target = $region52
        $region51: #{tpu_custom_call.1} parent=11 // pred_region
          _
        $region52: #{tpu_custom_call.1} parent=11 // pred_fallthru
          _
        // Predicated region
        $region53: #{tpu_custom_call.1} parent=11 // pred_check
          %p535 = pneg %p338
        $region54: #{tpu_custom_call.1} parent=11 // pred_check_branch
          %537 = sbr.rel (%p535) target = $region56
        $region55: #{tpu_custom_call.1} parent=11 // pred_region
          _
        $region56: #{tpu_custom_call.1} parent=11 // pred_fallthru
          _
        // Predicated region
        $region57: #{tpu_custom_call.1} parent=11 // pred_check
          %p538 = pneg %p359
        $region58: #{tpu_custom_call.1} parent=11 // pred_check_branch
          %540 = sbr.rel (%p538) target = $region60
        $region59: #{tpu_custom_call.1} parent=11 // pred_region
          _
        $region60: #{tpu_custom_call.1} parent=11 // pred_fallthru
          _
        // Predicated region
        $region61: #{tpu_custom_call.1} parent=11 // pred_check
          %p541 = pneg %p380
        $region62: #{tpu_custom_call.1} parent=11 // pred_check_branch
          %543 = sbr.rel (%p541) target = $region64
        $region63: #{tpu_custom_call.1} parent=11 // pred_region
          _
        $region64: #{tpu_custom_call.1} parent=11 // pred_fallthru
          _
        // Predicated region
        $region65: #{tpu_custom_call.1} parent=11 // pred_check
          %p544 = pneg %p401
        $region66: #{tpu_custom_call.1} parent=11 // pred_check_branch
          %546 = sbr.rel (%p544) target = $region68
        $region67: #{tpu_custom_call.1} parent=11 // pred_region
          _
        $region68: #{tpu_custom_call.1} parent=11 // pred_fallthru
          _
        // Predicated region
        $region69: #{tpu_custom_call.1} parent=11 // pred_check
          %p547 = pneg %p422
        $region70: #{tpu_custom_call.1} parent=11 // pred_check_branch
          %549 = sbr.rel (%p547) target = $region72
        $region71: #{tpu_custom_call.1} parent=11 // pred_region
          _
        $region72: #{tpu_custom_call.1} parent=11 // pred_fallthru
          _
        // Predicated region
        $region73: #{tpu_custom_call.1} parent=11 // pred_check
          %p550 = pneg %p443
        $region74: #{tpu_custom_call.1} parent=11 // pred_check_branch
          %552 = sbr.rel (%p550) target = $region76
        $region75: #{tpu_custom_call.1} parent=11 // pred_region
          _
        $region76: #{tpu_custom_call.1} parent=11 // pred_fallthru
          _
        // Predicated region
        $region77: #{tpu_custom_call.1} parent=11 // pred_check
          %p553 = pneg %p464
        $region78: #{tpu_custom_call.1} parent=11 // pred_check_branch
          %555 = sbr.rel (%p553) target = $region80
        $region79: #{tpu_custom_call.1} parent=11 // pred_region
          _
        $region80: #{tpu_custom_call.1} parent=11 // pred_fallthru
          _
      $region12: #{tpu_custom_call.1} parent=5 // pred_fallthru
        _
      %p556 = scmp.lt.s32.totalorder %s29, 2
      // Predicated region
      $region81: #{tpu_custom_call.1} parent=5 // pred_check
        %p557 = pneg %p556
      $region82: #{tpu_custom_call.1} parent=5 // pred_check_branch
        %559 = sbr.rel (%p557) target = $region84
      $region83: #{tpu_custom_call.1} parent=5 // pred_region
        // Predicated region
        $region85: #{tpu_custom_call.1} parent=83 // pred_check
          %p560 = pneg %p49
        $region86: #{tpu_custom_call.1} parent=83 // pred_check_branch
          %562 = sbr.rel (%p560) target = $region88
        $region87: #{tpu_custom_call.1} parent=83 // pred_region
          %p563 = scmp.lt.s32.totalorder %s29, 1
          %s564 = scalar_select %p563, %s29, 1
          %s565 = smul.addr %s564, 8
          %s566 = scalar_lea.vmem %s0, %s565
        $region88: #{tpu_custom_call.1} parent=83 // pred_fallthru
          _
        // Predicated region
        $region89: #{tpu_custom_call.1} parent=83 // pred_check
          %p567 = pneg %p75
        $region90: #{tpu_custom_call.1} parent=83 // pred_check_branch
          %569 = sbr.rel (%p567) target = $region92
        $region91: #{tpu_custom_call.1} parent=83 // pred_region
          %p570 = scmp.lt.s32.totalorder %s29, 1
          %s571 = scalar_select %p570, %s29, 1
          %s572 = smul.addr %s571, 8
          %s573 = scalar_lea.vmem %s1, %s572
        $region92: #{tpu_custom_call.1} parent=83 // pred_fallthru
          _
        // Predicated region
        $region93: #{tpu_custom_call.1} parent=83 // pred_check
          %p574 = pneg %p101
        $region94: #{tpu_custom_call.1} parent=83 // pred_check_branch
          %576 = sbr.rel (%p574) target = $region96
        $region95: #{tpu_custom_call.1} parent=83 // pred_region
          %p577 = scmp.lt.s32.totalorder %s29, 1
          %s578 = scalar_select %p577, %s29, 1
          %s579 = smul.addr %s578, 8
          %s580 = scalar_lea.vmem %s2, %s579
        $region96: #{tpu_custom_call.1} parent=83 // pred_fallthru
          _
      $region84: #{tpu_custom_call.1} parent=5 // pred_fallthru
        _
      %p581 = scmp.le.s32.totalorder 1, %s29
      %p582 = scmp.lt.s32.totalorder %s29, 3
      %p583 = pnand %p581, %p582
      %p584 = pneg %p583
      // Predicated region
      $region97: #{tpu_custom_call.1} parent=5 // pred_check
        _
      $region98: #{tpu_custom_call.1} parent=5 // pred_check_branch
        %586 = sbr.rel (%p583) target = $region100
      $region99: #{tpu_custom_call.1} parent=5 // pred_region
        %s587 = ssub.s32 %s29, 1
        %p588 = scmp.lt.s32.totalorder %s34, 1
        %s589 = scalar_select %p588, %s34, 1
        %s590 = smul.addr %s589, 8
        %s591 = scalar_lea.vmem %s0, %s590
        %p592 = pneg %p55
        %p593 = pneg %p52
        %p594 = scmp.lt.s32.totalorder %s34, 1
        %s595 = scalar_select %p594, %s34, 1
        %s596 = smul.addr %s595, 8
        %s597 = scalar_lea.vmem %s1, %s596
        %p598 = pneg %p81
        %p599 = pneg %p78
        %p600 = scmp.lt.s32.totalorder %s34, 1
        %s601 = scalar_select %p600, %s34, 1
        %s602 = smul.addr %s601, 8
        %s603 = scalar_lea.vmem %s2, %s602
        %p604 = pneg %p107
        %p605 = pneg %p104
        %p606 = pneg %p128
        %p607 = pneg %p125
        %p608 = pneg %p149
        %p609 = pneg %p146
        %p610 = pneg %p170
        %p611 = pneg %p167
        %p612 = pneg %p191
        %p613 = pneg %p188
        %p614 = pneg %p212
        %p615 = pneg %p209
        %p616 = pneg %p233
        %p617 = pneg %p230
        %p618 = pneg %p254
        %p619 = pneg %p251
        %p620 = pneg %p275
        %p621 = pneg %p272
        %p622 = pneg %p296
        %p623 = pneg %p293
        %p624 = pneg %p317
        %p625 = pneg %p314
        %p626 = pneg %p338
        %p627 = pneg %p335
        %p628 = pneg %p359
        %p629 = pneg %p356
        %p630 = pneg %p380
        %p631 = pneg %p377
        %p632 = pneg %p401
        %p633 = pneg %p398
        %p634 = pneg %p422
        %p635 = pneg %p419
        %p636 = pneg %p443
        %p637 = pneg %p440
        %p638 = pneg %p464
        %p639 = pneg %p461
        %p640 = pneg %p490
        %p641 = pneg %p487
        %s642 = sand.u32 %s477, 1
        %s643 = scalar_lea.sflag [#allocation3], %s642
        %s644 = sand.u32 %s477, 1
        %s645 = smul.addr %s644, 8
        %s646 = scalar_lea.vmem [#allocation2], %s645
        %p647 = scmp.lt.s32.totalorder %s34, 1
        %s648 = scalar_select %p647, %s34, 1
        %s649 = smul.addr %s648, 8
        %s650 = scalar_lea.vmem %s0, %s649
        %p651 = scmp.lt.s32.totalorder %s34, 1
        %s652 = scalar_select %p651, %s34, 1
        %s653 = smul.addr %s652, 8
        %s654 = scalar_lea.vmem %s1, %s653
        %p655 = scmp.lt.s32.totalorder %s34, 1
        %s656 = scalar_select %p655, %s34, 1
        %s657 = smul.addr %s656, 8
        %s658 = scalar_lea.vmem %s2, %s657
        %v659 = vld [vmem:[%s650] sm:$0xff]
        %v660 = vld [vmem:[%s654] sm:$0xff]
        %v661 = vld [vmem:[%s658] sm:$0xff]
        %v662 = vmul.f32 %v660, 0.35355338
        %v663 = vld [vmem:[%s3] sm:$0x1]
        %v664 = vld [vmem:[%s4] sm:$0x1]
        %vm665 = vcmask 261120
        %v666 = vsel %vm665, %v659, 0.0
        %667 = vadd.xlane.f32.xlu0 %v666
        %v668 = vpop.xlane.xlu0 %667
        %v669 = vrcp.pop 32.0
        %v670 = vmul.f32 %v668, %v669
        %v671 = vsub.f32 %v659, %v670
        %v672 = vmul.f32 %v671, %v671
        %v673 = vsel %vm665, %v672, 0.0
        %674 = vadd.xlane.f32.xlu0 %v673
        %v675 = vpop.xlane.xlu0 %674
        %v676 = vmul.f32 %v675, %v669
        %v677 = vadd.f32 %v676, 1e-05
        %v678 = vrsqrt.pop %v677
        %v679 = vmul.f32 %v671, %v678
        %v681 = vlaneseq
        %v682 = vshrl.u32 %v681, 7
        %v683 = vsub.s32 0, %v682
        %v684 = vrot.slane %v663, %v683
        %v686 = vmul.f32 %v679, %v684
        %v688 = vlaneseq
        %v689 = vshrl.u32 %v688, 7
        %v690 = vsub.s32 0, %v689
        %v691 = vrot.slane %v664, %v690
        %v693 = vadd.f32 %v686, %v691
        %v694 = vld [vmem:[%s5] sm:$0xff]
        %v695 = vld [vmem:[%s5 + $0x8] sm:$0xff]
        %v696 = vld [vmem:[%s5 + $0x10] sm:$0xff]
        %v697 = vld [vmem:[%s5 + $0x18] sm:$0xff]
        %v699 = vsel %vm665, %v693, 0
        %701 = vmatprep.subr.mxu0 0.0
        %702 = vmatpush1.msra.mxu0 %v694
        %703 = vmatprep.subr.mxu0 0.0
        %704 = vmatpush1.msra.mxu0 %v695
        %705 = vmatprep.subr.mxu0 0.0
        %706 = vmatpush1.msra.mxu0 %v696
        %707 = vmatprep.subr.mxu0 0.0
        %708 = vmatpush1.msra.mxu0 %v697
        %709 = vmatprep.subr.mxu0 0.0
        %710 = vmatpush1.msra.mxu0 0.0
        %711 = vmatprep.subr.mxu0 0.0
        %712 = vmatpush1.msra.mxu0 0.0
        %713 = vmatprep.subr.mxu0 0.0
        %714 = vmatpush1.msra.mxu0 0.0
        %715 = vmatprep.subr.mxu0 0.0
        %716 = vmatpush1.msra.mxu0 0.0
        %717 = vmatprep.subr.mxu0 0.0
        %718 = vmatpush1.msra.mxu0 0.0
        %719 = vmatprep.subr.mxu0 0.0
        %720 = vmatpush1.msra.mxu0 0.0
        %721 = vmatprep.subr.mxu0 0.0
        %722 = vmatpush1.msra.mxu0 0.0
        %723 = vmatprep.subr.mxu0 0.0
        %724 = vmatpush1.msra.mxu0 0.0
        %725 = vmatprep.subr.mxu0 0.0
        %726 = vmatpush1.msra.mxu0 0.0
        %727 = vmatprep.subr.mxu0 0.0
        %728 = vmatpush1.msra.mxu0 0.0
        %729 = vmatprep.subr.mxu0 0.0
        %730 = vmatpush1.msra.mxu0 0.0
        %731 = vmatprep.subr.mxu0 0.0
        %732 = vmatpush1.msra.mxu0 0.0
        %733 = vmatprep.subr.mxu0 0.0
        %734 = vmatpush1.msra.mxu0 0.0
        %735 = vmatprep.subr.mxu0 0.0
        %736 = vmatpush1.msra.mxu0 0.0
        %737 = vmatprep.subr.mxu0 0.0
        %738 = vmatpush1.msra.mxu0 0.0
        %739 = vmatprep.subr.mxu0 0.0
        %740 = vmatpush1.msra.mxu0 0.0
        %741 = vmatprep.subr.mxu0 0.0
        %742 = vmatpush1.msra.mxu0 0.0
        %743 = vmatprep.subr.mxu0 0.0
        %744 = vmatpush1.msra.mxu0 0.0
        %745 = vmatprep.subr.mxu0 0.0
        %746 = vmatpush1.msra.mxu0 0.0
        %747 = vmatprep.subr.mxu0 0.0
        %748 = vmatpush1.msra.mxu0 0.0
        %749 = vmatprep.subr.mxu0 0.0
        %750 = vmatpush1.msra.mxu0 0.0
        %751 = vmatprep.subr.mxu0 0.0
        %752 = vmatpush1.msra.mxu0 0.0
        %753 = vmatprep.subr.mxu0 0.0
        %754 = vmatpush1.msra.mxu0 0.0
        %755 = vmatprep.subr.mxu0 0.0
        %756 = vmatpush1.msra.mxu0 0.0
        %757 = vmatprep.subr.mxu0 0.0
        %758 = vmatpush1.msra.mxu0 0.0
        %759 = vmatprep.subr.mxu0 0.0
        %760 = vmatpush1.msra.mxu0 0.0
        %761 = vmatprep.subr.mxu0 0.0
        %762 = vmatpush1.msra.mxu0 0.0
        %763 = vmatprep.subr.mxu0 0.0
        %764 = vmatpush1.msra.mxu0 0.0
        %765 = vmatprep.mubr.f32.mxu0 0.0
        %766 = vmatmul.mubr.f32.gmra.mrb[0].mxu0 %v699
        %v767 = vpop.f32.mrb[0].mxu0
        %v768 = vadd.f32 0.0, %v767
        %v769 = vpop.f32.mrb[0].mxu0
        %770 = vdwg.mxu0
        %v771 = vmul.f32 %v768, 0.35355338
        %773 = vrot.lane.b32.xlu0 %v768, 96
        %v774 = vpop.permute.xlu0 %773
        %vm775 = vcmask 64512
        %v777 = vsel %vm775, %v771, 0
        %v779 = vsel %vm775, %v774, 0
        %781 = vmatprep.subr.mxu0 0.0
        %782 = vmatpush1.xpose.msra.mxu0 %v779
        %783 = vmatprep.subr.mxu0 0.0
        %784 = vmatpush1.xpose.msra.mxu0 0.0
        %785 = vmatprep.subr.mxu0 0.0
        %786 = vmatpush1.xpose.msra.mxu0 0.0
        %787 = vmatprep.subr.mxu0 0.0
        %788 = vmatpush1.xpose.msra.mxu0 0.0
        %789 = vmatprep.subr.mxu0 0.0
        %790 = vmatpush1.xpose.msra.mxu0 0.0
        %791 = vmatprep.subr.mxu0 0.0
        %792 = vmatpush1.xpose.msra.mxu0 0.0
        %793 = vmatprep.subr.mxu0 0.0
        %794 = vmatpush1.xpose.msra.mxu0 0.0
        %795 = vmatprep.subr.mxu0 0.0
        %796 = vmatpush1.xpose.msra.mxu0 0.0
        %797 = vmatprep.subr.mxu0 0.0
        %798 = vmatpush1.xpose.msra.mxu0 0.0
        %799 = vmatprep.subr.mxu0 0.0
        %800 = vmatpush1.xpose.msra.mxu0 0.0
        %801 = vmatprep.subr.mxu0 0.0
        %802 = vmatpush1.xpose.msra.mxu0 0.0
        %803 = vmatprep.subr.mxu0 0.0
        %804 = vmatpush1.xpose.msra.mxu0 0.0
        %805 = vmatprep.subr.mxu0 0.0
        %806 = vmatpush1.xpose.msra.mxu0 0.0
        %807 = vmatprep.subr.mxu0 0.0
        %808 = vmatpush1.xpose.msra.mxu0 0.0
        %809 = vmatprep.subr.mxu0 0.0
        %810 = vmatpush1.xpose.msra.mxu0 0.0
        %811 = vmatprep.subr.mxu0 0.0
        %812 = vmatpush1.xpose.msra.mxu0 0.0
        %813 = vmatprep.subr.mxu0 0.0
        %814 = vmatpush1.xpose.msra.mxu0 0.0
        %815 = vmatprep.subr.mxu0 0.0
        %816 = vmatpush1.xpose.msra.mxu0 0.0
        %817 = vmatprep.subr.mxu0 0.0
        %818 = vmatpush1.xpose.msra.mxu0 0.0
        %819 = vmatprep.subr.mxu0 0.0
        %820 = vmatpush1.xpose.msra.mxu0 0.0
        %821 = vmatprep.subr.mxu0 0.0
        %822 = vmatpush1.xpose.msra.mxu0 0.0
        %823 = vmatprep.subr.mxu0 0.0
        %824 = vmatpush1.xpose.msra.mxu0 0.0
        %825 = vmatprep.subr.mxu0 0.0
        %826 = vmatpush1.xpose.msra.mxu0 0.0
        %827 = vmatprep.subr.mxu0 0.0
        %828 = vmatpush1.xpose.msra.mxu0 0.0
        %829 = vmatprep.subr.mxu0 0.0
        %830 = vmatpush1.xpose.msra.mxu0 0.0
        %831 = vmatprep.subr.mxu0 0.0
        %832 = vmatpush1.xpose.msra.mxu0 0.0
        %833 = vmatprep.subr.mxu0 0.0
        %834 = vmatpush1.xpose.msra.mxu0 0.0
        %835 = vmatprep.subr.mxu0 0.0
        %836 = vmatpush1.xpose.msra.mxu0 0.0
        %837 = vmatprep.subr.mxu0 0.0
        %838 = vmatpush1.xpose.msra.mxu0 0.0
        %839 = vmatprep.subr.mxu0 0.0
        %840 = vmatpush1.xpose.msra.mxu0 0.0
        %841 = vmatprep.subr.mxu0 0.0
        %842 = vmatpush1.xpose.msra.mxu0 0.0
        %843 = vmatprep.subr.mxu0 0.0
        %844 = vmatpush1.xpose.msra.mxu0 0.0
        %845 = vmatprep.mubr.f32.mxu0 0.0
        %846 = vmatmul.mubr.f32.gmra.mrb[0].mxu0 %v777
        %v847 = vpop.f32.mrb[0].mxu0
        %v848 = vadd.f32 0.0, %v847
        %v849 = vpop.f32.mrb[0].mxu0
        %850 = vdwg.mxu0
        %v851 = vsel %vm775, %v848, -inf
        %852 = vmax.xlane.f32.xlu0 %v851
        %v853 = vpop.xlane.xlu0 %852
        %v854 = vsub.f32 %v848, %v853
        %v855 = vmul.f32 %v854, 1.442695
        %v856 = vpow.pop %v855
        %v857 = vsel %vm775, %v856, 0.0
        %858 = vadd.xlane.f32.xlu0 %v857
        %v859 = vpop.xlane.xlu0 %858
        %v860 = vrcp.pop %v859
        %v861 = vmul.f32 %v856, %v860
        %862 = vrot.lane.b32.xlu0 %v768, 64
        %v863 = vpop.permute.xlu0 %862
        %v866 = vsel %vm775, %v861, 0
        %868 = vmatprep.subr.mxu0 0.0
        %869 = vmatpush1.msra.mxu0 %v863
        %870 = vmatprep.subr.mxu0 0.0
        %871 = vmatpush1.msra.mxu0 0.0
        %872 = vmatprep.subr.mxu0 0.0
        %873 = vmatpush1.msra.mxu0 0.0
        %874 = vmatprep.subr.mxu0 0.0
        %875 = vmatpush1.msra.mxu0 0.0
        %876 = vmatprep.subr.mxu0 0.0
        %877 = vmatpush1.msra.mxu0 0.0
        %878 = vmatprep.subr.mxu0 0.0
        %879 = vmatpush1.msra.mxu0 0.0
        %880 = vmatprep.subr.mxu0 0.0
        %881 = vmatpush1.msra.mxu0 0.0
        %882 = vmatprep.subr.mxu0 0.0
        %883 = vmatpush1.msra.mxu0 0.0
        %884 = vmatprep.subr.mxu0 0.0
        %885 = vmatpush1.msra.mxu0 0.0
        %886 = vmatprep.subr.mxu0 0.0
        %887 = vmatpush1.msra.mxu0 0.0
        %888 = vmatprep.subr.mxu0 0.0
        %889 = vmatpush1.msra.mxu0 0.0
        %890 = vmatprep.subr.mxu0 0.0
        %891 = vmatpush1.msra.mxu0 0.0
        %892 = vmatprep.subr.mxu0 0.0
        %893 = vmatpush1.msra.mxu0 0.0
        %894 = vmatprep.subr.mxu0 0.0
        %895 = vmatpush1.msra.mxu0 0.0
        %896 = vmatprep.subr.mxu0 0.0
        %897 = vmatpush1.msra.mxu0 0.0
        %898 = vmatprep.subr.mxu0 0.0
        %899 = vmatpush1.msra.mxu0 0.0
        %900 = vmatprep.subr.mxu0 0.0
        %901 = vmatpush1.msra.mxu0 0.0
        %902 = vmatprep.subr.mxu0 0.0
        %903 = vmatpush1.msra.mxu0 0.0
        %904 = vmatprep.subr.mxu0 0.0
        %905 = vmatpush1.msra.mxu0 0.0
        %906 = vmatprep.subr.mxu0 0.0
        %907 = vmatpush1.msra.mxu0 0.0
        %908 = vmatprep.subr.mxu0 0.0
        %909 = vmatpush1.msra.mxu0 0.0
        %910 = vmatprep.subr.mxu0 0.0
        %911 = vmatpush1.msra.mxu0 0.0
        %912 = vmatprep.subr.mxu0 0.0
        %913 = vmatpush1.msra.mxu0 0.0
        %914 = vmatprep.subr.mxu0 0.0
        %915 = vmatpush1.msra.mxu0 0.0
        %916 = vmatprep.subr.mxu0 0.0
        %917 = vmatpush1.msra.mxu0 0.0
        %918 = vmatprep.subr.mxu0 0.0
        %919 = vmatpush1.msra.mxu0 0.0
        %920 = vmatprep.subr.mxu0 0.0
        %921 = vmatpush1.msra.mxu0 0.0
        %922 = vmatprep.subr.mxu0 0.0
        %923 = vmatpush1.msra.mxu0 0.0
        %924 = vmatprep.subr.mxu0 0.0
        %925 = vmatpush1.msra.mxu0 0.0
        %926 = vmatprep.subr.mxu0 0.0
        %927 = vmatpush1.msra.mxu0 0.0
        %928 = vmatprep.subr.mxu0 0.0
        %929 = vmatpush1.msra.mxu0 0.0
        %930 = vmatprep.subr.mxu0 0.0
        %931 = vmatpush1.msra.mxu0 0.0
        %932 = vmatprep.mubr.f32.mxu0 0.0
        %933 = vmatmul.mubr.f32.gmra.mrb[0].mxu0 %v866
        %v934 = vpop.f32.mrb[0].mxu0
        %v935 = vadd.f32 0.0, %v934
        %v936 = vpop.f32.mrb[0].mxu0
        %937 = vdwg.mxu0
        %938 = vrot.lane.b32.xlu0 %v771, 120
        %v939 = vpop.permute.xlu0 %938
        %940 = vrot.lane.b32.xlu0 %v768, 88
        %v941 = vpop.permute.xlu0 %940
        %v942 = vsel %vm775, %v939, 0
        %v944 = vsel %vm775, %v941, 0
        %946 = vmatprep.subr.mxu0 0.0
        %947 = vmatpush1.xpose.msra.mxu0 %v944
        %948 = vmatprep.subr.mxu0 0.0
        %949 = vmatpush1.xpose.msra.mxu0 0.0
        %950 = vmatprep.subr.mxu0 0.0
        %951 = vmatpush1.xpose.msra.mxu0 0.0
        %952 = vmatprep.subr.mxu0 0.0
        %953 = vmatpush1.xpose.msra.mxu0 0.0
        %954 = vmatprep.subr.mxu0 0.0
        %955 = vmatpush1.xpose.msra.mxu0 0.0
        %956 = vmatprep.subr.mxu0 0.0
        %957 = vmatpush1.xpose.msra.mxu0 0.0
        %958 = vmatprep.subr.mxu0 0.0
        %959 = vmatpush1.xpose.msra.mxu0 0.0
        %960 = vmatprep.subr.mxu0 0.0
        %961 = vmatpush1.xpose.msra.mxu0 0.0
        %962 = vmatprep.subr.mxu0 0.0
        %963 = vmatpush1.xpose.msra.mxu0 0.0
        %964 = vmatprep.subr.mxu0 0.0
        %965 = vmatpush1.xpose.msra.mxu0 0.0
        %966 = vmatprep.subr.mxu0 0.0
        %967 = vmatpush1.xpose.msra.mxu0 0.0
        %968 = vmatprep.subr.mxu0 0.0
        %969 = vmatpush1.xpose.msra.mxu0 0.0
        %970 = vmatprep.subr.mxu0 0.0
        %971 = vmatpush1.xpose.msra.mxu0 0.0
        %972 = vmatprep.subr.mxu0 0.0
        %973 = vmatpush1.xpose.msra.mxu0 0.0
        %974 = vmatprep.subr.mxu0 0.0
        %975 = vmatpush1.xpose.msra.mxu0 0.0
        %976 = vmatprep.subr.mxu0 0.0
        %977 = vmatpush1.xpose.msra.mxu0 0.0
        %978 = vmatprep.subr.mxu0 0.0
        %979 = vmatpush1.xpose.msra.mxu0 0.0
        %980 = vmatprep.subr.mxu0 0.0
        %981 = vmatpush1.xpose.msra.mxu0 0.0
        %982 = vmatprep.subr.mxu0 0.0
        %983 = vmatpush1.xpose.msra.mxu0 0.0
        %984 = vmatprep.subr.mxu0 0.0
        %985 = vmatpush1.xpose.msra.mxu0 0.0
        %986 = vmatprep.subr.mxu0 0.0
        %987 = vmatpush1.xpose.msra.mxu0 0.0
        %988 = vmatprep.subr.mxu0 0.0
        %989 = vmatpush1.xpose.msra.mxu0 0.0
        %990 = vmatprep.subr.mxu0 0.0
        %991 = vmatpush1.xpose.msra.mxu0 0.0
        %992 = vmatprep.subr.mxu0 0.0
        %993 = vmatpush1.xpose.msra.mxu0 0.0
        %994 = vmatprep.subr.mxu0 0.0
        %995 = vmatpush1.xpose.msra.mxu0 0.0
        %996 = vmatprep.subr.mxu0 0.0
        %997 = vmatpush1.xpose.msra.mxu0 0.0
        %998 = vmatprep.subr.mxu0 0.0
        %999 = vmatpush1.xpose.msra.mxu0 0.0
        %1000 = vmatprep.subr.mxu0 0.0
        %1001 = vmatpush1.xpose.msra.mxu0 0.0
        %1002 = vmatprep.subr.mxu0 0.0
        %1003 = vmatpush1.xpose.msra.mxu0 0.0
        %1004 = vmatprep.subr.mxu0 0.0
        %1005 = vmatpush1.xpose.msra.mxu0 0.0
        %1006 = vmatprep.subr.mxu0 0.0
        %1007 = vmatpush1.xpose.msra.mxu0 0.0
        %1008 = vmatprep.subr.mxu0 0.0
        %1009 = vmatpush1.xpose.msra.mxu0 0.0
        %1010 = vmatprep.mubr.f32.mxu0 0.0
        %1011 = vmatmul.mubr.f32.gmra.mrb[0].mxu0 %v942
        %v1012 = vpop.f32.mrb[0].mxu0
        %v1013 = vadd.f32 0.0, %v1012
        %v1014 = vpop.f32.mrb[0].mxu0
        %1015 = vdwg.mxu0
        %v1016 = vsel %vm775, %v1013, -inf
        %1017 = vmax.xlane.f32.xlu0 %v1016
        %v1018 = vpop.xlane.xlu0 %1017
        %v1019 = vsub.f32 %v1013, %v1018
        %v1020 = vmul.f32 %v1019, 1.442695
        %v1021 = vpow.pop %v1020
        %v1022 = vsel %vm775, %v1021, 0.0
        %1023 = vadd.xlane.f32.xlu0 %v1022
        %v1024 = vpop.xlane.xlu0 %1023
        %v1025 = vrcp.pop %v1024
        %v1026 = vmul.f32 %v1021, %v1025
        %1027 = vrot.lane.b32.xlu0 %v768, 56
        %v1028 = vpop.permute.xlu0 %1027
        %v1031 = vsel %vm775, %v1026, 0
        %1033 = vmatprep.subr.mxu0 0.0
        %1034 = vmatpush1.msra.mxu0 %v1028
        %1035 = vmatprep.subr.mxu0 0.0
        %1036 = vmatpush1.msra.mxu0 0.0
        %1037 = vmatprep.subr.mxu0 0.0
        %1038 = vmatpush1.msra.mxu0 0.0
        %1039 = vmatprep.subr.mxu0 0.0
        %1040 = vmatpush1.msra.mxu0 0.0
        %1041 = vmatprep.subr.mxu0 0.0
        %1042 = vmatpush1.msra.mxu0 0.0
        %1043 = vmatprep.subr.mxu0 0.0
        %1044 = vmatpush1.msra.mxu0 0.0
        %1045 = vmatprep.subr.mxu0 0.0
        %1046 = vmatpush1.msra.mxu0 0.0
        %1047 = vmatprep.subr.mxu0 0.0
        %1048 = vmatpush1.msra.mxu0 0.0
        %1049 = vmatprep.subr.mxu0 0.0
        %1050 = vmatpush1.msra.mxu0 0.0
        %1051 = vmatprep.subr.mxu0 0.0
        %1052 = vmatpush1.msra.mxu0 0.0
        %1053 = vmatprep.subr.mxu0 0.0
        %1054 = vmatpush1.msra.mxu0 0.0
        %1055 = vmatprep.subr.mxu0 0.0
        %1056 = vmatpush1.msra.mxu0 0.0
        %1057 = vmatprep.subr.mxu0 0.0
        %1058 = vmatpush1.msra.mxu0 0.0
        %1059 = vmatprep.subr.mxu0 0.0
        %1060 = vmatpush1.msra.mxu0 0.0
        %1061 = vmatprep.subr.mxu0 0.0
        %1062 = vmatpush1.msra.mxu0 0.0
        %1063 = vmatprep.subr.mxu0 0.0
        %1064 = vmatpush1.msra.mxu0 0.0
        %1065 = vmatprep.subr.mxu0 0.0
        %1066 = vmatpush1.msra.mxu0 0.0
        %1067 = vmatprep.subr.mxu0 0.0
        %1068 = vmatpush1.msra.mxu0 0.0
        %1069 = vmatprep.subr.mxu0 0.0
        %1070 = vmatpush1.msra.mxu0 0.0
        %1071 = vmatprep.subr.mxu0 0.0
        %1072 = vmatpush1.msra.mxu0 0.0
        %1073 = vmatprep.subr.mxu0 0.0
        %1074 = vmatpush1.msra.mxu0 0.0
        %1075 = vmatprep.subr.mxu0 0.0
        %1076 = vmatpush1.msra.mxu0 0.0
        %1077 = vmatprep.subr.mxu0 0.0
        %1078 = vmatpush1.msra.mxu0 0.0
        %1079 = vmatprep.subr.mxu0 0.0
        %1080 = vmatpush1.msra.mxu0 0.0
        %1081 = vmatprep.subr.mxu0 0.0
        %1082 = vmatpush1.msra.mxu0 0.0
        %1083 = vmatprep.subr.mxu0 0.0
        %1084 = vmatpush1.msra.mxu0 0.0
        %1085 = vmatprep.subr.mxu0 0.0
        %1086 = vmatpush1.msra.mxu0 0.0
        %1087 = vmatprep.subr.mxu0 0.0
        %1088 = vmatpush1.msra.mxu0 0.0
        %1089 = vmatprep.subr.mxu0 0.0
        %1090 = vmatpush1.msra.mxu0 0.0
        %1091 = vmatprep.subr.mxu0 0.0
        %1092 = vmatpush1.msra.mxu0 0.0
        %1093 = vmatprep.subr.mxu0 0.0
        %1094 = vmatpush1.msra.mxu0 0.0
        %1095 = vmatprep.subr.mxu0 0.0
        %1096 = vmatpush1.msra.mxu0 0.0
        %1097 = vmatprep.mubr.f32.mxu0 0.0
        %1098 = vmatmul.mubr.f32.gmra.mrb[0].mxu0 %v1031
        %v1099 = vpop.f32.mrb[0].mxu0
        %v1100 = vadd.f32 0.0, %v1099
        %v1101 = vpop.f32.mrb[0].mxu0
        %1102 = vdwg.mxu0
        %1103 = vrot.lane.b32.xlu0 %v771, 112
        %v1104 = vpop.permute.xlu0 %1103
        %1105 = vrot.lane.b32.xlu0 %v768, 80
        %v1106 = vpop.permute.xlu0 %1105
        %v1107 = vsel %vm775, %v1104, 0
        %v1109 = vsel %vm775, %v1106, 0
        %1111 = vmatprep.subr.mxu0 0.0
        %1112 = vmatpush1.xpose.msra.mxu0 %v1109
        %1113 = vmatprep.subr.mxu0 0.0
        %1114 = vmatpush1.xpose.msra.mxu0 0.0
        %1115 = vmatprep.subr.mxu0 0.0
        %1116 = vmatpush1.xpose.msra.mxu0 0.0
        %1117 = vmatprep.subr.mxu0 0.0
        %1118 = vmatpush1.xpose.msra.mxu0 0.0
        %1119 = vmatprep.subr.mxu0 0.0
        %1120 = vmatpush1.xpose.msra.mxu0 0.0
        %1121 = vmatprep.subr.mxu0 0.0
        %1122 = vmatpush1.xpose.msra.mxu0 0.0
        %1123 = vmatprep.subr.mxu0 0.0
        %1124 = vmatpush1.xpose.msra.mxu0 0.0
        %1125 = vmatprep.subr.mxu0 0.0
        %1126 = vmatpush1.xpose.msra.mxu0 0.0
        %1127 = vmatprep.subr.mxu0 0.0
        %1128 = vmatpush1.xpose.msra.mxu0 0.0
        %1129 = vmatprep.subr.mxu0 0.0
        %1130 = vmatpush1.xpose.msra.mxu0 0.0
        %1131 = vmatprep.subr.mxu0 0.0
        %1132 = vmatpush1.xpose.msra.mxu0 0.0
        %1133 = vmatprep.subr.mxu0 0.0
        %1134 = vmatpush1.xpose.msra.mxu0 0.0
        %1135 = vmatprep.subr.mxu0 0.0
        %1136 = vmatpush1.xpose.msra.mxu0 0.0
        %1137 = vmatprep.subr.mxu0 0.0
        %1138 = vmatpush1.xpose.msra.mxu0 0.0
        %1139 = vmatprep.subr.mxu0 0.0
        %1140 = vmatpush1.xpose.msra.mxu0 0.0
        %1141 = vmatprep.subr.mxu0 0.0
        %1142 = vmatpush1.xpose.msra.mxu0 0.0
        %1143 = vmatprep.subr.mxu0 0.0
        %1144 = vmatpush1.xpose.msra.mxu0 0.0
        %1145 = vmatprep.subr.mxu0 0.0
        %1146 = vmatpush1.xpose.msra.mxu0 0.0
        %1147 = vmatprep.subr.mxu0 0.0
        %1148 = vmatpush1.xpose.msra.mxu0 0.0
        %1149 = vmatprep.subr.mxu0 0.0
        %1150 = vmatpush1.xpose.msra.mxu0 0.0
        %1151 = vmatprep.subr.mxu0 0.0
        %1152 = vmatpush1.xpose.msra.mxu0 0.0
        %1153 = vmatprep.subr.mxu0 0.0
        %1154 = vmatpush1.xpose.msra.mxu0 0.0
        %1155 = vmatprep.subr.mxu0 0.0
        %1156 = vmatpush1.xpose.msra.mxu0 0.0
        %1157 = vmatprep.subr.mxu0 0.0
        %1158 = vmatpush1.xpose.msra.mxu0 0.0
        %1159 = vmatprep.subr.mxu0 0.0
        %1160 = vmatpush1.xpose.msra.mxu0 0.0
        %1161 = vmatprep.subr.mxu0 0.0
        %1162 = vmatpush1.xpose.msra.mxu0 0.0
        %1163 = vmatprep.subr.mxu0 0.0
        %1164 = vmatpush1.xpose.msra.mxu0 0.0
        %1165 = vmatprep.subr.mxu0 0.0
        %1166 = vmatpush1.xpose.msra.mxu0 0.0
        %1167 = vmatprep.subr.mxu0 0.0
        %1168 = vmatpush1.xpose.msra.mxu0 0.0
        %1169 = vmatprep.subr.mxu0 0.0
        %1170 = vmatpush1.xpose.msra.mxu0 0.0
        %1171 = vmatprep.subr.mxu0 0.0
        %1172 = vmatpush1.xpose.msra.mxu0 0.0
        %1173 = vmatprep.subr.mxu0 0.0
        %1174 = vmatpush1.xpose.msra.mxu0 0.0
        %1175 = vmatprep.mubr.f32.mxu0 0.0
        %1176 = vmatmul.mubr.f32.gmra.mrb[0].mxu0 %v1107
        %v1177 = vpop.f32.mrb[0].mxu0
        %v1178 = vadd.f32 0.0, %v1177
        %v1179 = vpop.f32.mrb[0].mxu0
        %1180 = vdwg.mxu0
        %v1181 = vsel %vm775, %v1178, -inf
        %1182 = vmax.xlane.f32.xlu0 %v1181
        %v1183 = vpop.xlane.xlu0 %1182
        %v1184 = vsub.f32 %v1178, %v1183
        %v1185 = vmul.f32 %v1184, 1.442695
        %v1186 = vpow.pop %v1185
        %v1187 = vsel %vm775, %v1186, 0.0
        %1188 = vadd.xlane.f32.xlu0 %v1187
        %v1189 = vpop.xlane.xlu0 %1188
        %v1190 = vrcp.pop %v1189
        %v1191 = vmul.f32 %v1186, %v1190
        %1192 = vrot.lane.b32.xlu0 %v768, 48
        %v1193 = vpop.permute.xlu0 %1192
        %v1196 = vsel %vm775, %v1191, 0
        %1198 = vmatprep.subr.mxu0 0.0
        %1199 = vmatpush1.msra.mxu0 %v1193
        %1200 = vmatprep.subr.mxu0 0.0
        %1201 = vmatpush1.msra.mxu0 0.0
        %1202 = vmatprep.subr.mxu0 0.0
        %1203 = vmatpush1.msra.mxu0 0.0
        %1204 = vmatprep.subr.mxu0 0.0
        %1205 = vmatpush1.msra.mxu0 0.0
        %1206 = vmatprep.subr.mxu0 0.0
        %1207 = vmatpush1.msra.mxu0 0.0
        %1208 = vmatprep.subr.mxu0 0.0
        %1209 = vmatpush1.msra.mxu0 0.0
        %1210 = vmatprep.subr.mxu0 0.0
        %1211 = vmatpush1.msra.mxu0 0.0
        %1212 = vmatprep.subr.mxu0 0.0
        %1213 = vmatpush1.msra.mxu0 0.0
        %1214 = vmatprep.subr.mxu0 0.0
        %1215 = vmatpush1.msra.mxu0 0.0
        %1216 = vmatprep.subr.mxu0 0.0
        %1217 = vmatpush1.msra.mxu0 0.0
        %1218 = vmatprep.subr.mxu0 0.0
        %1219 = vmatpush1.msra.mxu0 0.0
        %1220 = vmatprep.subr.mxu0 0.0
        %1221 = vmatpush1.msra.mxu0 0.0
        %1222 = vmatprep.subr.mxu0 0.0
        %1223 = vmatpush1.msra.mxu0 0.0
        %1224 = vmatprep.subr.mxu0 0.0
        %1225 = vmatpush1.msra.mxu0 0.0
        %1226 = vmatprep.subr.mxu0 0.0
        %1227 = vmatpush1.msra.mxu0 0.0
        %1228 = vmatprep.subr.mxu0 0.0
        %1229 = vmatpush1.msra.mxu0 0.0
        %1230 = vmatprep.subr.mxu0 0.0
        %1231 = vmatpush1.msra.mxu0 0.0
        %1232 = vmatprep.subr.mxu0 0.0
        %1233 = vmatpush1.msra.mxu0 0.0
        %1234 = vmatprep.subr.mxu0 0.0
        %1235 = vmatpush1.msra.mxu0 0.0
        %1236 = vmatprep.subr.mxu0 0.0
        %1237 = vmatpush1.msra.mxu0 0.0
        %1238 = vmatprep.subr.mxu0 0.0
        %1239 = vmatpush1.msra.mxu0 0.0
        %1240 = vmatprep.subr.mxu0 0.0
        %1241 = vmatpush1.msra.mxu0 0.0
        %1242 = vmatprep.subr.mxu0 0.0
        %1243 = vmatpush1.msra.mxu0 0.0
        %1244 = vmatprep.subr.mxu0 0.0
        %1245 = vmatpush1.msra.mxu0 0.0
        %1246 = vmatprep.subr.mxu0 0.0
        %1247 = vmatpush1.msra.mxu0 0.0
        %1248 = vmatprep.subr.mxu0 0.0
        %1249 = vmatpush1.msra.mxu0 0.0
        %1250 = vmatprep.subr.mxu0 0.0
        %1251 = vmatpush1.msra.mxu0 0.0
        %1252 = vmatprep.subr.mxu0 0.0
        %1253 = vmatpush1.msra.mxu0 0.0
        %1254 = vmatprep.subr.mxu0 0.0
        %1255 = vmatpush1.msra.mxu0 0.0
        %1256 = vmatprep.subr.mxu0 0.0
        %1257 = vmatpush1.msra.mxu0 0.0
        %1258 = vmatprep.subr.mxu0 0.0
        %1259 = vmatpush1.msra.mxu0 0.0
        %1260 = vmatprep.subr.mxu0 0.0
        %1261 = vmatpush1.msra.mxu0 0.0
        %1262 = vmatprep.mubr.f32.mxu0 0.0
        %1263 = vmatmul.mubr.f32.gmra.mrb[0].mxu0 %v1196
        %v1264 = vpop.f32.mrb[0].mxu0
        %v1265 = vadd.f32 0.0, %v1264
        %v1266 = vpop.f32.mrb[0].mxu0
        %1267 = vdwg.mxu0
        %1268 = vrot.lane.b32.xlu0 %v771, 104
        %v1269 = vpop.permute.xlu0 %1268
        %1270 = vrot.lane.b32.xlu0 %v768, 72
        %v1271 = vpop.permute.xlu0 %1270
        %v1272 = vsel %vm775, %v1269, 0
        %v1274 = vsel %vm775, %v1271, 0
        %1276 = vmatprep.subr.mxu0 0.0
        %1277 = vmatpush1.xpose.msra.mxu0 %v1274
        %1278 = vmatprep.subr.mxu0 0.0
        %1279 = vmatpush1.xpose.msra.mxu0 0.0
        %1280 = vmatprep.subr.mxu0 0.0
        %1281 = vmatpush1.xpose.msra.mxu0 0.0
        %1282 = vmatprep.subr.mxu0 0.0
        %1283 = vmatpush1.xpose.msra.mxu0 0.0
        %1284 = vmatprep.subr.mxu0 0.0
        %1285 = vmatpush1.xpose.msra.mxu0 0.0
        %1286 = vmatprep.subr.mxu0 0.0
        %1287 = vmatpush1.xpose.msra.mxu0 0.0
        %1288 = vmatprep.subr.mxu0 0.0
        %1289 = vmatpush1.xpose.msra.mxu0 0.0
        %1290 = vmatprep.subr.mxu0 0.0
        %1291 = vmatpush1.xpose.msra.mxu0 0.0
        %1292 = vmatprep.subr.mxu0 0.0
        %1293 = vmatpush1.xpose.msra.mxu0 0.0
        %1294 = vmatprep.subr.mxu0 0.0
        %1295 = vmatpush1.xpose.msra.mxu0 0.0
        %1296 = vmatprep.subr.mxu0 0.0
        %1297 = vmatpush1.xpose.msra.mxu0 0.0
        %1298 = vmatprep.subr.mxu0 0.0
        %1299 = vmatpush1.xpose.msra.mxu0 0.0
        %1300 = vmatprep.subr.mxu0 0.0
        %1301 = vmatpush1.xpose.msra.mxu0 0.0
        %1302 = vmatprep.subr.mxu0 0.0
        %1303 = vmatpush1.xpose.msra.mxu0 0.0
        %1304 = vmatprep.subr.mxu0 0.0
        %1305 = vmatpush1.xpose.msra.mxu0 0.0
        %1306 = vmatprep.subr.mxu0 0.0
        %1307 = vmatpush1.xpose.msra.mxu0 0.0
        %1308 = vmatprep.subr.mxu0 0.0
        %1309 = vmatpush1.xpose.msra.mxu0 0.0
        %1310 = vmatprep.subr.mxu0 0.0
        %1311 = vmatpush1.xpose.msra.mxu0 0.0
        %1312 = vmatprep.subr.mxu0 0.0
        %1313 = vmatpush1.xpose.msra.mxu0 0.0
        %1314 = vmatprep.subr.mxu0 0.0
        %1315 = vmatpush1.xpose.msra.mxu0 0.0
        %1316 = vmatprep.subr.mxu0 0.0
        %1317 = vmatpush1.xpose.msra.mxu0 0.0
        %1318 = vmatprep.subr.mxu0 0.0
        %1319 = vmatpush1.xpose.msra.mxu0 0.0
        %1320 = vmatprep.subr.mxu0 0.0
        %1321 = vmatpush1.xpose.msra.mxu0 0.0
        %1322 = vmatprep.subr.mxu0 0.0
        %1323 = vmatpush1.xpose.msra.mxu0 0.0
        %1324 = vmatprep.subr.mxu0 0.0
        %1325 = vmatpush1.xpose.msra.mxu0 0.0
        %1326 = vmatprep.subr.mxu0 0.0
        %1327 = vmatpush1.xpose.msra.mxu0 0.0
        %1328 = vmatprep.subr.mxu0 0.0
        %1329 = vmatpush1.xpose.msra.mxu0 0.0
        %1330 = vmatprep.subr.mxu0 0.0
        %1331 = vmatpush1.xpose.msra.mxu0 0.0
        %1332 = vmatprep.subr.mxu0 0.0
        %1333 = vmatpush1.xpose.msra.mxu0 0.0
        %1334 = vmatprep.subr.mxu0 0.0
        %1335 = vmatpush1.xpose.msra.mxu0 0.0
        %1336 = vmatprep.subr.mxu0 0.0
        %1337 = vmatpush1.xpose.msra.mxu0 0.0
        %1338 = vmatprep.subr.mxu0 0.0
        %1339 = vmatpush1.xpose.msra.mxu0 0.0
        %1340 = vmatprep.mubr.f32.mxu0 0.0
        %1341 = vmatmul.mubr.f32.gmra.mrb[0].mxu0 %v1272
        %v1342 = vpop.f32.mrb[0].mxu0
        %v1343 = vadd.f32 0.0, %v1342
        %v1344 = vpop.f32.mrb[0].mxu0
        %1345 = vdwg.mxu0
        %v1346 = vsel %vm775, %v1343, -inf
        %1347 = vmax.xlane.f32.xlu0 %v1346
        %v1348 = vpop.xlane.xlu0 %1347
        %v1349 = vsub.f32 %v1343, %v1348
        %v1350 = vmul.f32 %v1349, 1.442695
        %v1351 = vpow.pop %v1350
        %v1352 = vsel %vm775, %v1351, 0.0
        %1353 = vadd.xlane.f32.xlu0 %v1352
        %v1354 = vpop.xlane.xlu0 %1353
        %v1355 = vrcp.pop %v1354
        %v1356 = vmul.f32 %v1351, %v1355
        %1357 = vrot.lane.b32.xlu0 %v768, 40
        %v1358 = vpop.permute.xlu0 %1357
        %v1361 = vsel %vm775, %v1356, 0
        %1363 = vmatprep.subr.mxu0 0.0
        %1364 = vmatpush1.msra.mxu0 %v1358
        %1365 = vmatprep.subr.mxu0 0.0
        %1366 = vmatpush1.msra.mxu0 0.0
        %1367 = vmatprep.subr.mxu0 0.0
        %1368 = vmatpush1.msra.mxu0 0.0
        %1369 = vmatprep.subr.mxu0 0.0
        %1370 = vmatpush1.msra.mxu0 0.0
        %1371 = vmatprep.subr.mxu0 0.0
        %1372 = vmatpush1.msra.mxu0 0.0
        %1373 = vmatprep.subr.mxu0 0.0
        %1374 = vmatpush1.msra.mxu0 0.0
        %1375 = vmatprep.subr.mxu0 0.0
        %1376 = vmatpush1.msra.mxu0 0.0
        %1377 = vmatprep.subr.mxu0 0.0
        %1378 = vmatpush1.msra.mxu0 0.0
        %1379 = vmatprep.subr.mxu0 0.0
        %1380 = vmatpush1.msra.mxu0 0.0
        %1381 = vmatprep.subr.mxu0 0.0
        %1382 = vmatpush1.msra.mxu0 0.0
        %1383 = vmatprep.subr.mxu0 0.0
        %1384 = vmatpush1.msra.mxu0 0.0
        %1385 = vmatprep.subr.mxu0 0.0
        %1386 = vmatpush1.msra.mxu0 0.0
        %1387 = vmatprep.subr.mxu0 0.0
        %1388 = vmatpush1.msra.mxu0 0.0
        %1389 = vmatprep.subr.mxu0 0.0
        %1390 = vmatpush1.msra.mxu0 0.0
        %1391 = vmatprep.subr.mxu0 0.0
        %1392 = vmatpush1.msra.mxu0 0.0
        %1393 = vmatprep.subr.mxu0 0.0
        %1394 = vmatpush1.msra.mxu0 0.0
        %1395 = vmatprep.subr.mxu0 0.0
        %1396 = vmatpush1.msra.mxu0 0.0
        %1397 = vmatprep.subr.mxu0 0.0
        %1398 = vmatpush1.msra.mxu0 0.0
        %1399 = vmatprep.subr.mxu0 0.0
        %1400 = vmatpush1.msra.mxu0 0.0
        %1401 = vmatprep.subr.mxu0 0.0
        %1402 = vmatpush1.msra.mxu0 0.0
        %1403 = vmatprep.subr.mxu0 0.0
        %1404 = vmatpush1.msra.mxu0 0.0
        %1405 = vmatprep.subr.mxu0 0.0
        %1406 = vmatpush1.msra.mxu0 0.0
        %1407 = vmatprep.subr.mxu0 0.0
        %1408 = vmatpush1.msra.mxu0 0.0
        %1409 = vmatprep.subr.mxu0 0.0
        %1410 = vmatpush1.msra.mxu0 0.0
        %1411 = vmatprep.subr.mxu0 0.0
        %1412 = vmatpush1.msra.mxu0 0.0
        %1413 = vmatprep.subr.mxu0 0.0
        %1414 = vmatpush1.msra.mxu0 0.0
        %1415 = vmatprep.subr.mxu0 0.0
        %1416 = vmatpush1.msra.mxu0 0.0
        %1417 = vmatprep.subr.mxu0 0.0
        %1418 = vmatpush1.msra.mxu0 0.0
        %1419 = vmatprep.subr.mxu0 0.0
        %1420 = vmatpush1.msra.mxu0 0.0
        %1421 = vmatprep.subr.mxu0 0.0
        %1422 = vmatpush1.msra.mxu0 0.0
        %1423 = vmatprep.subr.mxu0 0.0
        %1424 = vmatpush1.msra.mxu0 0.0
        %1425 = vmatprep.subr.mxu0 0.0
        %1426 = vmatpush1.msra.mxu0 0.0
        %1427 = vmatprep.mubr.f32.mxu0 0.0
        %1428 = vmatmul.mubr.f32.gmra.mrb[0].mxu0 %v1361
        %v1429 = vpop.f32.mrb[0].mxu0
        %v1430 = vadd.f32 0.0, %v1429
        %v1431 = vpop.f32.mrb[0].mxu0
        %1432 = vdwg.mxu0
        %1434 = vrot.lane.b32.xlu0 %v1100, 8
        %v1435 = vpop.permute.xlu0 %1434
        %1438 = vrot.lane.b32.xlu0 %v1265, 16
        %v1439 = vpop.permute.xlu0 %1438
        %1442 = vrot.lane.b32.xlu0 %v1430, 24
        %v1443 = vpop.permute.xlu0 %1442
        %v1445 = vsel %vm775, %v935, %v1435
        %vm1446 = vcmask 130048
        %v1447 = vsel %vm1446, %v1445, %v1439
        %vm1448 = vcmask 195584
        %v1449 = vsel %vm1448, %v1447, %v1443
        %v1450 = vld [vmem:[%s6] sm:$0xff]
        %v1451 = vld [vmem:[%s6 + $0x8] sm:$0xff]
        %v1452 = vld [vmem:[%s6 + $0x10] sm:$0xff]
        %v1453 = vld [vmem:[%s6 + $0x18] sm:$0xff]
        %v1455 = vsel %vm665, %v1449, 0
        %1457 = vmatprep.subr.mxu0 0.0
        %1458 = vmatpush1.msra.mxu0 %v1450
        %1459 = vmatprep.subr.mxu0 0.0
        %1460 = vmatpush1.msra.mxu0 %v1451
        %1461 = vmatprep.subr.mxu0 0.0
        %1462 = vmatpush1.msra.mxu0 %v1452
        %1463 = vmatprep.subr.mxu0 0.0
        %1464 = vmatpush1.msra.mxu0 %v1453
        %1465 = vmatprep.subr.mxu0 0.0
        %1466 = vmatpush1.msra.mxu0 0.0
        %1467 = vmatprep.subr.mxu0 0.0
        %1468 = vmatpush1.msra.mxu0 0.0
        %1469 = vmatprep.subr.mxu0 0.0
        %1470 = vmatpush1.msra.mxu0 0.0
        %1471 = vmatprep.subr.mxu0 0.0
        %1472 = vmatpush1.msra.mxu0 0.0
        %1473 = vmatprep.subr.mxu0 0.0
        %1474 = vmatpush1.msra.mxu0 0.0
        %1475 = vmatprep.subr.mxu0 0.0
        %1476 = vmatpush1.msra.mxu0 0.0
        %1477 = vmatprep.subr.mxu0 0.0
        %1478 = vmatpush1.msra.mxu0 0.0
        %1479 = vmatprep.subr.mxu0 0.0
        %1480 = vmatpush1.msra.mxu0 0.0
        %1481 = vmatprep.subr.mxu0 0.0
        %1482 = vmatpush1.msra.mxu0 0.0
        %1483 = vmatprep.subr.mxu0 0.0
        %1484 = vmatpush1.msra.mxu0 0.0
        %1485 = vmatprep.subr.mxu0 0.0
        %1486 = vmatpush1.msra.mxu0 0.0
        %1487 = vmatprep.subr.mxu0 0.0
        %1488 = vmatpush1.msra.mxu0 0.0
        %1489 = vmatprep.subr.mxu0 0.0
        %1490 = vmatpush1.msra.mxu0 0.0
        %1491 = vmatprep.subr.mxu0 0.0
        %1492 = vmatpush1.msra.mxu0 0.0
        %1493 = vmatprep.subr.mxu0 0.0
        %1494 = vmatpush1.msra.mxu0 0.0
        %1495 = vmatprep.subr.mxu0 0.0
        %1496 = vmatpush1.msra.mxu0 0.0
        %1497 = vmatprep.subr.mxu0 0.0
        %1498 = vmatpush1.msra.mxu0 0.0
        %1499 = vmatprep.subr.mxu0 0.0
        %1500 = vmatpush1.msra.mxu0 0.0
        %1501 = vmatprep.subr.mxu0 0.0
        %1502 = vmatpush1.msra.mxu0 0.0
        %1503 = vmatprep.subr.mxu0 0.0
        %1504 = vmatpush1.msra.mxu0 0.0
        %1505 = vmatprep.subr.mxu0 0.0
        %1506 = vmatpush1.msra.mxu0 0.0
        %1507 = vmatprep.subr.mxu0 0.0
        %1508 = vmatpush1.msra.mxu0 0.0
        %1509 = vmatprep.subr.mxu0 0.0
        %1510 = vmatpush1.msra.mxu0 0.0
        %1511 = vmatprep.subr.mxu0 0.0
        %1512 = vmatpush1.msra.mxu0 0.0
        %1513 = vmatprep.subr.mxu0 0.0
        %1514 = vmatpush1.msra.mxu0 0.0
        %1515 = vmatprep.subr.mxu0 0.0
        %1516 = vmatpush1.msra.mxu0 0.0
        %1517 = vmatprep.subr.mxu0 0.0
        %1518 = vmatpush1.msra.mxu0 0.0
        %1519 = vmatprep.subr.mxu0 0.0
        %1520 = vmatpush1.msra.mxu0 0.0
        %1521 = vmatprep.mubr.f32.mxu0 0.0
        %1522 = vmatmul.mubr.f32.gmra.mrb[0].mxu0 %v1455
        %v1523 = vpop.f32.mrb[0].mxu0
        %v1524 = vadd.f32 0.0, %v1523
        %v1525 = vpop.f32.mrb[0].mxu0
        %1526 = vdwg.mxu0
        %v1527 = vadd.f32 %v659, %v1524
        %v1528 = vld [vmem:[%s7] sm:$0x1]
        %v1530 = vlaneseq
        %v1531 = vshrl.u32 %v1530, 7
        %v1532 = vsub.s32 0, %v1531
        %v1533 = vrot.slane %v1528, %v1532
        %v1535 = vadd.f32 %v1527, %v1533
        %v1536 = vld [vmem:[%s8] sm:$0x1]
        %v1537 = vld [vmem:[%s9] sm:$0x1]
        %v1538 = vsel %vm665, %v1535, 0.0
        %1539 = vadd.xlane.f32.xlu0 %v1538
        %v1540 = vpop.xlane.xlu0 %1539
        %v1541 = vmul.f32 %v1540, %v669
        %v1542 = vsub.f32 %v1535, %v1541
        %v1543 = vmul.f32 %v1542, %v1542
        %v1544 = vsel %vm665, %v1543, 0.0
        %1545 = vadd.xlane.f32.xlu0 %v1544
        %v1546 = vpop.xlane.xlu0 %1545
        %v1547 = vmul.f32 %v1546, %v669
        %v1548 = vadd.f32 %v1547, 1e-05
        %v1549 = vrsqrt.pop %v1548
        %v1550 = vmul.f32 %v1542, %v1549
        %v1552 = vlaneseq
        %v1553 = vshrl.u32 %v1552, 7
        %v1554 = vsub.s32 0, %v1553
        %v1555 = vrot.slane %v1536, %v1554
        %v1557 = vmul.f32 %v1550, %v1555
        %v1559 = vlaneseq
        %v1560 = vshrl.u32 %v1559, 7
        %v1561 = vsub.s32 0, %v1560
        %v1562 = vrot.slane %v1537, %v1561
        %v1564 = vadd.f32 %v1557, %v1562
        %v1566 = vsel %vm775, %v1564, 0
        %v1569 = vsel %vm775, %v662, 0
        %1571 = vmatprep.subr.mxu0 0.0
        %1572 = vmatpush1.xpose.msra.mxu0 %v1569
        %1573 = vmatprep.subr.mxu0 0.0
        %1574 = vmatpush1.xpose.msra.mxu0 0.0
        %1575 = vmatprep.subr.mxu0 0.0
        %1576 = vmatpush1.xpose.msra.mxu0 0.0
        %1577 = vmatprep.subr.mxu0 0.0
        %1578 = vmatpush1.xpose.msra.mxu0 0.0
        %1579 = vmatprep.subr.mxu0 0.0
        %1580 = vmatpush1.xpose.msra.mxu0 0.0
        %1581 = vmatprep.subr.mxu0 0.0
        %1582 = vmatpush1.xpose.msra.mxu0 0.0
        %1583 = vmatprep.subr.mxu0 0.0
        %1584 = vmatpush1.xpose.msra.mxu0 0.0
        %1585 = vmatprep.subr.mxu0 0.0
        %1586 = vmatpush1.xpose.msra.mxu0 0.0
        %1587 = vmatprep.subr.mxu0 0.0
        %1588 = vmatpush1.xpose.msra.mxu0 0.0
        %1589 = vmatprep.subr.mxu0 0.0
        %1590 = vmatpush1.xpose.msra.mxu0 0.0
        %1591 = vmatprep.subr.mxu0 0.0
        %1592 = vmatpush1.xpose.msra.mxu0 0.0
        %1593 = vmatprep.subr.mxu0 0.0
        %1594 = vmatpush1.xpose.msra.mxu0 0.0
        %1595 = vmatprep.subr.mxu0 0.0
        %1596 = vmatpush1.xpose.msra.mxu0 0.0
        %1597 = vmatprep.subr.mxu0 0.0
        %1598 = vmatpush1.xpose.msra.mxu0 0.0
        %1599 = vmatprep.subr.mxu0 0.0
        %1600 = vmatpush1.xpose.msra.mxu0 0.0
        %1601 = vmatprep.subr.mxu0 0.0
        %1602 = vmatpush1.xpose.msra.mxu0 0.0
        %1603 = vmatprep.subr.mxu0 0.0
        %1604 = vmatpush1.xpose.msra.mxu0 0.0
        %1605 = vmatprep.subr.mxu0 0.0
        %1606 = vmatpush1.xpose.msra.mxu0 0.0
        %1607 = vmatprep.subr.mxu0 0.0
        %1608 = vmatpush1.xpose.msra.mxu0 0.0
        %1609 = vmatprep.subr.mxu0 0.0
        %1610 = vmatpush1.xpose.msra.mxu0 0.0
        %1611 = vmatprep.subr.mxu0 0.0
        %1612 = vmatpush1.xpose.msra.mxu0 0.0
        %1613 = vmatprep.subr.mxu0 0.0
        %1614 = vmatpush1.xpose.msra.mxu0 0.0
        %1615 = vmatprep.subr.mxu0 0.0
        %1616 = vmatpush1.xpose.msra.mxu0 0.0
        %1617 = vmatprep.subr.mxu0 0.0
        %1618 = vmatpush1.xpose.msra.mxu0 0.0
        %1619 = vmatprep.subr.mxu0 0.0
        %1620 = vmatpush1.xpose.msra.mxu0 0.0
        %1621 = vmatprep.subr.mxu0 0.0
        %1622 = vmatpush1.xpose.msra.mxu0 0.0
        %1623 = vmatprep.subr.mxu0 0.0
        %1624 = vmatpush1.xpose.msra.mxu0 0.0
        %1625 = vmatprep.subr.mxu0 0.0
        %1626 = vmatpush1.xpose.msra.mxu0 0.0
        %1627 = vmatprep.subr.mxu0 0.0
        %1628 = vmatpush1.xpose.msra.mxu0 0.0
        %1629 = vmatprep.subr.mxu0 0.0
        %1630 = vmatpush1.xpose.msra.mxu0 0.0
        %1631 = vmatprep.subr.mxu0 0.0
        %1632 = vmatpush1.xpose.msra.mxu0 0.0
        %1633 = vmatprep.subr.mxu0 0.0
        %1634 = vmatpush1.xpose.msra.mxu0 0.0
        %1635 = vmatprep.mubr.f32.mxu0 0.0
        %1636 = vmatmul.mubr.f32.gmra.mrb[0].mxu0 %v1566
        %v1637 = vpop.f32.mrb[0].mxu0
        %v1638 = vadd.f32 0.0, %v1637
        %v1639 = vpop.f32.mrb[0].mxu0
        %1640 = vdwg.mxu0
        %v1641 = vsel %vm775, %v1638, -inf
        %1642 = vmax.xlane.f32.xlu0 %v1641
        %v1643 = vpop.xlane.xlu0 %1642
        %v1644 = vsub.f32 %v1638, %v1643
        %v1645 = vmul.f32 %v1644, 1.442695
        %v1646 = vpow.pop %v1645
        %v1647 = vsel %vm775, %v1646, 0.0
        %1648 = vadd.xlane.f32.xlu0 %v1647
        %v1649 = vpop.xlane.xlu0 %1648
        %v1650 = vrcp.pop %v1649
        %v1651 = vmul.f32 %v1646, %v1650
        %v1653 = vsel %vm775, %v1651, 0
        %1655 = vmatprep.subr.mxu0 0.0
        %1656 = vmatpush1.msra.mxu0 %v661
        %1657 = vmatprep.subr.mxu0 0.0
        %1658 = vmatpush1.msra.mxu0 0.0
        %1659 = vmatprep.subr.mxu0 0.0
        %1660 = vmatpush1.msra.mxu0 0.0
        %1661 = vmatprep.subr.mxu0 0.0
        %1662 = vmatpush1.msra.mxu0 0.0
        %1663 = vmatprep.subr.mxu0 0.0
        %1664 = vmatpush1.msra.mxu0 0.0
        %1665 = vmatprep.subr.mxu0 0.0
        %1666 = vmatpush1.msra.mxu0 0.0
        %1667 = vmatprep.subr.mxu0 0.0
        %1668 = vmatpush1.msra.mxu0 0.0
        %1669 = vmatprep.subr.mxu0 0.0
        %1670 = vmatpush1.msra.mxu0 0.0
        %1671 = vmatprep.subr.mxu0 0.0
        %1672 = vmatpush1.msra.mxu0 0.0
        %1673 = vmatprep.subr.mxu0 0.0
        %1674 = vmatpush1.msra.mxu0 0.0
        %1675 = vmatprep.subr.mxu0 0.0
        %1676 = vmatpush1.msra.mxu0 0.0
        %1677 = vmatprep.subr.mxu0 0.0
        %1678 = vmatpush1.msra.mxu0 0.0
        %1679 = vmatprep.subr.mxu0 0.0
        %1680 = vmatpush1.msra.mxu0 0.0
        %1681 = vmatprep.subr.mxu0 0.0
        %1682 = vmatpush1.msra.mxu0 0.0
        %1683 = vmatprep.subr.mxu0 0.0
        %1684 = vmatpush1.msra.mxu0 0.0
        %1685 = vmatprep.subr.mxu0 0.0
        %1686 = vmatpush1.msra.mxu0 0.0
        %1687 = vmatprep.subr.mxu0 0.0
        %1688 = vmatpush1.msra.mxu0 0.0
        %1689 = vmatprep.subr.mxu0 0.0
        %1690 = vmatpush1.msra.mxu0 0.0
        %1691 = vmatprep.subr.mxu0 0.0
        %1692 = vmatpush1.msra.mxu0 0.0
        %1693 = vmatprep.subr.mxu0 0.0
        %1694 = vmatpush1.msra.mxu0 0.0
        %1695 = vmatprep.subr.mxu0 0.0
        %1696 = vmatpush1.msra.mxu0 0.0
        %1697 = vmatprep.subr.mxu0 0.0
        %1698 = vmatpush1.msra.mxu0 0.0
        %1699 = vmatprep.subr.mxu0 0.0
        %1700 = vmatpush1.msra.mxu0 0.0
        %1701 = vmatprep.subr.mxu0 0.0
        %1702 = vmatpush1.msra.mxu0 0.0
        %1703 = vmatprep.subr.mxu0 0.0
        %1704 = vmatpush1.msra.mxu0 0.0
        %1705 = vmatprep.subr.mxu0 0.0
        %1706 = vmatpush1.msra.mxu0 0.0
        %1707 = vmatprep.subr.mxu0 0.0
        %1708 = vmatpush1.msra.mxu0 0.0
        %1709 = vmatprep.subr.mxu0 0.0
        %1710 = vmatpush1.msra.mxu0 0.0
        %1711 = vmatprep.subr.mxu0 0.0
        %1712 = vmatpush1.msra.mxu0 0.0
        %1713 = vmatprep.subr.mxu0 0.0
        %1714 = vmatpush1.msra.mxu0 0.0
        %1715 = vmatprep.subr.mxu0 0.0
        %1716 = vmatpush1.msra.mxu0 0.0
        %1717 = vmatprep.subr.mxu0 0.0
        %1718 = vmatpush1.msra.mxu0 0.0
        %1719 = vmatprep.mubr.f32.mxu0 0.0
        %1720 = vmatmul.mubr.f32.gmra.mrb[0].mxu0 %v1653
        %v1721 = vpop.f32.mrb[0].mxu0
        %v1722 = vadd.f32 0.0, %v1721
        %v1723 = vpop.f32.mrb[0].mxu0
        %1724 = vdwg.mxu0
        %1725 = vrot.lane.b32.xlu0 %v1564, 120
        %v1726 = vpop.permute.xlu0 %1725
        %1727 = vrot.lane.b32.xlu0 %v662, 120
        %v1728 = vpop.permute.xlu0 %1727
        %v1729 = vsel %vm775, %v1726, 0
        %v1731 = vsel %vm775, %v1728, 0
        %1733 = vmatprep.subr.mxu0 0.0
        %1734 = vmatpush1.xpose.msra.mxu0 %v1731
        %1735 = vmatprep.subr.mxu0 0.0
        %1736 = vmatpush1.xpose.msra.mxu0 0.0
        %1737 = vmatprep.subr.mxu0 0.0
        %1738 = vmatpush1.xpose.msra.mxu0 0.0
        %1739 = vmatprep.subr.mxu0 0.0
        %1740 = vmatpush1.xpose.msra.mxu0 0.0
        %1741 = vmatprep.subr.mxu0 0.0
        %1742 = vmatpush1.xpose.msra.mxu0 0.0
        %1743 = vmatprep.subr.mxu0 0.0
        %1744 = vmatpush1.xpose.msra.mxu0 0.0
        %1745 = vmatprep.subr.mxu0 0.0
        %1746 = vmatpush1.xpose.msra.mxu0 0.0
        %1747 = vmatprep.subr.mxu0 0.0
        %1748 = vmatpush1.xpose.msra.mxu0 0.0
        %1749 = vmatprep.subr.mxu0 0.0
        %1750 = vmatpush1.xpose.msra.mxu0 0.0
        %1751 = vmatprep.subr.mxu0 0.0
        %1752 = vmatpush1.xpose.msra.mxu0 0.0
        %1753 = vmatprep.subr.mxu0 0.0
        %1754 = vmatpush1.xpose.msra.mxu0 0.0
        %1755 = vmatprep.subr.mxu0 0.0
        %1756 = vmatpush1.xpose.msra.mxu0 0.0
        %1757 = vmatprep.subr.mxu0 0.0
        %1758 = vmatpush1.xpose.msra.mxu0 0.0
        %1759 = vmatprep.subr.mxu0 0.0
        %1760 = vmatpush1.xpose.msra.mxu0 0.0
        %1761 = vmatprep.subr.mxu0 0.0
        %1762 = vmatpush1.xpose.msra.mxu0 0.0
        %1763 = vmatprep.subr.mxu0 0.0
        %1764 = vmatpush1.xpose.msra.mxu0 0.0
        %1765 = vmatprep.subr.mxu0 0.0
        %1766 = vmatpush1.xpose.msra.mxu0 0.0
        %1767 = vmatprep.subr.mxu0 0.0
        %1768 = vmatpush1.xpose.msra.mxu0 0.0
        %1769 = vmatprep.subr.mxu0 0.0
        %1770 = vmatpush1.xpose.msra.mxu0 0.0
        %1771 = vmatprep.subr.mxu0 0.0
        %1772 = vmatpush1.xpose.msra.mxu0 0.0
        %1773 = vmatprep.subr.mxu0 0.0
        %1774 = vmatpush1.xpose.msra.mxu0 0.0
        %1775 = vmatprep.subr.mxu0 0.0
        %1776 = vmatpush1.xpose.msra.mxu0 0.0
        %1777 = vmatprep.subr.mxu0 0.0
        %1778 = vmatpush1.xpose.msra.mxu0 0.0
        %1779 = vmatprep.subr.mxu0 0.0
        %1780 = vmatpush1.xpose.msra.mxu0 0.0
        %1781 = vmatprep.subr.mxu0 0.0
        %1782 = vmatpush1.xpose.msra.mxu0 0.0
        %1783 = vmatprep.subr.mxu0 0.0
        %1784 = vmatpush1.xpose.msra.mxu0 0.0
        %1785 = vmatprep.subr.mxu0 0.0
        %1786 = vmatpush1.xpose.msra.mxu0 0.0
        %1787 = vmatprep.subr.mxu0 0.0
        %1788 = vmatpush1.xpose.msra.mxu0 0.0
        %1789 = vmatprep.subr.mxu0 0.0
        %1790 = vmatpush1.xpose.msra.mxu0 0.0
        %1791 = vmatprep.subr.mxu0 0.0
        %1792 = vmatpush1.xpose.msra.mxu0 0.0
        %1793 = vmatprep.subr.mxu0 0.0
        %1794 = vmatpush1.xpose.msra.mxu0 0.0
        %1795 = vmatprep.subr.mxu0 0.0
        %1796 = vmatpush1.xpose.msra.mxu0 0.0
        %1797 = vmatprep.mubr.f32.mxu0 0.0
        %1798 = vmatmul.mubr.f32.gmra.mrb[0].mxu0 %v1729
        %v1799 = vpop.f32.mrb[0].mxu0
        %v1800 = vadd.f32 0.0, %v1799
        %v1801 = vpop.f32.mrb[0].mxu0
        %1802 = vdwg.mxu0
        %v1803 = vsel %vm775, %v1800, -inf
        %1804 = vmax.xlane.f32.xlu0 %v1803
        %v1805 = vpop.xlane.xlu0 %1804
        %v1806 = vsub.f32 %v1800, %v1805
        %v1807 = vmul.f32 %v1806, 1.442695
        %v1808 = vpow.pop %v1807
        %v1809 = vsel %vm775, %v1808, 0.0
        %1810 = vadd.xlane.f32.xlu0 %v1809
        %v1811 = vpop.xlane.xlu0 %1810
        %v1812 = vrcp.pop %v1811
        %v1813 = vmul.f32 %v1808, %v1812
        %1815 = vrot.lane.b32.xlu0 %v661, 120
        %v1816 = vpop.permute.xlu0 %1815
        %v1819 = vsel %vm775, %v1813, 0
        %1821 = vmatprep.subr.mxu0 0.0
        %1822 = vmatpush1.msra.mxu0 %v1816
        %1823 = vmatprep.subr.mxu0 0.0
        %1824 = vmatpush1.msra.mxu0 0.0
        %1825 = vmatprep.subr.mxu0 0.0
        %1826 = vmatpush1.msra.mxu0 0.0
        %1827 = vmatprep.subr.mxu0 0.0
        %1828 = vmatpush1.msra.mxu0 0.0
        %1829 = vmatprep.subr.mxu0 0.0
        %1830 = vmatpush1.msra.mxu0 0.0
        %1831 = vmatprep.subr.mxu0 0.0
        %1832 = vmatpush1.msra.mxu0 0.0
        %1833 = vmatprep.subr.mxu0 0.0
        %1834 = vmatpush1.msra.mxu0 0.0
        %1835 = vmatprep.subr.mxu0 0.0
        %1836 = vmatpush1.msra.mxu0 0.0
        %1837 = vmatprep.subr.mxu0 0.0
        %1838 = vmatpush1.msra.mxu0 0.0
        %1839 = vmatprep.subr.mxu0 0.0
        %1840 = vmatpush1.msra.mxu0 0.0
        %1841 = vmatprep.subr.mxu0 0.0
        %1842 = vmatpush1.msra.mxu0 0.0
        %1843 = vmatprep.subr.mxu0 0.0
        %1844 = vmatpush1.msra.mxu0 0.0
        %1845 = vmatprep.subr.mxu0 0.0
        %1846 = vmatpush1.msra.mxu0 0.0
        %1847 = vmatprep.subr.mxu0 0.0
        %1848 = vmatpush1.msra.mxu0 0.0
        %1849 = vmatprep.subr.mxu0 0.0
        %1850 = vmatpush1.msra.mxu0 0.0
        %1851 = vmatprep.subr.mxu0 0.0
        %1852 = vmatpush1.msra.mxu0 0.0
        %1853 = vmatprep.subr.mxu0 0.0
        %1854 = vmatpush1.msra.mxu0 0.0
        %1855 = vmatprep.subr.mxu0 0.0
        %1856 = vmatpush1.msra.mxu0 0.0
        %1857 = vmatprep.subr.mxu0 0.0
        %1858 = vmatpush1.msra.mxu0 0.0
        %1859 = vmatprep.subr.mxu0 0.0
        %1860 = vmatpush1.msra.mxu0 0.0
        %1861 = vmatprep.subr.mxu0 0.0
        %1862 = vmatpush1.msra.mxu0 0.0
        %1863 = vmatprep.subr.mxu0 0.0
        %1864 = vmatpush1.msra.mxu0 0.0
        %1865 = vmatprep.subr.mxu0 0.0
        %1866 = vmatpush1.msra.mxu0 0.0
        %1867 = vmatprep.subr.mxu0 0.0
        %1868 = vmatpush1.msra.mxu0 0.0
        %1869 = vmatprep.subr.mxu0 0.0
        %1870 = vmatpush1.msra.mxu0 0.0
        %1871 = vmatprep.subr.mxu0 0.0
        %1872 = vmatpush1.msra.mxu0 0.0
        %1873 = vmatprep.subr.mxu0 0.0
        %1874 = vmatpush1.msra.mxu0 0.0
        %1875 = vmatprep.subr.mxu0 0.0
        %1876 = vmatpush1.msra.mxu0 0.0
        %1877 = vmatprep.subr.mxu0 0.0
        %1878 = vmatpush1.msra.mxu0 0.0
        %1879 = vmatprep.subr.mxu0 0.0
        %1880 = vmatpush1.msra.mxu0 0.0
        %1881 = vmatprep.subr.mxu0 0.0
        %1882 = vmatpush1.msra.mxu0 0.0
        %1883 = vmatprep.subr.mxu0 0.0
        %1884 = vmatpush1.msra.mxu0 0.0
        %1885 = vmatprep.mubr.f32.mxu0 0.0
        %1886 = vmatmul.mubr.f32.gmra.mrb[0].mxu0 %v1819
        %v1887 = vpop.f32.mrb[0].mxu0
        %v1888 = vadd.f32 0.0, %v1887
        %v1889 = vpop.f32.mrb[0].mxu0
        %1890 = vdwg.mxu0
        %1891 = vrot.lane.b32.xlu0 %v1564, 112
        %v1892 = vpop.permute.xlu0 %1891
        %1893 = vrot.lane.b32.xlu0 %v662, 112
        %v1894 = vpop.permute.xlu0 %1893
        %v1895 = vsel %vm775, %v1892, 0
        %v1897 = vsel %vm775, %v1894, 0
        %1899 = vmatprep.subr.mxu0 0.0
        %1900 = vmatpush1.xpose.msra.mxu0 %v1897
        %1901 = vmatprep.subr.mxu0 0.0
        %1902 = vmatpush1.xpose.msra.mxu0 0.0
        %1903 = vmatprep.subr.mxu0 0.0
        %1904 = vmatpush1.xpose.msra.mxu0 0.0
        %1905 = vmatprep.subr.mxu0 0.0
        %1906 = vmatpush1.xpose.msra.mxu0 0.0
        %1907 = vmatprep.subr.mxu0 0.0
        %1908 = vmatpush1.xpose.msra.mxu0 0.0
        %1909 = vmatprep.subr.mxu0 0.0
        %1910 = vmatpush1.xpose.msra.mxu0 0.0
        %1911 = vmatprep.subr.mxu0 0.0
        %1912 = vmatpush1.xpose.msra.mxu0 0.0
        %1913 = vmatprep.subr.mxu0 0.0
        %1914 = vmatpush1.xpose.msra.mxu0 0.0
        %1915 = vmatprep.subr.mxu0 0.0
        %1916 = vmatpush1.xpose.msra.mxu0 0.0
        %1917 = vmatprep.subr.mxu0 0.0
        %1918 = vmatpush1.xpose.msra.mxu0 0.0
        %1919 = vmatprep.subr.mxu0 0.0
        %1920 = vmatpush1.xpose.msra.mxu0 0.0
        %1921 = vmatprep.subr.mxu0 0.0
        %1922 = vmatpush1.xpose.msra.mxu0 0.0
        %1923 = vmatprep.subr.mxu0 0.0
        %1924 = vmatpush1.xpose.msra.mxu0 0.0
        %1925 = vmatprep.subr.mxu0 0.0
        %1926 = vmatpush1.xpose.msra.mxu0 0.0
        %1927 = vmatprep.subr.mxu0 0.0
        %1928 = vmatpush1.xpose.msra.mxu0 0.0
        %1929 = vmatprep.subr.mxu0 0.0
        %1930 = vmatpush1.xpose.msra.mxu0 0.0
        %1931 = vmatprep.subr.mxu0 0.0
        %1932 = vmatpush1.xpose.msra.mxu0 0.0
        %1933 = vmatprep.subr.mxu0 0.0
        %1934 = vmatpush1.xpose.msra.mxu0 0.0
        %1935 = vmatprep.subr.mxu0 0.0
        %1936 = vmatpush1.xpose.msra.mxu0 0.0
        %1937 = vmatprep.subr.mxu0 0.0
        %1938 = vmatpush1.xpose.msra.mxu0 0.0
        %1939 = vmatprep.subr.mxu0 0.0
        %1940 = vmatpush1.xpose.msra.mxu0 0.0
        %1941 = vmatprep.subr.mxu0 0.0
        %1942 = vmatpush1.xpose.msra.mxu0 0.0
        %1943 = vmatprep.subr.mxu0 0.0
        %1944 = vmatpush1.xpose.msra.mxu0 0.0
        %1945 = vmatprep.subr.mxu0 0.0
        %1946 = vmatpush1.xpose.msra.mxu0 0.0
        %1947 = vmatprep.subr.mxu0 0.0
        %1948 = vmatpush1.xpose.msra.mxu0 0.0
        %1949 = vmatprep.subr.mxu0 0.0
        %1950 = vmatpush1.xpose.msra.mxu0 0.0
        %1951 = vmatprep.subr.mxu0 0.0
        %1952 = vmatpush1.xpose.msra.mxu0 0.0
        %1953 = vmatprep.subr.mxu0 0.0
        %1954 = vmatpush1.xpose.msra.mxu0 0.0
        %1955 = vmatprep.subr.mxu0 0.0
        %1956 = vmatpush1.xpose.msra.mxu0 0.0
        %1957 = vmatprep.subr.mxu0 0.0
        %1958 = vmatpush1.xpose.msra.mxu0 0.0
        %1959 = vmatprep.subr.mxu0 0.0
        %1960 = vmatpush1.xpose.msra.mxu0 0.0
        %1961 = vmatprep.subr.mxu0 0.0
        %1962 = vmatpush1.xpose.msra.mxu0 0.0
        %1963 = vmatprep.mubr.f32.mxu0 0.0
        %1964 = vmatmul.mubr.f32.gmra.mrb[0].mxu0 %v1895
        %v1965 = vpop.f32.mrb[0].mxu0
        %v1966 = vadd.f32 0.0, %v1965
        %v1967 = vpop.f32.mrb[0].mxu0
        %1968 = vdwg.mxu0
        %v1969 = vsel %vm775, %v1966, -inf
        %1970 = vmax.xlane.f32.xlu0 %v1969
        %v1971 = vpop.xlane.xlu0 %1970
        %v1972 = vsub.f32 %v1966, %v1971
        %v1973 = vmul.f32 %v1972, 1.442695
        %v1974 = vpow.pop %v1973
        %v1975 = vsel %vm775, %v1974, 0.0
        %1976 = vadd.xlane.f32.xlu0 %v1975
        %v1977 = vpop.xlane.xlu0 %1976
        %v1978 = vrcp.pop %v1977
        %v1979 = vmul.f32 %v1974, %v1978
        %1980 = vrot.lane.b32.xlu0 %v661, 112
        %v1981 = vpop.permute.xlu0 %1980
        %v1984 = vsel %vm775, %v1979, 0
        %1986 = vmatprep.subr.mxu0 0.0
        %1987 = vmatpush1.msra.mxu0 %v1981
        %1988 = vmatprep.subr.mxu0 0.0
        %1989 = vmatpush1.msra.mxu0 0.0
        %1990 = vmatprep.subr.mxu0 0.0
        %1991 = vmatpush1.msra.mxu0 0.0
        %1992 = vmatprep.subr.mxu0 0.0
        %1993 = vmatpush1.msra.mxu0 0.0
        %1994 = vmatprep.subr.mxu0 0.0
        %1995 = vmatpush1.msra.mxu0 0.0
        %1996 = vmatprep.subr.mxu0 0.0
        %1997 = vmatpush1.msra.mxu0 0.0
        %1998 = vmatprep.subr.mxu0 0.0
        %1999 = vmatpush1.msra.mxu0 0.0
        %2000 = vmatprep.subr.mxu0 0.0
        %2001 = vmatpush1.msra.mxu0 0.0
        %2002 = vmatprep.subr.mxu0 0.0
        %2003 = vmatpush1.msra.mxu0 0.0
        %2004 = vmatprep.subr.mxu0 0.0
        %2005 = vmatpush1.msra.mxu0 0.0
        %2006 = vmatprep.subr.mxu0 0.0
        %2007 = vmatpush1.msra.mxu0 0.0
        %2008 = vmatprep.subr.mxu0 0.0
        %2009 = vmatpush1.msra.mxu0 0.0
        %2010 = vmatprep.subr.mxu0 0.0
        %2011 = vmatpush1.msra.mxu0 0.0
        %2012 = vmatprep.subr.mxu0 0.0
        %2013 = vmatpush1.msra.mxu0 0.0
        %2014 = vmatprep.subr.mxu0 0.0
        %2015 = vmatpush1.msra.mxu0 0.0
        %2016 = vmatprep.subr.mxu0 0.0
        %2017 = vmatpush1.msra.mxu0 0.0
        %2018 = vmatprep.subr.mxu0 0.0
        %2019 = vmatpush1.msra.mxu0 0.0
        %2020 = vmatprep.subr.mxu0 0.0
        %2021 = vmatpush1.msra.mxu0 0.0
        %2022 = vmatprep.subr.mxu0 0.0
        %2023 = vmatpush1.msra.mxu0 0.0
        %2024 = vmatprep.subr.mxu0 0.0
        %2025 = vmatpush1.msra.mxu0 0.0
        %2026 = vmatprep.subr.mxu0 0.0
        %2027 = vmatpush1.msra.mxu0 0.0
        %2028 = vmatprep.subr.mxu0 0.0
        %2029 = vmatpush1.msra.mxu0 0.0
        %2030 = vmatprep.subr.mxu0 0.0
        %2031 = vmatpush1.msra.mxu0 0.0
        %2032 = vmatprep.subr.mxu0 0.0
        %2033 = vmatpush1.msra.mxu0 0.0
        %2034 = vmatprep.subr.mxu0 0.0
        %2035 = vmatpush1.msra.mxu0 0.0
        %2036 = vmatprep.subr.mxu0 0.0
        %2037 = vmatpush1.msra.mxu0 0.0
        %2038 = vmatprep.subr.mxu0 0.0
        %2039 = vmatpush1.msra.mxu0 0.0
        %2040 = vmatprep.subr.mxu0 0.0
        %2041 = vmatpush1.msra.mxu0 0.0
        %2042 = vmatprep.subr.mxu0 0.0
        %2043 = vmatpush1.msra.mxu0 0.0
        %2044 = vmatprep.subr.mxu0 0.0
        %2045 = vmatpush1.msra.mxu0 0.0
        %2046 = vmatprep.subr.mxu0 0.0
        %2047 = vmatpush1.msra.mxu0 0.0
        %2048 = vmatprep.subr.mxu0 0.0
        %2049 = vmatpush1.msra.mxu0 0.0
        %2050 = vmatprep.mubr.f32.mxu0 0.0
        %2051 = vmatmul.mubr.f32.gmra.mrb[0].mxu0 %v1984
        %v2052 = vpop.f32.mrb[0].mxu0
        %v2053 = vadd.f32 0.0, %v2052
        %v2054 = vpop.f32.mrb[0].mxu0
        %2055 = vdwg.mxu0
        %2056 = vrot.lane.b32.xlu0 %v1564, 104
        %v2057 = vpop.permute.xlu0 %2056
        %2058 = vrot.lane.b32.xlu0 %v662, 104
        %v2059 = vpop.permute.xlu0 %2058
        %v2060 = vsel %vm775, %v2057, 0
        %v2062 = vsel %vm775, %v2059, 0
        %2064 = vmatprep.subr.mxu0 0.0
        %2065 = vmatpush1.xpose.msra.mxu0 %v2062
        %2066 = vmatprep.subr.mxu0 0.0
        %2067 = vmatpush1.xpose.msra.mxu0 0.0
        %2068 = vmatprep.subr.mxu0 0.0
        %2069 = vmatpush1.xpose.msra.mxu0 0.0
        %2070 = vmatprep.subr.mxu0 0.0
        %2071 = vmatpush1.xpose.msra.mxu0 0.0
        %2072 = vmatprep.subr.mxu0 0.0
        %2073 = vmatpush1.xpose.msra.mxu0 0.0
        %2074 = vmatprep.subr.mxu0 0.0
        %2075 = vmatpush1.xpose.msra.mxu0 0.0
        %2076 = vmatprep.subr.mxu0 0.0
        %2077 = vmatpush1.xpose.msra.mxu0 0.0
        %2078 = vmatprep.subr.mxu0 0.0
        %2079 = vmatpush1.xpose.msra.mxu0 0.0
        %2080 = vmatprep.subr.mxu0 0.0
        %2081 = vmatpush1.xpose.msra.mxu0 0.0
        %2082 = vmatprep.subr.mxu0 0.0
        %2083 = vmatpush1.xpose.msra.mxu0 0.0
        %2084 = vmatprep.subr.mxu0 0.0
        %2085 = vmatpush1.xpose.msra.mxu0 0.0
        %2086 = vmatprep.subr.mxu0 0.0
        %2087 = vmatpush1.xpose.msra.mxu0 0.0
        %2088 = vmatprep.subr.mxu0 0.0
        %2089 = vmatpush1.xpose.msra.mxu0 0.0
        %2090 = vmatprep.subr.mxu0 0.0
        %2091 = vmatpush1.xpose.msra.mxu0 0.0
        %2092 = vmatprep.subr.mxu0 0.0
        %2093 = vmatpush1.xpose.msra.mxu0 0.0
        %2094 = vmatprep.subr.mxu0 0.0
        %2095 = vmatpush1.xpose.msra.mxu0 0.0
        %2096 = vmatprep.subr.mxu0 0.0
        %2097 = vmatpush1.xpose.msra.mxu0 0.0
        %2098 = vmatprep.subr.mxu0 0.0
        %2099 = vmatpush1.xpose.msra.mxu0 0.0
        %2100 = vmatprep.subr.mxu0 0.0
        %2101 = vmatpush1.xpose.msra.mxu0 0.0
        %2102 = vmatprep.subr.mxu0 0.0
        %2103 = vmatpush1.xpose.msra.mxu0 0.0
        %2104 = vmatprep.subr.mxu0 0.0
        %2105 = vmatpush1.xpose.msra.mxu0 0.0
        %2106 = vmatprep.subr.mxu0 0.0
        %2107 = vmatpush1.xpose.msra.mxu0 0.0
        %2108 = vmatprep.subr.mxu0 0.0
        %2109 = vmatpush1.xpose.msra.mxu0 0.0
        %2110 = vmatprep.subr.mxu0 0.0
        %2111 = vmatpush1.xpose.msra.mxu0 0.0
        %2112 = vmatprep.subr.mxu0 0.0
        %2113 = vmatpush1.xpose.msra.mxu0 0.0
        %2114 = vmatprep.subr.mxu0 0.0
        %2115 = vmatpush1.xpose.msra.mxu0 0.0
        %2116 = vmatprep.subr.mxu0 0.0
        %2117 = vmatpush1.xpose.msra.mxu0 0.0
        %2118 = vmatprep.subr.mxu0 0.0
        %2119 = vmatpush1.xpose.msra.mxu0 0.0
        %2120 = vmatprep.subr.mxu0 0.0
        %2121 = vmatpush1.xpose.msra.mxu0 0.0
        %2122 = vmatprep.subr.mxu0 0.0
        %2123 = vmatpush1.xpose.msra.mxu0 0.0
        %2124 = vmatprep.subr.mxu0 0.0
        %2125 = vmatpush1.xpose.msra.mxu0 0.0
        %2126 = vmatprep.subr.mxu0 0.0
        %2127 = vmatpush1.xpose.msra.mxu0 0.0
        %2128 = vmatprep.mubr.f32.mxu0 0.0
        %2129 = vmatmul.mubr.f32.gmra.mrb[0].mxu0 %v2060
        %v2130 = vpop.f32.mrb[0].mxu0
        %v2131 = vadd.f32 0.0, %v2130
        %v2132 = vpop.f32.mrb[0].mxu0
        %2133 = vdwg.mxu0
        %v2134 = vsel %vm775, %v2131, -inf
        %2135 = vmax.xlane.f32.xlu0 %v2134
        %v2136 = vpop.xlane.xlu0 %2135
        %v2137 = vsub.f32 %v2131, %v2136
        %v2138 = vmul.f32 %v2137, 1.442695
        %v2139 = vpow.pop %v2138
        %v2140 = vsel %vm775, %v2139, 0.0
        %2141 = vadd.xlane.f32.xlu0 %v2140
        %v2142 = vpop.xlane.xlu0 %2141
        %v2143 = vrcp.pop %v2142
        %v2144 = vmul.f32 %v2139, %v2143
        %2145 = vrot.lane.b32.xlu0 %v661, 104
        %v2146 = vpop.permute.xlu0 %2145
        %v2149 = vsel %vm775, %v2144, 0
        %2151 = vmatprep.subr.mxu0 0.0
        %2152 = vmatpush1.msra.mxu0 %v2146
        %2153 = vmatprep.subr.mxu0 0.0
        %2154 = vmatpush1.msra.mxu0 0.0
        %2155 = vmatprep.subr.mxu0 0.0
        %2156 = vmatpush1.msra.mxu0 0.0
        %2157 = vmatprep.subr.mxu0 0.0
        %2158 = vmatpush1.msra.mxu0 0.0
        %2159 = vmatprep.subr.mxu0 0.0
        %2160 = vmatpush1.msra.mxu0 0.0
        %2161 = vmatprep.subr.mxu0 0.0
        %2162 = vmatpush1.msra.mxu0 0.0
        %2163 = vmatprep.subr.mxu0 0.0
        %2164 = vmatpush1.msra.mxu0 0.0
        %2165 = vmatprep.subr.mxu0 0.0
        %2166 = vmatpush1.msra.mxu0 0.0
        %2167 = vmatprep.subr.mxu0 0.0
        %2168 = vmatpush1.msra.mxu0 0.0
        %2169 = vmatprep.subr.mxu0 0.0
        %2170 = vmatpush1.msra.mxu0 0.0
        %2171 = vmatprep.subr.mxu0 0.0
        %2172 = vmatpush1.msra.mxu0 0.0
        %2173 = vmatprep.subr.mxu0 0.0
        %2174 = vmatpush1.msra.mxu0 0.0
        %2175 = vmatprep.subr.mxu0 0.0
        %2176 = vmatpush1.msra.mxu0 0.0
        %2177 = vmatprep.subr.mxu0 0.0
        %2178 = vmatpush1.msra.mxu0 0.0
        %2179 = vmatprep.subr.mxu0 0.0
        %2180 = vmatpush1.msra.mxu0 0.0
        %2181 = vmatprep.subr.mxu0 0.0
        %2182 = vmatpush1.msra.mxu0 0.0
        %2183 = vmatprep.subr.mxu0 0.0
        %2184 = vmatpush1.msra.mxu0 0.0
        %2185 = vmatprep.subr.mxu0 0.0
        %2186 = vmatpush1.msra.mxu0 0.0
        %2187 = vmatprep.subr.mxu0 0.0
        %2188 = vmatpush1.msra.mxu0 0.0
        %2189 = vmatprep.subr.mxu0 0.0
        %2190 = vmatpush1.msra.mxu0 0.0
        %2191 = vmatprep.subr.mxu0 0.0
        %2192 = vmatpush1.msra.mxu0 0.0
        %2193 = vmatprep.subr.mxu0 0.0
        %2194 = vmatpush1.msra.mxu0 0.0
        %2195 = vmatprep.subr.mxu0 0.0
        %2196 = vmatpush1.msra.mxu0 0.0
        %2197 = vmatprep.subr.mxu0 0.0
        %2198 = vmatpush1.msra.mxu0 0.0
        %2199 = vmatprep.subr.mxu0 0.0
        %2200 = vmatpush1.msra.mxu0 0.0
        %2201 = vmatprep.subr.mxu0 0.0
        %2202 = vmatpush1.msra.mxu0 0.0
        %2203 = vmatprep.subr.mxu0 0.0
        %2204 = vmatpush1.msra.mxu0 0.0
        %2205 = vmatprep.subr.mxu0 0.0
        %2206 = vmatpush1.msra.mxu0 0.0
        %2207 = vmatprep.subr.mxu0 0.0
        %2208 = vmatpush1.msra.mxu0 0.0
        %2209 = vmatprep.subr.mxu0 0.0
        %2210 = vmatpush1.msra.mxu0 0.0
        %2211 = vmatprep.subr.mxu0 0.0
        %2212 = vmatpush1.msra.mxu0 0.0
        %2213 = vmatprep.subr.mxu0 0.0
        %2214 = vmatpush1.msra.mxu0 0.0
        %2215 = vmatprep.mubr.f32.mxu0 0.0
        %2216 = vmatmul.mubr.f32.gmra.mrb[0].mxu0 %v2149
        %v2217 = vpop.f32.mrb[0].mxu0
        %v2218 = vadd.f32 0.0, %v2217
        %v2219 = vpop.f32.mrb[0].mxu0
        %2220 = vdwg.mxu0
        %2222 = vrot.lane.b32.xlu0 %v1888, 8
        %v2223 = vpop.permute.xlu0 %2222
        %2226 = vrot.lane.b32.xlu0 %v2053, 16
        %v2227 = vpop.permute.xlu0 %2226
        %2230 = vrot.lane.b32.xlu0 %v2218, 24
        %v2231 = vpop.permute.xlu0 %2230
        %v2233 = vsel %vm775, %v1722, %v2223
        %v2234 = vsel %vm1446, %v2233, %v2227
        %v2235 = vsel %vm1448, %v2234, %v2231
        %v2236 = vld [vmem:[%s10] sm:$0xff]
        %v2237 = vld [vmem:[%s10 + $0x8] sm:$0xff]
        %v2238 = vld [vmem:[%s10 + $0x10] sm:$0xff]
        %v2239 = vld [vmem:[%s10 + $0x18] sm:$0xff]
        %v2241 = vsel %vm665, %v2235, 0
        %2243 = vmatprep.subr.mxu0 0.0
        %2244 = vmatpush1.msra.mxu0 %v2236
        %2245 = vmatprep.subr.mxu0 0.0
        %2246 = vmatpush1.msra.mxu0 %v2237
        %2247 = vmatprep.subr.mxu0 0.0
        %2248 = vmatpush1.msra.mxu0 %v2238
        %2249 = vmatprep.subr.mxu0 0.0
        %2250 = vmatpush1.msra.mxu0 %v2239
        %2251 = vmatprep.subr.mxu0 0.0
        %2252 = vmatpush1.msra.mxu0 0.0
        %2253 = vmatprep.subr.mxu0 0.0
        %2254 = vmatpush1.msra.mxu0 0.0
        %2255 = vmatprep.subr.mxu0 0.0
        %2256 = vmatpush1.msra.mxu0 0.0
        %2257 = vmatprep.subr.mxu0 0.0
        %2258 = vmatpush1.msra.mxu0 0.0
        %2259 = vmatprep.subr.mxu0 0.0
        %2260 = vmatpush1.msra.mxu0 0.0
        %2261 = vmatprep.subr.mxu0 0.0
        %2262 = vmatpush1.msra.mxu0 0.0
        %2263 = vmatprep.subr.mxu0 0.0
        %2264 = vmatpush1.msra.mxu0 0.0
        %2265 = vmatprep.subr.mxu0 0.0
        %2266 = vmatpush1.msra.mxu0 0.0
        %2267 = vmatprep.subr.mxu0 0.0
        %2268 = vmatpush1.msra.mxu0 0.0
        %2269 = vmatprep.subr.mxu0 0.0
        %2270 = vmatpush1.msra.mxu0 0.0
        %2271 = vmatprep.subr.mxu0 0.0
        %2272 = vmatpush1.msra.mxu0 0.0
        %2273 = vmatprep.subr.mxu0 0.0
        %2274 = vmatpush1.msra.mxu0 0.0
        %2275 = vmatprep.subr.mxu0 0.0
        %2276 = vmatpush1.msra.mxu0 0.0
        %2277 = vmatprep.subr.mxu0 0.0
        %2278 = vmatpush1.msra.mxu0 0.0
        %2279 = vmatprep.subr.mxu0 0.0
        %2280 = vmatpush1.msra.mxu0 0.0
        %2281 = vmatprep.subr.mxu0 0.0
        %2282 = vmatpush1.msra.mxu0 0.0
        %2283 = vmatprep.subr.mxu0 0.0
        %2284 = vmatpush1.msra.mxu0 0.0
        %2285 = vmatprep.subr.mxu0 0.0
        %2286 = vmatpush1.msra.mxu0 0.0
        %2287 = vmatprep.subr.mxu0 0.0
        %2288 = vmatpush1.msra.mxu0 0.0
        %2289 = vmatprep.subr.mxu0 0.0
        %2290 = vmatpush1.msra.mxu0 0.0
        %2291 = vmatprep.subr.mxu0 0.0
        %2292 = vmatpush1.msra.mxu0 0.0
        %2293 = vmatprep.subr.mxu0 0.0
        %2294 = vmatpush1.msra.mxu0 0.0
        %2295 = vmatprep.subr.mxu0 0.0
        %2296 = vmatpush1.msra.mxu0 0.0
        %2297 = vmatprep.subr.mxu0 0.0
        %2298 = vmatpush1.msra.mxu0 0.0
        %2299 = vmatprep.subr.mxu0 0.0
        %2300 = vmatpush1.msra.mxu0 0.0
        %2301 = vmatprep.subr.mxu0 0.0
        %2302 = vmatpush1.msra.mxu0 0.0
        %2303 = vmatprep.subr.mxu0 0.0
        %2304 = vmatpush1.msra.mxu0 0.0
        %2305 = vmatprep.subr.mxu0 0.0
        %2306 = vmatpush1.msra.mxu0 0.0
        %2307 = vmatprep.mubr.f32.mxu0 0.0
        %2308 = vmatmul.mubr.f32.gmra.mrb[0].mxu0 %v2241
        %v2309 = vpop.f32.mrb[0].mxu0
        %v2310 = vadd.f32 0.0, %v2309
        %v2311 = vpop.f32.mrb[0].mxu0
        %2312 = vdwg.mxu0
        %v2313 = vadd.f32 %v1535, %v2310
        %v2314 = vld [vmem:[%s11] sm:$0x1]
        %v2316 = vlaneseq
        %v2317 = vshrl.u32 %v2316, 7
        %v2318 = vsub.s32 0, %v2317
        %v2319 = vrot.slane %v2314, %v2318
        %v2321 = vadd.f32 %v2313, %v2319
        %v2322 = vld [vmem:[%s12] sm:$0x1]
        %v2323 = vld [vmem:[%s13] sm:$0x1]
        %v2324 = vsel %vm665, %v2321, 0.0
        %2325 = vadd.xlane.f32.xlu0 %v2324
        %v2326 = vpop.xlane.xlu0 %2325
        %v2327 = vmul.f32 %v2326, %v669
        %v2328 = vsub.f32 %v2321, %v2327
        %v2329 = vmul.f32 %v2328, %v2328
        %v2330 = vsel %vm665, %v2329, 0.0
        %2331 = vadd.xlane.f32.xlu0 %v2330
        %v2332 = vpop.xlane.xlu0 %2331
        %v2333 = vmul.f32 %v2332, %v669
        %v2334 = vadd.f32 %v2333, 1e-05
        %v2335 = vrsqrt.pop %v2334
        %v2336 = vmul.f32 %v2328, %v2335
        %v2338 = vlaneseq
        %v2339 = vshrl.u32 %v2338, 7
        %v2340 = vsub.s32 0, %v2339
        %v2341 = vrot.slane %v2322, %v2340
        %v2343 = vmul.f32 %v2336, %v2341
        %v2345 = vlaneseq
        %v2346 = vshrl.u32 %v2345, 7
        %v2347 = vsub.s32 0, %v2346
        %v2348 = vrot.slane %v2323, %v2347
        %v2350 = vadd.f32 %v2343, %v2348
        %v2351 = vld [vmem:[%s14] sm:$0xff]
        %v2352 = vld [vmem:[%s14 + $0x8] sm:$0xff]
        %v2353 = vld [vmem:[%s14 + $0x10] sm:$0xff]
        %v2354 = vld [vmem:[%s14 + $0x18] sm:$0xff]
        %v2355 = vld [vmem:[%s15] sm:$0x1]
        %v2357 = vlaneseq
        %v2358 = vshrl.u32 %v2357, 7
        %v2359 = vsub.s32 0, %v2358
        %v2360 = vrot.slane %v2355, %v2359
        %v2363 = vsel %vm665, %v2350, 0
        %2365 = vmatprep.subr.mxu0 0.0
        %2366 = vmatpush1.msra.mxu0 %v2351
        %2367 = vmatprep.subr.mxu0 0.0
        %2368 = vmatpush1.msra.mxu0 %v2352
        %2369 = vmatprep.subr.mxu0 0.0
        %2370 = vmatpush1.msra.mxu0 %v2353
        %2371 = vmatprep.subr.mxu0 0.0
        %2372 = vmatpush1.msra.mxu0 %v2354
        %2373 = vmatprep.subr.mxu0 0.0
        %2374 = vmatpush1.msra.mxu0 0.0
        %2375 = vmatprep.subr.mxu0 0.0
        %2376 = vmatpush1.msra.mxu0 0.0
        %2377 = vmatprep.subr.mxu0 0.0
        %2378 = vmatpush1.msra.mxu0 0.0
        %2379 = vmatprep.subr.mxu0 0.0
        %2380 = vmatpush1.msra.mxu0 0.0
        %2381 = vmatprep.subr.mxu0 0.0
        %2382 = vmatpush1.msra.mxu0 0.0
        %2383 = vmatprep.subr.mxu0 0.0
        %2384 = vmatpush1.msra.mxu0 0.0
        %2385 = vmatprep.subr.mxu0 0.0
        %2386 = vmatpush1.msra.mxu0 0.0
        %2387 = vmatprep.subr.mxu0 0.0
        %2388 = vmatpush1.msra.mxu0 0.0
        %2389 = vmatprep.subr.mxu0 0.0
        %2390 = vmatpush1.msra.mxu0 0.0
        %2391 = vmatprep.subr.mxu0 0.0
        %2392 = vmatpush1.msra.mxu0 0.0
        %2393 = vmatprep.subr.mxu0 0.0
        %2394 = vmatpush1.msra.mxu0 0.0
        %2395 = vmatprep.subr.mxu0 0.0
        %2396 = vmatpush1.msra.mxu0 0.0
        %2397 = vmatprep.subr.mxu0 0.0
        %2398 = vmatpush1.msra.mxu0 0.0
        %2399 = vmatprep.subr.mxu0 0.0
        %2400 = vmatpush1.msra.mxu0 0.0
        %2401 = vmatprep.subr.mxu0 0.0
        %2402 = vmatpush1.msra.mxu0 0.0
        %2403 = vmatprep.subr.mxu0 0.0
        %2404 = vmatpush1.msra.mxu0 0.0
        %2405 = vmatprep.subr.mxu0 0.0
        %2406 = vmatpush1.msra.mxu0 0.0
        %2407 = vmatprep.subr.mxu0 0.0
        %2408 = vmatpush1.msra.mxu0 0.0
        %2409 = vmatprep.subr.mxu0 0.0
        %2410 = vmatpush1.msra.mxu0 0.0
        %2411 = vmatprep.subr.mxu0 0.0
        %2412 = vmatpush1.msra.mxu0 0.0
        %2413 = vmatprep.subr.mxu0 0.0
        %2414 = vmatpush1.msra.mxu0 0.0
        %2415 = vmatprep.subr.mxu0 0.0
        %2416 = vmatpush1.msra.mxu0 0.0
        %2417 = vmatprep.subr.mxu0 0.0
        %2418 = vmatpush1.msra.mxu0 0.0
        %2419 = vmatprep.subr.mxu0 0.0
        %2420 = vmatpush1.msra.mxu0 0.0
        %2421 = vmatprep.subr.mxu0 0.0
        %2422 = vmatpush1.msra.mxu0 0.0
        %2423 = vmatprep.subr.mxu0 0.0
        %2424 = vmatpush1.msra.mxu0 0.0
        %2425 = vmatprep.subr.mxu0 0.0
        %2426 = vmatpush1.msra.mxu0 0.0
        %2427 = vmatprep.subr.mxu0 0.0
        %2428 = vmatpush1.msra.mxu0 0.0
        %2429 = vmatprep.mubr.f32.mxu0 0.0
        %2430 = vmatmul.mubr.f32.gmra.mrb[0].mxu0 %v2363
        %v2431 = vpop.f32.mrb[0].mxu0
        %v2432 = vadd.f32 %v2360, %v2431
        %v2433 = vpop.f32.mrb[0].mxu0
        %2434 = vdwg.mxu0
        %v2435 = vmul.f32 %v2432, 0.5
        %v2436 = vmul.f32 %v2432, 0.044715
        %v2437 = vmul.f32 %v2436, %v2432
        %v2438 = vmul.f32 %v2437, %v2432
        %v2439 = vadd.f32 %v2432, %v2438
        %v2440 = vmul.f32 %v2439, 0.7978846
        %v2441 = vtanh.pop %v2440
        %v2442 = vadd.f32 %v2441, 1.0
        %v2443 = vmul.f32 %v2435, %v2442
        %v2444 = vld [vmem:[%s16] sm:$0xff]
        %v2445 = vld [vmem:[%s16 + $0x8] sm:$0xff]
        %v2446 = vld [vmem:[%s16 + $0x10] sm:$0xff]
        %v2447 = vld [vmem:[%s16 + $0x18] sm:$0xff]
        %v2448 = vld [vmem:[%s16 + $0x20] sm:$0xff]
        %v2449 = vld [vmem:[%s16 + $0x28] sm:$0xff]
        %v2450 = vld [vmem:[%s16 + $0x30] sm:$0xff]
        %v2451 = vld [vmem:[%s16 + $0x38] sm:$0xff]
        %v2452 = vld [vmem:[%s16 + $0x40] sm:$0xff]
        %v2453 = vld [vmem:[%s16 + $0x48] sm:$0xff]
        %v2454 = vld [vmem:[%s16 + $0x50] sm:$0xff]
        %v2455 = vld [vmem:[%s16 + $0x58] sm:$0xff]
        %v2456 = vld [vmem:[%s16 + $0x60] sm:$0xff]
        %v2457 = vld [vmem:[%s16 + $0x68] sm:$0xff]
        %v2458 = vld [vmem:[%s16 + $0x70] sm:$0xff]
        %v2459 = vld [vmem:[%s16 + $0x78] sm:$0xff]
        %2460 = vmatprep.subr.mxu0 0.0
        %2461 = vmatpush1.msra.mxu0 %v2444
        %2462 = vmatprep.subr.mxu0 0.0
        %2463 = vmatpush1.msra.mxu0 %v2445
        %2464 = vmatprep.subr.mxu0 0.0
        %2465 = vmatpush1.msra.mxu0 %v2446
        %2466 = vmatprep.subr.mxu0 0.0
        %2467 = vmatpush1.msra.mxu0 %v2447
        %2468 = vmatprep.subr.mxu0 0.0
        %2469 = vmatpush1.msra.mxu0 %v2448
        %2470 = vmatprep.subr.mxu0 0.0
        %2471 = vmatpush1.msra.mxu0 %v2449
        %2472 = vmatprep.subr.mxu0 0.0
        %2473 = vmatpush1.msra.mxu0 %v2450
        %2474 = vmatprep.subr.mxu0 0.0
        %2475 = vmatpush1.msra.mxu0 %v2451
        %2476 = vmatprep.subr.mxu0 0.0
        %2477 = vmatpush1.msra.mxu0 %v2452
        %2478 = vmatprep.subr.mxu0 0.0
        %2479 = vmatpush1.msra.mxu0 %v2453
        %2480 = vmatprep.subr.mxu0 0.0
        %2481 = vmatpush1.msra.mxu0 %v2454
        %2482 = vmatprep.subr.mxu0 0.0
        %2483 = vmatpush1.msra.mxu0 %v2455
        %2484 = vmatprep.subr.mxu0 0.0
        %2485 = vmatpush1.msra.mxu0 %v2456
        %2486 = vmatprep.subr.mxu0 0.0
        %2487 = vmatpush1.msra.mxu0 %v2457
        %2488 = vmatprep.subr.mxu0 0.0
        %2489 = vmatpush1.msra.mxu0 %v2458
        %2490 = vmatprep.subr.mxu0 0.0
        %2491 = vmatpush1.msra.mxu0 %v2459
        %2492 = vmatprep.subr.mxu0 0.0
        %2493 = vmatpush1.msra.mxu0 0.0
        %2494 = vmatprep.subr.mxu0 0.0
        %2495 = vmatpush1.msra.mxu0 0.0
        %2496 = vmatprep.subr.mxu0 0.0
        %2497 = vmatpush1.msra.mxu0 0.0
        %2498 = vmatprep.subr.mxu0 0.0
        %2499 = vmatpush1.msra.mxu0 0.0
        %2500 = vmatprep.subr.mxu0 0.0
        %2501 = vmatpush1.msra.mxu0 0.0
        %2502 = vmatprep.subr.mxu0 0.0
        %2503 = vmatpush1.msra.mxu0 0.0
        %2504 = vmatprep.subr.mxu0 0.0
        %2505 = vmatpush1.msra.mxu0 0.0
        %2506 = vmatprep.subr.mxu0 0.0
        %2507 = vmatpush1.msra.mxu0 0.0
        %2508 = vmatprep.subr.mxu0 0.0
        %2509 = vmatpush1.msra.mxu0 0.0
        %2510 = vmatprep.subr.mxu0 0.0
        %2511 = vmatpush1.msra.mxu0 0.0
        %2512 = vmatprep.subr.mxu0 0.0
        %2513 = vmatpush1.msra.mxu0 0.0
        %2514 = vmatprep.subr.mxu0 0.0
        %2515 = vmatpush1.msra.mxu0 0.0
        %2516 = vmatprep.subr.mxu0 0.0
        %2517 = vmatpush1.msra.mxu0 0.0
        %2518 = vmatprep.subr.mxu0 0.0
        %2519 = vmatpush1.msra.mxu0 0.0
        %2520 = vmatprep.subr.mxu0 0.0
        %2521 = vmatpush1.msra.mxu0 0.0
        %2522 = vmatprep.subr.mxu0 0.0
        %2523 = vmatpush1.msra.mxu0 0.0
        %2524 = vmatprep.mubr.f32.mxu0 0.0
        %2525 = vmatmul.mubr.f32.gmra.mrb[0].mxu0 %v2443
        %v2526 = vpop.f32.mrb[0].mxu0
        %v2527 = vadd.f32 0.0, %v2526
        %v2528 = vpop.f32.mrb[0].mxu0
        %2529 = vdwg.mxu0
        %v2530 = vadd.f32 %v2321, %v2527
        %v2531 = vld [vmem:[%s17] sm:$0x1]
        %v2533 = vlaneseq
        %v2534 = vshrl.u32 %v2533, 7
        %v2535 = vsub.s32 0, %v2534
        %v2536 = vrot.slane %v2531, %v2535
        %v2538 = vadd.f32 %v2530, %v2536
        %s2539 = scalar_lea.vmem %s3, 1
        %v2540 = vld [vmem:[%s2539] sm:$0x1]
        %s2541 = scalar_lea.vmem %s4, 1
        %v2542 = vld [vmem:[%s2541] sm:$0x1]
        %v2543 = vsel %vm665, %v2538, 0.0
        %2544 = vadd.xlane.f32.xlu0 %v2543
        %v2545 = vpop.xlane.xlu0 %2544
        %v2546 = vmul.f32 %v2545, %v669
        %v2547 = vsub.f32 %v2538, %v2546
        %v2548 = vmul.f32 %v2547, %v2547
        %v2549 = vsel %vm665, %v2548, 0.0
        %2550 = vadd.xlane.f32.xlu0 %v2549
        %v2551 = vpop.xlane.xlu0 %2550
        %v2552 = vmul.f32 %v2551, %v669
        %v2553 = vadd.f32 %v2552, 1e-05
        %v2554 = vrsqrt.pop %v2553
        %v2555 = vmul.f32 %v2547, %v2554
        %v2557 = vlaneseq
        %v2558 = vshrl.u32 %v2557, 7
        %v2559 = vsub.s32 0, %v2558
        %v2560 = vrot.slane %v2540, %v2559
        %v2562 = vmul.f32 %v2555, %v2560
        %v2564 = vlaneseq
        %v2565 = vshrl.u32 %v2564, 7
        %v2566 = vsub.s32 0, %v2565
        %v2567 = vrot.slane %v2542, %v2566
        %v2569 = vadd.f32 %v2562, %v2567
        %s2570 = scalar_lea.vmem %s5, 32
        %v2571 = vld [vmem:[%s2570] sm:$0xff]
        %v2572 = vld [vmem:[%s2570 + $0x8] sm:$0xff]
        %v2573 = vld [vmem:[%s2570 + $0x10] sm:$0xff]
        %v2574 = vld [vmem:[%s2570 + $0x18] sm:$0xff]
        %v2576 = vsel %vm665, %v2569, 0
        %2578 = vmatprep.subr.mxu0 0.0
        %2579 = vmatpush1.msra.mxu0 %v2571
        %2580 = vmatprep.subr.mxu0 0.0
        %2581 = vmatpush1.msra.mxu0 %v2572
        %2582 = vmatprep.subr.mxu0 0.0
        %2583 = vmatpush1.msra.mxu0 %v2573
        %2584 = vmatprep.subr.mxu0 0.0
        %2585 = vmatpush1.msra.mxu0 %v2574
        %2586 = vmatprep.subr.mxu0 0.0
        %2587 = vmatpush1.msra.mxu0 0.0
        %2588 = vmatprep.subr.mxu0 0.0
        %2589 = vmatpush1.msra.mxu0 0.0
        %2590 = vmatprep.subr.mxu0 0.0
        %2591 = vmatpush1.msra.mxu0 0.0
        %2592 = vmatprep.subr.mxu0 0.0
        %2593 = vmatpush1.msra.mxu0 0.0
        %2594 = vmatprep.subr.mxu0 0.0
        %2595 = vmatpush1.msra.mxu0 0.0
        %2596 = vmatprep.subr.mxu0 0.0
        %2597 = vmatpush1.msra.mxu0 0.0
        %2598 = vmatprep.subr.mxu0 0.0
        %2599 = vmatpush1.msra.mxu0 0.0
        %2600 = vmatprep.subr.mxu0 0.0
        %2601 = vmatpush1.msra.mxu0 0.0
        %2602 = vmatprep.subr.mxu0 0.0
        %2603 = vmatpush1.msra.mxu0 0.0
        %2604 = vmatprep.subr.mxu0 0.0
        %2605 = vmatpush1.msra.mxu0 0.0
        %2606 = vmatprep.subr.mxu0 0.0
        %2607 = vmatpush1.msra.mxu0 0.0
        %2608 = vmatprep.subr.mxu0 0.0
        %2609 = vmatpush1.msra.mxu0 0.0
        %2610 = vmatprep.subr.mxu0 0.0
        %2611 = vmatpush1.msra.mxu0 0.0
        %2612 = vmatprep.subr.mxu0 0.0
        %2613 = vmatpush1.msra.mxu0 0.0
        %2614 = vmatprep.subr.mxu0 0.0
        %2615 = vmatpush1.msra.mxu0 0.0
        %2616 = vmatprep.subr.mxu0 0.0
        %2617 = vmatpush1.msra.mxu0 0.0
        %2618 = vmatprep.subr.mxu0 0.0
        %2619 = vmatpush1.msra.mxu0 0.0
        %2620 = vmatprep.subr.mxu0 0.0
        %2621 = vmatpush1.msra.mxu0 0.0
        %2622 = vmatprep.subr.mxu0 0.0
        %2623 = vmatpush1.msra.mxu0 0.0
        %2624 = vmatprep.subr.mxu0 0.0
        %2625 = vmatpush1.msra.mxu0 0.0
        %2626 = vmatprep.subr.mxu0 0.0
        %2627 = vmatpush1.msra.mxu0 0.0
        %2628 = vmatprep.subr.mxu0 0.0
        %2629 = vmatpush1.msra.mxu0 0.0
        %2630 = vmatprep.subr.mxu0 0.0
        %2631 = vmatpush1.msra.mxu0 0.0
        %2632 = vmatprep.subr.mxu0 0.0
        %2633 = vmatpush1.msra.mxu0 0.0
        %2634 = vmatprep.subr.mxu0 0.0
        %2635 = vmatpush1.msra.mxu0 0.0
        %2636 = vmatprep.subr.mxu0 0.0
        %2637 = vmatpush1.msra.mxu0 0.0
        %2638 = vmatprep.subr.mxu0 0.0
        %2639 = vmatpush1.msra.mxu0 0.0
        %2640 = vmatprep.subr.mxu0 0.0
        %2641 = vmatpush1.msra.mxu0 0.0
        %2642 = vmatprep.mubr.f32.mxu0 0.0
        %2643 = vmatmul.mubr.f32.gmra.mrb[0].mxu0 %v2576
        %v2644 = vpop.f32.mrb[0].mxu0
        %v2645 = vadd.f32 0.0, %v2644
        %v2646 = vpop.f32.mrb[0].mxu0
        %2647 = vdwg.mxu0
        %v2648 = vmul.f32 %v2645, 0.35355338
        %2650 = vrot.lane.b32.xlu0 %v2645, 96
        %v2651 = vpop.permute.xlu0 %2650
        %v2653 = vsel %vm775, %v2648, 0
        %v2655 = vsel %vm775, %v2651, 0
        %2657 = vmatprep.subr.mxu0 0.0
        %2658 = vmatpush1.xpose.msra.mxu0 %v2655
        %2659 = vmatprep.subr.mxu0 0.0
        %2660 = vmatpush1.xpose.msra.mxu0 0.0
        %2661 = vmatprep.subr.mxu0 0.0
        %2662 = vmatpush1.xpose.msra.mxu0 0.0
        %2663 = vmatprep.subr.mxu0 0.0
        %2664 = vmatpush1.xpose.msra.mxu0 0.0
        %2665 = vmatprep.subr.mxu0 0.0
        %2666 = vmatpush1.xpose.msra.mxu0 0.0
        %2667 = vmatprep.subr.mxu0 0.0
        %2668 = vmatpush1.xpose.msra.mxu0 0.0
        %2669 = vmatprep.subr.mxu0 0.0
        %2670 = vmatpush1.xpose.msra.mxu0 0.0
        %2671 = vmatprep.subr.mxu0 0.0
        %2672 = vmatpush1.xpose.msra.mxu0 0.0
        %2673 = vmatprep.subr.mxu0 0.0
        %2674 = vmatpush1.xpose.msra.mxu0 0.0
        %2675 = vmatprep.subr.mxu0 0.0
        %2676 = vmatpush1.xpose.msra.mxu0 0.0
        %2677 = vmatprep.subr.mxu0 0.0
        %2678 = vmatpush1.xpose.msra.mxu0 0.0
        %2679 = vmatprep.subr.mxu0 0.0
        %2680 = vmatpush1.xpose.msra.mxu0 0.0
        %2681 = vmatprep.subr.mxu0 0.0
        %2682 = vmatpush1.xpose.msra.mxu0 0.0
        %2683 = vmatprep.subr.mxu0 0.0
        %2684 = vmatpush1.xpose.msra.mxu0 0.0
        %2685 = vmatprep.subr.mxu0 0.0
        %2686 = vmatpush1.xpose.msra.mxu0 0.0
        %2687 = vmatprep.subr.mxu0 0.0
        %2688 = vmatpush1.xpose.msra.mxu0 0.0
        %2689 = vmatprep.subr.mxu0 0.0
        %2690 = vmatpush1.xpose.msra.mxu0 0.0
        %2691 = vmatprep.subr.mxu0 0.0
        %2692 = vmatpush1.xpose.msra.mxu0 0.0
        %2693 = vmatprep.subr.mxu0 0.0
        %2694 = vmatpush1.xpose.msra.mxu0 0.0
        %2695 = vmatprep.subr.mxu0 0.0
        %2696 = vmatpush1.xpose.msra.mxu0 0.0
        %2697 = vmatprep.subr.mxu0 0.0
        %2698 = vmatpush1.xpose.msra.mxu0 0.0
        %2699 = vmatprep.subr.mxu0 0.0
        %2700 = vmatpush1.xpose.msra.mxu0 0.0
        %2701 = vmatprep.subr.mxu0 0.0
        %2702 = vmatpush1.xpose.msra.mxu0 0.0
        %2703 = vmatprep.subr.mxu0 0.0
        %2704 = vmatpush1.xpose.msra.mxu0 0.0
        %2705 = vmatprep.subr.mxu0 0.0
        %2706 = vmatpush1.xpose.msra.mxu0 0.0
        %2707 = vmatprep.subr.mxu0 0.0
        %2708 = vmatpush1.xpose.msra.mxu0 0.0
        %2709 = vmatprep.subr.mxu0 0.0
        %2710 = vmatpush1.xpose.msra.mxu0 0.0
        %2711 = vmatprep.subr.mxu0 0.0
        %2712 = vmatpush1.xpose.msra.mxu0 0.0
        %2713 = vmatprep.subr.mxu0 0.0
        %2714 = vmatpush1.xpose.msra.mxu0 0.0
        %2715 = vmatprep.subr.mxu0 0.0
        %2716 = vmatpush1.xpose.msra.mxu0 0.0
        %2717 = vmatprep.subr.mxu0 0.0
        %2718 = vmatpush1.xpose.msra.mxu0 0.0
        %2719 = vmatprep.subr.mxu0 0.0
        %2720 = vmatpush1.xpose.msra.mxu0 0.0
        %2721 = vmatprep.mubr.f32.mxu0 0.0
        %2722 = vmatmul.mubr.f32.gmra.mrb[0].mxu0 %v2653
        %v2723 = vpop.f32.mrb[0].mxu0
        %v2724 = vadd.f32 0.0, %v2723
        %v2725 = vpop.f32.mrb[0].mxu0
        %2726 = vdwg.mxu0
        %v2727 = vsel %vm775, %v2724, -inf
        %2728 = vmax.xlane.f32.xlu0 %v2727
        %v2729 = vpop.xlane.xlu0 %2728
        %v2730 = vsub.f32 %v2724, %v2729
        %v2731 = vmul.f32 %v2730, 1.442695
        %v2732 = vpow.pop %v2731
        %v2733 = vsel %vm775, %v2732, 0.0
        %2734 = vadd.xlane.f32.xlu0 %v2733
        %v2735 = vpop.xlane.xlu0 %2734
        %v2736 = vrcp.pop %v2735
        %v2737 = vmul.f32 %v2732, %v2736
        %2738 = vrot.lane.b32.xlu0 %v2645, 64
        %v2739 = vpop.permute.xlu0 %2738
        %v2742 = vsel %vm775, %v2737, 0
        %2744 = vmatprep.subr.mxu0 0.0
        %2745 = vmatpush1.msra.mxu0 %v2739
        %2746 = vmatprep.subr.mxu0 0.0
        %2747 = vmatpush1.msra.mxu0 0.0
        %2748 = vmatprep.subr.mxu0 0.0
        %2749 = vmatpush1.msra.mxu0 0.0
        %2750 = vmatprep.subr.mxu0 0.0
        %2751 = vmatpush1.msra.mxu0 0.0
        %2752 = vmatprep.subr.mxu0 0.0
        %2753 = vmatpush1.msra.mxu0 0.0
        %2754 = vmatprep.subr.mxu0 0.0
        %2755 = vmatpush1.msra.mxu0 0.0
        %2756 = vmatprep.subr.mxu0 0.0
        %2757 = vmatpush1.msra.mxu0 0.0
        %2758 = vmatprep.subr.mxu0 0.0
        %2759 = vmatpush1.msra.mxu0 0.0
        %2760 = vmatprep.subr.mxu0 0.0
        %2761 = vmatpush1.msra.mxu0 0.0
        %2762 = vmatprep.subr.mxu0 0.0
        %2763 = vmatpush1.msra.mxu0 0.0
        %2764 = vmatprep.subr.mxu0 0.0
        %2765 = vmatpush1.msra.mxu0 0.0
        %2766 = vmatprep.subr.mxu0 0.0
        %2767 = vmatpush1.msra.mxu0 0.0
        %2768 = vmatprep.subr.mxu0 0.0
        %2769 = vmatpush1.msra.mxu0 0.0
        %2770 = vmatprep.subr.mxu0 0.0
        %2771 = vmatpush1.msra.mxu0 0.0
        %2772 = vmatprep.subr.mxu0 0.0
        %2773 = vmatpush1.msra.mxu0 0.0
        %2774 = vmatprep.subr.mxu0 0.0
        %2775 = vmatpush1.msra.mxu0 0.0
        %2776 = vmatprep.subr.mxu0 0.0
        %2777 = vmatpush1.msra.mxu0 0.0
        %2778 = vmatprep.subr.mxu0 0.0
        %2779 = vmatpush1.msra.mxu0 0.0
        %2780 = vmatprep.subr.mxu0 0.0
        %2781 = vmatpush1.msra.mxu0 0.0
        %2782 = vmatprep.subr.mxu0 0.0
        %2783 = vmatpush1.msra.mxu0 0.0
        %2784 = vmatprep.subr.mxu0 0.0
        %2785 = vmatpush1.msra.mxu0 0.0
        %2786 = vmatprep.subr.mxu0 0.0
        %2787 = vmatpush1.msra.mxu0 0.0
        %2788 = vmatprep.subr.mxu0 0.0
        %2789 = vmatpush1.msra.mxu0 0.0
        %2790 = vmatprep.subr.mxu0 0.0
        %2791 = vmatpush1.msra.mxu0 0.0
        %2792 = vmatprep.subr.mxu0 0.0
        %2793 = vmatpush1.msra.mxu0 0.0
        %2794 = vmatprep.subr.mxu0 0.0
        %2795 = vmatpush1.msra.mxu0 0.0
        %2796 = vmatprep.subr.mxu0 0.0
        %2797 = vmatpush1.msra.mxu0 0.0
        %2798 = vmatprep.subr.mxu0 0.0
        %2799 = vmatpush1.msra.mxu0 0.0
        %2800 = vmatprep.subr.mxu0 0.0
        %2801 = vmatpush1.msra.mxu0 0.0
        %2802 = vmatprep.subr.mxu0 0.0
        %2803 = vmatpush1.msra.mxu0 0.0
        %2804 = vmatprep.subr.mxu0 0.0
        %2805 = vmatpush1.msra.mxu0 0.0
        %2806 = vmatprep.subr.mxu0 0.0
        %2807 = vmatpush1.msra.mxu0 0.0
        %2808 = vmatprep.mubr.f32.mxu0 0.0
        %2809 = vmatmul.mubr.f32.gmra.mrb[0].mxu0 %v2742
        %v2810 = vpop.f32.mrb[0].mxu0
        %v2811 = vadd.f32 0.0, %v2810
        %v2812 = vpop.f32.mrb[0].mxu0
        %2813 = vdwg.mxu0
        %2814 = vrot.lane.b32.xlu0 %v2648, 120
        %v2815 = vpop.permute.xlu0 %2814
        %2816 = vrot.lane.b32.xlu0 %v2645, 88
        %v2817 = vpop.permute.xlu0 %2816
        %v2818 = vsel %vm775, %v2815, 0
        %v2820 = vsel %vm775, %v2817, 0
        %2822 = vmatprep.subr.mxu0 0.0
        %2823 = vmatpush1.xpose.msra.mxu0 %v2820
        %2824 = vmatprep.subr.mxu0 0.0
        %2825 = vmatpush1.xpose.msra.mxu0 0.0
        %2826 = vmatprep.subr.mxu0 0.0
        %2827 = vmatpush1.xpose.msra.mxu0 0.0
        %2828 = vmatprep.subr.mxu0 0.0
        %2829 = vmatpush1.xpose.msra.mxu0 0.0
        %2830 = vmatprep.subr.mxu0 0.0
        %2831 = vmatpush1.xpose.msra.mxu0 0.0
        %2832 = vmatprep.subr.mxu0 0.0
        %2833 = vmatpush1.xpose.msra.mxu0 0.0
        %2834 = vmatprep.subr.mxu0 0.0
        %2835 = vmatpush1.xpose.msra.mxu0 0.0
        %2836 = vmatprep.subr.mxu0 0.0
        %2837 = vmatpush1.xpose.msra.mxu0 0.0
        %2838 = vmatprep.subr.mxu0 0.0
        %2839 = vmatpush1.xpose.msra.mxu0 0.0
        %2840 = vmatprep.subr.mxu0 0.0
        %2841 = vmatpush1.xpose.msra.mxu0 0.0
        %2842 = vmatprep.subr.mxu0 0.0
        %2843 = vmatpush1.xpose.msra.mxu0 0.0
        %2844 = vmatprep.subr.mxu0 0.0
        %2845 = vmatpush1.xpose.msra.mxu0 0.0
        %2846 = vmatprep.subr.mxu0 0.0
        %2847 = vmatpush1.xpose.msra.mxu0 0.0
        %2848 = vmatprep.subr.mxu0 0.0
        %2849 = vmatpush1.xpose.msra.mxu0 0.0
        %2850 = vmatprep.subr.mxu0 0.0
        %2851 = vmatpush1.xpose.msra.mxu0 0.0
        %2852 = vmatprep.subr.mxu0 0.0
        %2853 = vmatpush1.xpose.msra.mxu0 0.0
        %2854 = vmatprep.subr.mxu0 0.0
        %2855 = vmatpush1.xpose.msra.mxu0 0.0
        %2856 = vmatprep.subr.mxu0 0.0
        %2857 = vmatpush1.xpose.msra.mxu0 0.0
        %2858 = vmatprep.subr.mxu0 0.0
        %2859 = vmatpush1.xpose.msra.mxu0 0.0
        %2860 = vmatprep.subr.mxu0 0.0
        %2861 = vmatpush1.xpose.msra.mxu0 0.0
        %2862 = vmatprep.subr.mxu0 0.0
        %2863 = vmatpush1.xpose.msra.mxu0 0.0
        %2864 = vmatprep.subr.mxu0 0.0
        %2865 = vmatpush1.xpose.msra.mxu0 0.0
        %2866 = vmatprep.subr.mxu0 0.0
        %2867 = vmatpush1.xpose.msra.mxu0 0.0
        %2868 = vmatprep.subr.mxu0 0.0
        %2869 = vmatpush1.xpose.msra.mxu0 0.0
        %2870 = vmatprep.subr.mxu0 0.0
        %2871 = vmatpush1.xpose.msra.mxu0 0.0
        %2872 = vmatprep.subr.mxu0 0.0
        %2873 = vmatpush1.xpose.msra.mxu0 0.0
        %2874 = vmatprep.subr.mxu0 0.0
        %2875 = vmatpush1.xpose.msra.mxu0 0.0
        %2876 = vmatprep.subr.mxu0 0.0
        %2877 = vmatpush1.xpose.msra.mxu0 0.0
        %2878 = vmatprep.subr.mxu0 0.0
        %2879 = vmatpush1.xpose.msra.mxu0 0.0
        %2880 = vmatprep.subr.mxu0 0.0
        %2881 = vmatpush1.xpose.msra.mxu0 0.0
        %2882 = vmatprep.subr.mxu0 0.0
        %2883 = vmatpush1.xpose.msra.mxu0 0.0
        %2884 = vmatprep.subr.mxu0 0.0
        %2885 = vmatpush1.xpose.msra.mxu0 0.0
        %2886 = vmatprep.mubr.f32.mxu0 0.0
        %2887 = vmatmul.mubr.f32.gmra.mrb[0].mxu0 %v2818
        %v2888 = vpop.f32.mrb[0].mxu0
        %v2889 = vadd.f32 0.0, %v2888
        %v2890 = vpop.f32.mrb[0].mxu0
        %2891 = vdwg.mxu0
        %v2892 = vsel %vm775, %v2889, -inf
        %2893 = vmax.xlane.f32.xlu0 %v2892
        %v2894 = vpop.xlane.xlu0 %2893
        %v2895 = vsub.f32 %v2889, %v2894
        %v2896 = vmul.f32 %v2895, 1.442695
        %v2897 = vpow.pop %v2896
        %v2898 = vsel %vm775, %v2897, 0.0
        %2899 = vadd.xlane.f32.xlu0 %v2898
        %v2900 = vpop.xlane.xlu0 %2899
        %v2901 = vrcp.pop %v2900
        %v2902 = vmul.f32 %v2897, %v2901
        %2903 = vrot.lane.b32.xlu0 %v2645, 56
        %v2904 = vpop.permute.xlu0 %2903
        %v2907 = vsel %vm775, %v2902, 0
        %2909 = vmatprep.subr.mxu0 0.0
        %2910 = vmatpush1.msra.mxu0 %v2904
        %2911 = vmatprep.subr.mxu0 0.0
        %2912 = vmatpush1.msra.mxu0 0.0
        %2913 = vmatprep.subr.mxu0 0.0
        %2914 = vmatpush1.msra.mxu0 0.0
        %2915 = vmatprep.subr.mxu0 0.0
        %2916 = vmatpush1.msra.mxu0 0.0
        %2917 = vmatprep.subr.mxu0 0.0
        %2918 = vmatpush1.msra.mxu0 0.0
        %2919 = vmatprep.subr.mxu0 0.0
        %2920 = vmatpush1.msra.mxu0 0.0
        %2921 = vmatprep.subr.mxu0 0.0
        %2922 = vmatpush1.msra.mxu0 0.0
        %2923 = vmatprep.subr.mxu0 0.0
        %2924 = vmatpush1.msra.mxu0 0.0
        %2925 = vmatprep.subr.mxu0 0.0
        %2926 = vmatpush1.msra.mxu0 0.0
        %2927 = vmatprep.subr.mxu0 0.0
        %2928 = vmatpush1.msra.mxu0 0.0
        %2929 = vmatprep.subr.mxu0 0.0
        %2930 = vmatpush1.msra.mxu0 0.0
        %2931 = vmatprep.subr.mxu0 0.0
        %2932 = vmatpush1.msra.mxu0 0.0
        %2933 = vmatprep.subr.mxu0 0.0
        %2934 = vmatpush1.msra.mxu0 0.0
        %2935 = vmatprep.subr.mxu0 0.0
        %2936 = vmatpush1.msra.mxu0 0.0
        %2937 = vmatprep.subr.mxu0 0.0
        %2938 = vmatpush1.msra.mxu0 0.0
        %2939 = vmatprep.subr.mxu0 0.0
        %2940 = vmatpush1.msra.mxu0 0.0
        %2941 = vmatprep.subr.mxu0 0.0
        %2942 = vmatpush1.msra.mxu0 0.0
        %2943 = vmatprep.subr.mxu0 0.0
        %2944 = vmatpush1.msra.mxu0 0.0
        %2945 = vmatprep.subr.mxu0 0.0
        %2946 = vmatpush1.msra.mxu0 0.0
        %2947 = vmatprep.subr.mxu0 0.0
        %2948 = vmatpush1.msra.mxu0 0.0
        %2949 = vmatprep.subr.mxu0 0.0
        %2950 = vmatpush1.msra.mxu0 0.0
        %2951 = vmatprep.subr.mxu0 0.0
        %2952 = vmatpush1.msra.mxu0 0.0
        %2953 = vmatprep.subr.mxu0 0.0
        %2954 = vmatpush1.msra.mxu0 0.0
        %2955 = vmatprep.subr.mxu0 0.0
        %2956 = vmatpush1.msra.mxu0 0.0
        %2957 = vmatprep.subr.mxu0 0.0
        %2958 = vmatpush1.msra.mxu0 0.0
        %2959 = vmatprep.subr.mxu0 0.0
        %2960 = vmatpush1.msra.mxu0 0.0
        %2961 = vmatprep.subr.mxu0 0.0
        %2962 = vmatpush1.msra.mxu0 0.0
        %2963 = vmatprep.subr.mxu0 0.0
        %2964 = vmatpush1.msra.mxu0 0.0
        %2965 = vmatprep.subr.mxu0 0.0
        %2966 = vmatpush1.msra.mxu0 0.0
        %2967 = vmatprep.subr.mxu0 0.0
        %2968 = vmatpush1.msra.mxu0 0.0
        %2969 = vmatprep.subr.mxu0 0.0
        %2970 = vmatpush1.msra.mxu0 0.0
        %2971 = vmatprep.subr.mxu0 0.0
        %2972 = vmatpush1.msra.mxu0 0.0
        %2973 = vmatprep.mubr.f32.mxu0 0.0
        %2974 = vmatmul.mubr.f32.gmra.mrb[0].mxu0 %v2907
        %v2975 = vpop.f32.mrb[0].mxu0
        %v2976 = vadd.f32 0.0, %v2975
        %v2977 = vpop.f32.mrb[0].mxu0
        %2978 = vdwg.mxu0
        %2979 = vrot.lane.b32.xlu0 %v2648, 112
        %v2980 = vpop.permute.xlu0 %2979
        %2981 = vrot.lane.b32.xlu0 %v2645, 80
        %v2982 = vpop.permute.xlu0 %2981
        %v2983 = vsel %vm775, %v2980, 0
        %v2985 = vsel %vm775, %v2982, 0
        %2987 = vmatprep.subr.mxu0 0.0
        %2988 = vmatpush1.xpose.msra.mxu0 %v2985
        %2989 = vmatprep.subr.mxu0 0.0
        %2990 = vmatpush1.xpose.msra.mxu0 0.0
        %2991 = vmatprep.subr.mxu0 0.0
        %2992 = vmatpush1.xpose.msra.mxu0 0.0
        %2993 = vmatprep.subr.mxu0 0.0
        %2994 = vmatpush1.xpose.msra.mxu0 0.0
        %2995 = vmatprep.subr.mxu0 0.0
        %2996 = vmatpush1.xpose.msra.mxu0 0.0
        %2997 = vmatprep.subr.mxu0 0.0
        %2998 = vmatpush1.xpose.msra.mxu0 0.0
        %2999 = vmatprep.subr.mxu0 0.0
        %3000 = vmatpush1.xpose.msra.mxu0 0.0
        %3001 = vmatprep.subr.mxu0 0.0
        %3002 = vmatpush1.xpose.msra.mxu0 0.0
        %3003 = vmatprep.subr.mxu0 0.0
        %3004 = vmatpush1.xpose.msra.mxu0 0.0
        %3005 = vmatprep.subr.mxu0 0.0
        %3006 = vmatpush1.xpose.msra.mxu0 0.0
        %3007 = vmatprep.subr.mxu0 0.0
        %3008 = vmatpush1.xpose.msra.mxu0 0.0
        %3009 = vmatprep.subr.mxu0 0.0
        %3010 = vmatpush1.xpose.msra.mxu0 0.0
        %3011 = vmatprep.subr.mxu0 0.0
        %3012 = vmatpush1.xpose.msra.mxu0 0.0
        %3013 = vmatprep.subr.mxu0 0.0
        %3014 = vmatpush1.xpose.msra.mxu0 0.0
        %3015 = vmatprep.subr.mxu0 0.0
        %3016 = vmatpush1.xpose.msra.mxu0 0.0
        %3017 = vmatprep.subr.mxu0 0.0
        %3018 = vmatpush1.xpose.msra.mxu0 0.0
        %3019 = vmatprep.subr.mxu0 0.0
        %3020 = vmatpush1.xpose.msra.mxu0 0.0
        %3021 = vmatprep.subr.mxu0 0.0
        %3022 = vmatpush1.xpose.msra.mxu0 0.0
        %3023 = vmatprep.subr.mxu0 0.0
        %3024 = vmatpush1.xpose.msra.mxu0 0.0
        %3025 = vmatprep.subr.mxu0 0.0
        %3026 = vmatpush1.xpose.msra.mxu0 0.0
        %3027 = vmatprep.subr.mxu0 0.0
        %3028 = vmatpush1.xpose.msra.mxu0 0.0
        %3029 = vmatprep.subr.mxu0 0.0
        %3030 = vmatpush1.xpose.msra.mxu0 0.0
        %3031 = vmatprep.subr.mxu0 0.0
        %3032 = vmatpush1.xpose.msra.mxu0 0.0
        %3033 = vmatprep.subr.mxu0 0.0
        %3034 = vmatpush1.xpose.msra.mxu0 0.0
        %3035 = vmatprep.subr.mxu0 0.0
        %3036 = vmatpush1.xpose.msra.mxu0 0.0
        %3037 = vmatprep.subr.mxu0 0.0
        %3038 = vmatpush1.xpose.msra.mxu0 0.0
        %3039 = vmatprep.subr.mxu0 0.0
        %3040 = vmatpush1.xpose.msra.mxu0 0.0
        %3041 = vmatprep.subr.mxu0 0.0
        %3042 = vmatpush1.xpose.msra.mxu0 0.0
        %3043 = vmatprep.subr.mxu0 0.0
        %3044 = vmatpush1.xpose.msra.mxu0 0.0
        %3045 = vmatprep.subr.mxu0 0.0
        %3046 = vmatpush1.xpose.msra.mxu0 0.0
        %3047 = vmatprep.subr.mxu0 0.0
        %3048 = vmatpush1.xpose.msra.mxu0 0.0
        %3049 = vmatprep.subr.mxu0 0.0
        %3050 = vmatpush1.xpose.msra.mxu0 0.0
        %3051 = vmatprep.mubr.f32.mxu0 0.0
        %3052 = vmatmul.mubr.f32.gmra.mrb[0].mxu0 %v2983
        %v3053 = vpop.f32.mrb[0].mxu0
        %v3054 = vadd.f32 0.0, %v3053
        %v3055 = vpop.f32.mrb[0].mxu0
        %3056 = vdwg.mxu0
        %v3057 = vsel %vm775, %v3054, -inf
        %3058 = vmax.xlane.f32.xlu0 %v3057
        %v3059 = vpop.xlane.xlu0 %3058
        %v3060 = vsub.f32 %v3054, %v3059
        %v3061 = vmul.f32 %v3060, 1.442695
        %v3062 = vpow.pop %v3061
        %v3063 = vsel %vm775, %v3062, 0.0
        %3064 = vadd.xlane.f32.xlu0 %v3063
        %v3065 = vpop.xlane.xlu0 %3064
        %v3066 = vrcp.pop %v3065
        %v3067 = vmul.f32 %v3062, %v3066
        %3068 = vrot.lane.b32.xlu0 %v2645, 48
        %v3069 = vpop.permute.xlu0 %3068
        %v3072 = vsel %vm775, %v3067, 0
        %3074 = vmatprep.subr.mxu0 0.0
        %3075 = vmatpush1.msra.mxu0 %v3069
        %3076 = vmatprep.subr.mxu0 0.0
        %3077 = vmatpush1.msra.mxu0 0.0
        %3078 = vmatprep.subr.mxu0 0.0
        %3079 = vmatpush1.msra.mxu0 0.0
        %3080 = vmatprep.subr.mxu0 0.0
        %3081 = vmatpush1.msra.mxu0 0.0
        %3082 = vmatprep.subr.mxu0 0.0
        %3083 = vmatpush1.msra.mxu0 0.0
        %3084 = vmatprep.subr.mxu0 0.0
        %3085 = vmatpush1.msra.mxu0 0.0
        %3086 = vmatprep.subr.mxu0 0.0
        %3087 = vmatpush1.msra.mxu0 0.0
        %3088 = vmatprep.subr.mxu0 0.0
        %3089 = vmatpush1.msra.mxu0 0.0
        %3090 = vmatprep.subr.mxu0 0.0
        %3091 = vmatpush1.msra.mxu0 0.0
        %3092 = vmatprep.subr.mxu0 0.0
        %3093 = vmatpush1.msra.mxu0 0.0
        %3094 = vmatprep.subr.mxu0 0.0
        %3095 = vmatpush1.msra.mxu0 0.0
        %3096 = vmatprep.subr.mxu0 0.0
        %3097 = vmatpush1.msra.mxu0 0.0
        %3098 = vmatprep.subr.mxu0 0.0
        %3099 = vmatpush1.msra.mxu0 0.0
        %3100 = vmatprep.subr.mxu0 0.0
        %3101 = vmatpush1.msra.mxu0 0.0
        %3102 = vmatprep.subr.mxu0 0.0
        %3103 = vmatpush1.msra.mxu0 0.0
        %3104 = vmatprep.subr.mxu0 0.0
        %3105 = vmatpush1.msra.mxu0 0.0
        %3106 = vmatprep.subr.mxu0 0.0
        %3107 = vmatpush1.msra.mxu0 0.0
        %3108 = vmatprep.subr.mxu0 0.0
        %3109 = vmatpush1.msra.mxu0 0.0
        %3110 = vmatprep.subr.mxu0 0.0
        %3111 = vmatpush1.msra.mxu0 0.0
        %3112 = vmatprep.subr.mxu0 0.0
        %3113 = vmatpush1.msra.mxu0 0.0
        %3114 = vmatprep.subr.mxu0 0.0
        %3115 = vmatpush1.msra.mxu0 0.0
        %3116 = vmatprep.subr.mxu0 0.0
        %3117 = vmatpush1.msra.mxu0 0.0
        %3118 = vmatprep.subr.mxu0 0.0
        %3119 = vmatpush1.msra.mxu0 0.0
        %3120 = vmatprep.subr.mxu0 0.0
        %3121 = vmatpush1.msra.mxu0 0.0
        %3122 = vmatprep.subr.mxu0 0.0
        %3123 = vmatpush1.msra.mxu0 0.0
        %3124 = vmatprep.subr.mxu0 0.0
        %3125 = vmatpush1.msra.mxu0 0.0
        %3126 = vmatprep.subr.mxu0 0.0
        %3127 = vmatpush1.msra.mxu0 0.0
        %3128 = vmatprep.subr.mxu0 0.0
        %3129 = vmatpush1.msra.mxu0 0.0
        %3130 = vmatprep.subr.mxu0 0.0
        %3131 = vmatpush1.msra.mxu0 0.0
        %3132 = vmatprep.subr.mxu0 0.0
        %3133 = vmatpush1.msra.mxu0 0.0
        %3134 = vmatprep.subr.mxu0 0.0
        %3135 = vmatpush1.msra.mxu0 0.0
        %3136 = vmatprep.subr.mxu0 0.0
        %3137 = vmatpush1.msra.mxu0 0.0
        %3138 = vmatprep.mubr.f32.mxu0 0.0
        %3139 = vmatmul.mubr.f32.gmra.mrb[0].mxu0 %v3072
        %v3140 = vpop.f32.mrb[0].mxu0
        %v3141 = vadd.f32 0.0, %v3140
        %v3142 = vpop.f32.mrb[0].mxu0
        %3143 = vdwg.mxu0
        %3144 = vrot.lane.b32.xlu0 %v2648, 104
        %v3145 = vpop.permute.xlu0 %3144
        %3146 = vrot.lane.b32.xlu0 %v2645, 72
        %v3147 = vpop.permute.xlu0 %3146
        %v3148 = vsel %vm775, %v3145, 0
        %v3150 = vsel %vm775, %v3147, 0
        %3152 = vmatprep.subr.mxu0 0.0
        %3153 = vmatpush1.xpose.msra.mxu0 %v3150
        %3154 = vmatprep.subr.mxu0 0.0
        %3155 = vmatpush1.xpose.msra.mxu0 0.0
        %3156 = vmatprep.subr.mxu0 0.0
        %3157 = vmatpush1.xpose.msra.mxu0 0.0
        %3158 = vmatprep.subr.mxu0 0.0
        %3159 = vmatpush1.xpose.msra.mxu0 0.0
        %3160 = vmatprep.subr.mxu0 0.0
        %3161 = vmatpush1.xpose.msra.mxu0 0.0
        %3162 = vmatprep.subr.mxu0 0.0
        %3163 = vmatpush1.xpose.msra.mxu0 0.0
        %3164 = vmatprep.subr.mxu0 0.0
        %3165 = vmatpush1.xpose.msra.mxu0 0.0
        %3166 = vmatprep.subr.mxu0 0.0
        %3167 = vmatpush1.xpose.msra.mxu0 0.0
        %3168 = vmatprep.subr.mxu0 0.0
        %3169 = vmatpush1.xpose.msra.mxu0 0.0
        %3170 = vmatprep.subr.mxu0 0.0
        %3171 = vmatpush1.xpose.msra.mxu0 0.0
        %3172 = vmatprep.subr.mxu0 0.0
        %3173 = vmatpush1.xpose.msra.mxu0 0.0
        %3174 = vmatprep.subr.mxu0 0.0
        %3175 = vmatpush1.xpose.msra.mxu0 0.0
        %3176 = vmatprep.subr.mxu0 0.0
        %3177 = vmatpush1.xpose.msra.mxu0 0.0
        %3178 = vmatprep.subr.mxu0 0.0
        %3179 = vmatpush1.xpose.msra.mxu0 0.0
        %3180 = vmatprep.subr.mxu0 0.0
        %3181 = vmatpush1.xpose.msra.mxu0 0.0
        %3182 = vmatprep.subr.mxu0 0.0
        %3183 = vmatpush1.xpose.msra.mxu0 0.0
        %3184 = vmatprep.subr.mxu0 0.0
        %3185 = vmatpush1.xpose.msra.mxu0 0.0
        %3186 = vmatprep.subr.mxu0 0.0
        %3187 = vmatpush1.xpose.msra.mxu0 0.0
        %3188 = vmatprep.subr.mxu0 0.0
        %3189 = vmatpush1.xpose.msra.mxu0 0.0
        %3190 = vmatprep.subr.mxu0 0.0
        %3191 = vmatpush1.xpose.msra.mxu0 0.0
        %3192 = vmatprep.subr.mxu0 0.0
        %3193 = vmatpush1.xpose.msra.mxu0 0.0
        %3194 = vmatprep.subr.mxu0 0.0
        %3195 = vmatpush1.xpose.msra.mxu0 0.0
        %3196 = vmatprep.subr.mxu0 0.0
        %3197 = vmatpush1.xpose.msra.mxu0 0.0
        %3198 = vmatprep.subr.mxu0 0.0
        %3199 = vmatpush1.xpose.msra.mxu0 0.0
        %3200 = vmatprep.subr.mxu0 0.0
        %3201 = vmatpush1.xpose.msra.mxu0 0.0
        %3202 = vmatprep.subr.mxu0 0.0
        %3203 = vmatpush1.xpose.msra.mxu0 0.0
        %3204 = vmatprep.subr.mxu0 0.0
        %3205 = vmatpush1.xpose.msra.mxu0 0.0
        %3206 = vmatprep.subr.mxu0 0.0
        %3207 = vmatpush1.xpose.msra.mxu0 0.0
        %3208 = vmatprep.subr.mxu0 0.0
        %3209 = vmatpush1.xpose.msra.mxu0 0.0
        %3210 = vmatprep.subr.mxu0 0.0
        %3211 = vmatpush1.xpose.msra.mxu0 0.0
        %3212 = vmatprep.subr.mxu0 0.0
        %3213 = vmatpush1.xpose.msra.mxu0 0.0
        %3214 = vmatprep.subr.mxu0 0.0
        %3215 = vmatpush1.xpose.msra.mxu0 0.0
        %3216 = vmatprep.mubr.f32.mxu0 0.0
        %3217 = vmatmul.mubr.f32.gmra.mrb[0].mxu0 %v3148
        %v3218 = vpop.f32.mrb[0].mxu0
        %v3219 = vadd.f32 0.0, %v3218
        %v3220 = vpop.f32.mrb[0].mxu0
        %3221 = vdwg.mxu0
        %v3222 = vsel %vm775, %v3219, -inf
        %3223 = vmax.xlane.f32.xlu0 %v3222
        %v3224 = vpop.xlane.xlu0 %3223
        %v3225 = vsub.f32 %v3219, %v3224
        %v3226 = vmul.f32 %v3225, 1.442695
        %v3227 = vpow.pop %v3226
        %v3228 = vsel %vm775, %v3227, 0.0
        %3229 = vadd.xlane.f32.xlu0 %v3228
        %v3230 = vpop.xlane.xlu0 %3229
        %v3231 = vrcp.pop %v3230
        %v3232 = vmul.f32 %v3227, %v3231
        %3233 = vrot.lane.b32.xlu0 %v2645, 40
        %v3234 = vpop.permute.xlu0 %3233
        %v3237 = vsel %vm775, %v3232, 0
        %3239 = vmatprep.subr.mxu0 0.0
        %3240 = vmatpush1.msra.mxu0 %v3234
        %3241 = vmatprep.subr.mxu0 0.0
        %3242 = vmatpush1.msra.mxu0 0.0
        %3243 = vmatprep.subr.mxu0 0.0
        %3244 = vmatpush1.msra.mxu0 0.0
        %3245 = vmatprep.subr.mxu0 0.0
        %3246 = vmatpush1.msra.mxu0 0.0
        %3247 = vmatprep.subr.mxu0 0.0
        %3248 = vmatpush1.msra.mxu0 0.0
        %3249 = vmatprep.subr.mxu0 0.0
        %3250 = vmatpush1.msra.mxu0 0.0
        %3251 = vmatprep.subr.mxu0 0.0
        %3252 = vmatpush1.msra.mxu0 0.0
        %3253 = vmatprep.subr.mxu0 0.0
        %3254 = vmatpush1.msra.mxu0 0.0
        %3255 = vmatprep.subr.mxu0 0.0
        %3256 = vmatpush1.msra.mxu0 0.0
        %3257 = vmatprep.subr.mxu0 0.0
        %3258 = vmatpush1.msra.mxu0 0.0
        %3259 = vmatprep.subr.mxu0 0.0
        %3260 = vmatpush1.msra.mxu0 0.0
        %3261 = vmatprep.subr.mxu0 0.0
        %3262 = vmatpush1.msra.mxu0 0.0
        %3263 = vmatprep.subr.mxu0 0.0
        %3264 = vmatpush1.msra.mxu0 0.0
        %3265 = vmatprep.subr.mxu0 0.0
        %3266 = vmatpush1.msra.mxu0 0.0
        %3267 = vmatprep.subr.mxu0 0.0
        %3268 = vmatpush1.msra.mxu0 0.0
        %3269 = vmatprep.subr.mxu0 0.0
        %3270 = vmatpush1.msra.mxu0 0.0
        %3271 = vmatprep.subr.mxu0 0.0
        %3272 = vmatpush1.msra.mxu0 0.0
        %3273 = vmatprep.subr.mxu0 0.0
        %3274 = vmatpush1.msra.mxu0 0.0
        %3275 = vmatprep.subr.mxu0 0.0
        %3276 = vmatpush1.msra.mxu0 0.0
        %3277 = vmatprep.subr.mxu0 0.0
        %3278 = vmatpush1.msra.mxu0 0.0
        %3279 = vmatprep.subr.mxu0 0.0
        %3280 = vmatpush1.msra.mxu0 0.0
        %3281 = vmatprep.subr.mxu0 0.0
        %3282 = vmatpush1.msra.mxu0 0.0
        %3283 = vmatprep.subr.mxu0 0.0
        %3284 = vmatpush1.msra.mxu0 0.0
        %3285 = vmatprep.subr.mxu0 0.0
        %3286 = vmatpush1.msra.mxu0 0.0
        %3287 = vmatprep.subr.mxu0 0.0
        %3288 = vmatpush1.msra.mxu0 0.0
        %3289 = vmatprep.subr.mxu0 0.0
        %3290 = vmatpush1.msra.mxu0 0.0
        %3291 = vmatprep.subr.mxu0 0.0
        %3292 = vmatpush1.msra.mxu0 0.0
        %3293 = vmatprep.subr.mxu0 0.0
        %3294 = vmatpush1.msra.mxu0 0.0
        %3295 = vmatprep.subr.mxu0 0.0
        %3296 = vmatpush1.msra.mxu0 0.0
        %3297 = vmatprep.subr.mxu0 0.0
        %3298 = vmatpush1.msra.mxu0 0.0
        %3299 = vmatprep.subr.mxu0 0.0
        %3300 = vmatpush1.msra.mxu0 0.0
        %3301 = vmatprep.subr.mxu0 0.0
        %3302 = vmatpush1.msra.mxu0 0.0
        %3303 = vmatprep.mubr.f32.mxu0 0.0
        %3304 = vmatmul.mubr.f32.gmra.mrb[0].mxu0 %v3237
        %v3305 = vpop.f32.mrb[0].mxu0
        %v3306 = vadd.f32 0.0, %v3305
        %v3307 = vpop.f32.mrb[0].mxu0
        %3308 = vdwg.mxu0
        %3310 = vrot.lane.b32.xlu0 %v2976, 8
        %v3311 = vpop.permute.xlu0 %3310
        %3314 = vrot.lane.b32.xlu0 %v3141, 16
        %v3315 = vpop.permute.xlu0 %3314
        %3318 = vrot.lane.b32.xlu0 %v3306, 24
        %v3319 = vpop.permute.xlu0 %3318
        %v3321 = vsel %vm775, %v2811, %v3311
        %v3322 = vsel %vm1446, %v3321, %v3315
        %v3323 = vsel %vm1448, %v3322, %v3319
        %s3324 = scalar_lea.vmem %s6, 32
        %v3325 = vld [vmem:[%s3324] sm:$0xff]
        %v3326 = vld [vmem:[%s3324 + $0x8] sm:$0xff]
        %v3327 = vld [vmem:[%s3324 + $0x10] sm:$0xff]
        %v3328 = vld [vmem:[%s3324 + $0x18] sm:$0xff]
        %v3330 = vsel %vm665, %v3323, 0
        %3332 = vmatprep.subr.mxu0 0.0
        %3333 = vmatpush1.msra.mxu0 %v3325
        %3334 = vmatprep.subr.mxu0 0.0
        %3335 = vmatpush1.msra.mxu0 %v3326
        %3336 = vmatprep.subr.mxu0 0.0
        %3337 = vmatpush1.msra.mxu0 %v3327
        %3338 = vmatprep.subr.mxu0 0.0
        %3339 = vmatpush1.msra.mxu0 %v3328
        %3340 = vmatprep.subr.mxu0 0.0
        %3341 = vmatpush1.msra.mxu0 0.0
        %3342 = vmatprep.subr.mxu0 0.0
        %3343 = vmatpush1.msra.mxu0 0.0
        %3344 = vmatprep.subr.mxu0 0.0
        %3345 = vmatpush1.msra.mxu0 0.0
        %3346 = vmatprep.subr.mxu0 0.0
        %3347 = vmatpush1.msra.mxu0 0.0
        %3348 = vmatprep.subr.mxu0 0.0
        %3349 = vmatpush1.msra.mxu0 0.0
        %3350 = vmatprep.subr.mxu0 0.0
        %3351 = vmatpush1.msra.mxu0 0.0
        %3352 = vmatprep.subr.mxu0 0.0
        %3353 = vmatpush1.msra.mxu0 0.0
        %3354 = vmatprep.subr.mxu0 0.0
        %3355 = vmatpush1.msra.mxu0 0.0
        %3356 = vmatprep.subr.mxu0 0.0
        %3357 = vmatpush1.msra.mxu0 0.0
        %3358 = vmatprep.subr.mxu0 0.0
        %3359 = vmatpush1.msra.mxu0 0.0
        %3360 = vmatprep.subr.mxu0 0.0
        %3361 = vmatpush1.msra.mxu0 0.0
        %3362 = vmatprep.subr.mxu0 0.0
        %3363 = vmatpush1.msra.mxu0 0.0
        %3364 = vmatprep.subr.mxu0 0.0
        %3365 = vmatpush1.msra.mxu0 0.0
        %3366 = vmatprep.subr.mxu0 0.0
        %3367 = vmatpush1.msra.mxu0 0.0
        %3368 = vmatprep.subr.mxu0 0.0
        %3369 = vmatpush1.msra.mxu0 0.0
        %3370 = vmatprep.subr.mxu0 0.0
        %3371 = vmatpush1.msra.mxu0 0.0
        %3372 = vmatprep.subr.mxu0 0.0
        %3373 = vmatpush1.msra.mxu0 0.0
        %3374 = vmatprep.subr.mxu0 0.0
        %3375 = vmatpush1.msra.mxu0 0.0
        %3376 = vmatprep.subr.mxu0 0.0
        %3377 = vmatpush1.msra.mxu0 0.0
        %3378 = vmatprep.subr.mxu0 0.0
        %3379 = vmatpush1.msra.mxu0 0.0
        %3380 = vmatprep.subr.mxu0 0.0
        %3381 = vmatpush1.msra.mxu0 0.0
        %3382 = vmatprep.subr.mxu0 0.0
        %3383 = vmatpush1.msra.mxu0 0.0
        %3384 = vmatprep.subr.mxu0 0.0
        %3385 = vmatpush1.msra.mxu0 0.0
        %3386 = vmatprep.subr.mxu0 0.0
        %3387 = vmatpush1.msra.mxu0 0.0
        %3388 = vmatprep.subr.mxu0 0.0
        %3389 = vmatpush1.msra.mxu0 0.0
        %3390 = vmatprep.subr.mxu0 0.0
        %3391 = vmatpush1.msra.mxu0 0.0
        %3392 = vmatprep.subr.mxu0 0.0
        %3393 = vmatpush1.msra.mxu0 0.0
        %3394 = vmatprep.subr.mxu0 0.0
        %3395 = vmatpush1.msra.mxu0 0.0
        %3396 = vmatprep.mubr.f32.mxu0 0.0
        %3397 = vmatmul.mubr.f32.gmra.mrb[0].mxu0 %v3330
        %v3398 = vpop.f32.mrb[0].mxu0
        %v3399 = vadd.f32 0.0, %v3398
        %v3400 = vpop.f32.mrb[0].mxu0
        %3401 = vdwg.mxu0
        %v3402 = vadd.f32 %v2538, %v3399
        %s3403 = scalar_lea.vmem %s7, 1
        %v3404 = vld [vmem:[%s3403] sm:$0x1]
        %v3406 = vlaneseq
        %v3407 = vshrl.u32 %v3406, 7
        %v3408 = vsub.s32 0, %v3407
        %v3409 = vrot.slane %v3404, %v3408
        %v3411 = vadd.f32 %v3402, %v3409
        %s3412 = scalar_lea.vmem %s8, 1
        %v3413 = vld [vmem:[%s3412] sm:$0x1]
        %s3414 = scalar_lea.vmem %s9, 1
        %v3415 = vld [vmem:[%s3414] sm:$0x1]
        %v3416 = vsel %vm665, %v3411, 0.0
        %3417 = vadd.xlane.f32.xlu0 %v3416
        %v3418 = vpop.xlane.xlu0 %3417
        %v3419 = vmul.f32 %v3418, %v669
        %v3420 = vsub.f32 %v3411, %v3419
        %v3421 = vmul.f32 %v3420, %v3420
        %v3422 = vsel %vm665, %v3421, 0.0
        %3423 = vadd.xlane.f32.xlu0 %v3422
        %v3424 = vpop.xlane.xlu0 %3423
        %v3425 = vmul.f32 %v3424, %v669
        %v3426 = vadd.f32 %v3425, 1e-05
        %v3427 = vrsqrt.pop %v3426
        %v3428 = vmul.f32 %v3420, %v3427
        %v3430 = vlaneseq
        %v3431 = vshrl.u32 %v3430, 7
        %v3432 = vsub.s32 0, %v3431
        %v3433 = vrot.slane %v3413, %v3432
        %v3435 = vmul.f32 %v3428, %v3433
        %v3437 = vlaneseq
        %v3438 = vshrl.u32 %v3437, 7
        %v3439 = vsub.s32 0, %v3438
        %v3440 = vrot.slane %v3415, %v3439
        %v3442 = vadd.f32 %v3435, %v3440
        %v3444 = vsel %vm775, %v3442, 0
        %3446 = vmatprep.subr.mxu0 0.0
        %3447 = vmatpush1.xpose.msra.mxu0 %v1569
        %3448 = vmatprep.subr.mxu0 0.0
        %3449 = vmatpush1.xpose.msra.mxu0 0.0
        %3450 = vmatprep.subr.mxu0 0.0
        %3451 = vmatpush1.xpose.msra.mxu0 0.0
        %3452 = vmatprep.subr.mxu0 0.0
        %3453 = vmatpush1.xpose.msra.mxu0 0.0
        %3454 = vmatprep.subr.mxu0 0.0
        %3455 = vmatpush1.xpose.msra.mxu0 0.0
        %3456 = vmatprep.subr.mxu0 0.0
        %3457 = vmatpush1.xpose.msra.mxu0 0.0
        %3458 = vmatprep.subr.mxu0 0.0
        %3459 = vmatpush1.xpose.msra.mxu0 0.0
        %3460 = vmatprep.subr.mxu0 0.0
        %3461 = vmatpush1.xpose.msra.mxu0 0.0
        %3462 = vmatprep.subr.mxu0 0.0
        %3463 = vmatpush1.xpose.msra.mxu0 0.0
        %3464 = vmatprep.subr.mxu0 0.0
        %3465 = vmatpush1.xpose.msra.mxu0 0.0
        %3466 = vmatprep.subr.mxu0 0.0
        %3467 = vmatpush1.xpose.msra.mxu0 0.0
        %3468 = vmatprep.subr.mxu0 0.0
        %3469 = vmatpush1.xpose.msra.mxu0 0.0
        %3470 = vmatprep.subr.mxu0 0.0
        %3471 = vmatpush1.xpose.msra.mxu0 0.0
        %3472 = vmatprep.subr.mxu0 0.0
        %3473 = vmatpush1.xpose.msra.mxu0 0.0
        %3474 = vmatprep.subr.mxu0 0.0
        %3475 = vmatpush1.xpose.msra.mxu0 0.0
        %3476 = vmatprep.subr.mxu0 0.0
        %3477 = vmatpush1.xpose.msra.mxu0 0.0
        %3478 = vmatprep.subr.mxu0 0.0
        %3479 = vmatpush1.xpose.msra.mxu0 0.0
        %3480 = vmatprep.subr.mxu0 0.0
        %3481 = vmatpush1.xpose.msra.mxu0 0.0
        %3482 = vmatprep.subr.mxu0 0.0
        %3483 = vmatpush1.xpose.msra.mxu0 0.0
        %3484 = vmatprep.subr.mxu0 0.0
        %3485 = vmatpush1.xpose.msra.mxu0 0.0
        %3486 = vmatprep.subr.mxu0 0.0
        %3487 = vmatpush1.xpose.msra.mxu0 0.0
        %3488 = vmatprep.subr.mxu0 0.0
        %3489 = vmatpush1.xpose.msra.mxu0 0.0
        %3490 = vmatprep.subr.mxu0 0.0
        %3491 = vmatpush1.xpose.msra.mxu0 0.0
        %3492 = vmatprep.subr.mxu0 0.0
        %3493 = vmatpush1.xpose.msra.mxu0 0.0
        %3494 = vmatprep.subr.mxu0 0.0
        %3495 = vmatpush1.xpose.msra.mxu0 0.0
        %3496 = vmatprep.subr.mxu0 0.0
        %3497 = vmatpush1.xpose.msra.mxu0 0.0
        %3498 = vmatprep.subr.mxu0 0.0
        %3499 = vmatpush1.xpose.msra.mxu0 0.0
        %3500 = vmatprep.subr.mxu0 0.0
        %3501 = vmatpush1.xpose.msra.mxu0 0.0
        %3502 = vmatprep.subr.mxu0 0.0
        %3503 = vmatpush1.xpose.msra.mxu0 0.0
        %3504 = vmatprep.subr.mxu0 0.0
        %3505 = vmatpush1.xpose.msra.mxu0 0.0
        %3506 = vmatprep.subr.mxu0 0.0
        %3507 = vmatpush1.xpose.msra.mxu0 0.0
        %3508 = vmatprep.subr.mxu0 0.0
        %3509 = vmatpush1.xpose.msra.mxu0 0.0
        %3510 = vmatprep.mubr.f32.mxu0 0.0
        %3511 = vmatmul.mubr.f32.gmra.mrb[0].mxu0 %v3444
        %v3512 = vpop.f32.mrb[0].mxu0
        %v3513 = vadd.f32 0.0, %v3512
        %v3514 = vpop.f32.mrb[0].mxu0
        %3515 = vdwg.mxu0
        %v3516 = vsel %vm775, %v3513, -inf
        %3517 = vmax.xlane.f32.xlu0 %v3516
        %v3518 = vpop.xlane.xlu0 %3517
        %v3519 = vsub.f32 %v3513, %v3518
        %v3520 = vmul.f32 %v3519, 1.442695
        %v3521 = vpow.pop %v3520
        %v3522 = vsel %vm775, %v3521, 0.0
        %3523 = vadd.xlane.f32.xlu0 %v3522
        %v3524 = vpop.xlane.xlu0 %3523
        %v3525 = vrcp.pop %v3524
        %v3526 = vmul.f32 %v3521, %v3525
        %v3528 = vsel %vm775, %v3526, 0
        %3530 = vmatprep.subr.mxu0 0.0
        %3531 = vmatpush1.msra.mxu0 %v661
        %3532 = vmatprep.subr.mxu0 0.0
        %3533 = vmatpush1.msra.mxu0 0.0
        %3534 = vmatprep.subr.mxu0 0.0
        %3535 = vmatpush1.msra.mxu0 0.0
        %3536 = vmatprep.subr.mxu0 0.0
        %3537 = vmatpush1.msra.mxu0 0.0
        %3538 = vmatprep.subr.mxu0 0.0
        %3539 = vmatpush1.msra.mxu0 0.0
        %3540 = vmatprep.subr.mxu0 0.0
        %3541 = vmatpush1.msra.mxu0 0.0
        %3542 = vmatprep.subr.mxu0 0.0
        %3543 = vmatpush1.msra.mxu0 0.0
        %3544 = vmatprep.subr.mxu0 0.0
        %3545 = vmatpush1.msra.mxu0 0.0
        %3546 = vmatprep.subr.mxu0 0.0
        %3547 = vmatpush1.msra.mxu0 0.0
        %3548 = vmatprep.subr.mxu0 0.0
        %3549 = vmatpush1.msra.mxu0 0.0
        %3550 = vmatprep.subr.mxu0 0.0
        %3551 = vmatpush1.msra.mxu0 0.0
        %3552 = vmatprep.subr.mxu0 0.0
        %3553 = vmatpush1.msra.mxu0 0.0
        %3554 = vmatprep.subr.mxu0 0.0
        %3555 = vmatpush1.msra.mxu0 0.0
        %3556 = vmatprep.subr.mxu0 0.0
        %3557 = vmatpush1.msra.mxu0 0.0
        %3558 = vmatprep.subr.mxu0 0.0
        %3559 = vmatpush1.msra.mxu0 0.0
        %3560 = vmatprep.subr.mxu0 0.0
        %3561 = vmatpush1.msra.mxu0 0.0
        %3562 = vmatprep.subr.mxu0 0.0
        %3563 = vmatpush1.msra.mxu0 0.0
        %3564 = vmatprep.subr.mxu0 0.0
        %3565 = vmatpush1.msra.mxu0 0.0
        %3566 = vmatprep.subr.mxu0 0.0
        %3567 = vmatpush1.msra.mxu0 0.0
        %3568 = vmatprep.subr.mxu0 0.0
        %3569 = vmatpush1.msra.mxu0 0.0
        %3570 = vmatprep.subr.mxu0 0.0
        %3571 = vmatpush1.msra.mxu0 0.0
        %3572 = vmatprep.subr.mxu0 0.0
        %3573 = vmatpush1.msra.mxu0 0.0
        %3574 = vmatprep.subr.mxu0 0.0
        %3575 = vmatpush1.msra.mxu0 0.0
        %3576 = vmatprep.subr.mxu0 0.0
        %3577 = vmatpush1.msra.mxu0 0.0
        %3578 = vmatprep.subr.mxu0 0.0
        %3579 = vmatpush1.msra.mxu0 0.0
        %3580 = vmatprep.subr.mxu0 0.0
        %3581 = vmatpush1.msra.mxu0 0.0
        %3582 = vmatprep.subr.mxu0 0.0
        %3583 = vmatpush1.msra.mxu0 0.0
        %3584 = vmatprep.subr.mxu0 0.0
        %3585 = vmatpush1.msra.mxu0 0.0
        %3586 = vmatprep.subr.mxu0 0.0
        %3587 = vmatpush1.msra.mxu0 0.0
        %3588 = vmatprep.subr.mxu0 0.0
        %3589 = vmatpush1.msra.mxu0 0.0
        %3590 = vmatprep.subr.mxu0 0.0
        %3591 = vmatpush1.msra.mxu0 0.0
        %3592 = vmatprep.subr.mxu0 0.0
        %3593 = vmatpush1.msra.mxu0 0.0
        %3594 = vmatprep.mubr.f32.mxu0 0.0
        %3595 = vmatmul.mubr.f32.gmra.mrb[0].mxu0 %v3528
        %v3596 = vpop.f32.mrb[0].mxu0
        %v3597 = vadd.f32 0.0, %v3596
        %v3598 = vpop.f32.mrb[0].mxu0
        %3599 = vdwg.mxu0
        %3600 = vrot.lane.b32.xlu0 %v3442, 120
        %v3601 = vpop.permute.xlu0 %3600
        %v3602 = vsel %vm775, %v3601, 0
        %3604 = vmatprep.subr.mxu0 0.0
        %3605 = vmatpush1.xpose.msra.mxu0 %v1731
        %3606 = vmatprep.subr.mxu0 0.0
        %3607 = vmatpush1.xpose.msra.mxu0 0.0
        %3608 = vmatprep.subr.mxu0 0.0
        %3609 = vmatpush1.xpose.msra.mxu0 0.0
        %3610 = vmatprep.subr.mxu0 0.0
        %3611 = vmatpush1.xpose.msra.mxu0 0.0
        %3612 = vmatprep.subr.mxu0 0.0
        %3613 = vmatpush1.xpose.msra.mxu0 0.0
        %3614 = vmatprep.subr.mxu0 0.0
        %3615 = vmatpush1.xpose.msra.mxu0 0.0
        %3616 = vmatprep.subr.mxu0 0.0
        %3617 = vmatpush1.xpose.msra.mxu0 0.0
        %3618 = vmatprep.subr.mxu0 0.0
        %3619 = vmatpush1.xpose.msra.mxu0 0.0
        %3620 = vmatprep.subr.mxu0 0.0
        %3621 = vmatpush1.xpose.msra.mxu0 0.0
        %3622 = vmatprep.subr.mxu0 0.0
        %3623 = vmatpush1.xpose.msra.mxu0 0.0
        %3624 = vmatprep.subr.mxu0 0.0
        %3625 = vmatpush1.xpose.msra.mxu0 0.0
        %3626 = vmatprep.subr.mxu0 0.0
        %3627 = vmatpush1.xpose.msra.mxu0 0.0
        %3628 = vmatprep.subr.mxu0 0.0
        %3629 = vmatpush1.xpose.msra.mxu0 0.0
        %3630 = vmatprep.subr.mxu0 0.0
        %3631 = vmatpush1.xpose.msra.mxu0 0.0
        %3632 = vmatprep.subr.mxu0 0.0
        %3633 = vmatpush1.xpose.msra.mxu0 0.0
        %3634 = vmatprep.subr.mxu0 0.0
        %3635 = vmatpush1.xpose.msra.mxu0 0.0
        %3636 = vmatprep.subr.mxu0 0.0
        %3637 = vmatpush1.xpose.msra.mxu0 0.0
        %3638 = vmatprep.subr.mxu0 0.0
        %3639 = vmatpush1.xpose.msra.mxu0 0.0
        %3640 = vmatprep.subr.mxu0 0.0
        %3641 = vmatpush1.xpose.msra.mxu0 0.0
        %3642 = vmatprep.subr.mxu0 0.0
        %3643 = vmatpush1.xpose.msra.mxu0 0.0
        %3644 = vmatprep.subr.mxu0 0.0
        %3645 = vmatpush1.xpose.msra.mxu0 0.0
        %3646 = vmatprep.subr.mxu0 0.0
        %3647 = vmatpush1.xpose.msra.mxu0 0.0
        %3648 = vmatprep.subr.mxu0 0.0
        %3649 = vmatpush1.xpose.msra.mxu0 0.0
        %3650 = vmatprep.subr.mxu0 0.0
        %3651 = vmatpush1.xpose.msra.mxu0 0.0
        %3652 = vmatprep.subr.mxu0 0.0
        %3653 = vmatpush1.xpose.msra.mxu0 0.0
        %3654 = vmatprep.subr.mxu0 0.0
        %3655 = vmatpush1.xpose.msra.mxu0 0.0
        %3656 = vmatprep.subr.mxu0 0.0
        %3657 = vmatpush1.xpose.msra.mxu0 0.0
        %3658 = vmatprep.subr.mxu0 0.0
        %3659 = vmatpush1.xpose.msra.mxu0 0.0
        %3660 = vmatprep.subr.mxu0 0.0
        %3661 = vmatpush1.xpose.msra.mxu0 0.0
        %3662 = vmatprep.subr.mxu0 0.0
        %3663 = vmatpush1.xpose.msra.mxu0 0.0
        %3664 = vmatprep.subr.mxu0 0.0
        %3665 = vmatpush1.xpose.msra.mxu0 0.0
        %3666 = vmatprep.subr.mxu0 0.0
        %3667 = vmatpush1.xpose.msra.mxu0 0.0
        %3668 = vmatprep.mubr.f32.mxu0 0.0
        %3669 = vmatmul.mubr.f32.gmra.mrb[0].mxu0 %v3602
        %v3670 = vpop.f32.mrb[0].mxu0
        %v3671 = vadd.f32 0.0, %v3670
        %v3672 = vpop.f32.mrb[0].mxu0
        %3673 = vdwg.mxu0
        %v3674 = vsel %vm775, %v3671, -inf
        %3675 = vmax.xlane.f32.xlu0 %v3674
        %v3676 = vpop.xlane.xlu0 %3675
        %v3677 = vsub.f32 %v3671, %v3676
        %v3678 = vmul.f32 %v3677, 1.442695
        %v3679 = vpow.pop %v3678
        %v3680 = vsel %vm775, %v3679, 0.0
        %3681 = vadd.xlane.f32.xlu0 %v3680
        %v3682 = vpop.xlane.xlu0 %3681
        %v3683 = vrcp.pop %v3682
        %v3684 = vmul.f32 %v3679, %v3683
        %v3686 = vsel %vm775, %v3684, 0
        %3688 = vmatprep.subr.mxu0 0.0
        %3689 = vmatpush1.msra.mxu0 %v1816
        %3690 = vmatprep.subr.mxu0 0.0
        %3691 = vmatpush1.msra.mxu0 0.0
        %3692 = vmatprep.subr.mxu0 0.0
        %3693 = vmatpush1.msra.mxu0 0.0
        %3694 = vmatprep.subr.mxu0 0.0
        %3695 = vmatpush1.msra.mxu0 0.0
        %3696 = vmatprep.subr.mxu0 0.0
        %3697 = vmatpush1.msra.mxu0 0.0
        %3698 = vmatprep.subr.mxu0 0.0
        %3699 = vmatpush1.msra.mxu0 0.0
        %3700 = vmatprep.subr.mxu0 0.0
        %3701 = vmatpush1.msra.mxu0 0.0
        %3702 = vmatprep.subr.mxu0 0.0
        %3703 = vmatpush1.msra.mxu0 0.0
        %3704 = vmatprep.subr.mxu0 0.0
        %3705 = vmatpush1.msra.mxu0 0.0
        %3706 = vmatprep.subr.mxu0 0.0
        %3707 = vmatpush1.msra.mxu0 0.0
        %3708 = vmatprep.subr.mxu0 0.0
        %3709 = vmatpush1.msra.mxu0 0.0
        %3710 = vmatprep.subr.mxu0 0.0
        %3711 = vmatpush1.msra.mxu0 0.0
        %3712 = vmatprep.subr.mxu0 0.0
        %3713 = vmatpush1.msra.mxu0 0.0
        %3714 = vmatprep.subr.mxu0 0.0
        %3715 = vmatpush1.msra.mxu0 0.0
        %3716 = vmatprep.subr.mxu0 0.0
        %3717 = vmatpush1.msra.mxu0 0.0
        %3718 = vmatprep.subr.mxu0 0.0
        %3719 = vmatpush1.msra.mxu0 0.0
        %3720 = vmatprep.subr.mxu0 0.0
        %3721 = vmatpush1.msra.mxu0 0.0
        %3722 = vmatprep.subr.mxu0 0.0
        %3723 = vmatpush1.msra.mxu0 0.0
        %3724 = vmatprep.subr.mxu0 0.0
        %3725 = vmatpush1.msra.mxu0 0.0
        %3726 = vmatprep.subr.mxu0 0.0
        %3727 = vmatpush1.msra.mxu0 0.0
        %3728 = vmatprep.subr.mxu0 0.0
        %3729 = vmatpush1.msra.mxu0 0.0
        %3730 = vmatprep.subr.mxu0 0.0
        %3731 = vmatpush1.msra.mxu0 0.0
        %3732 = vmatprep.subr.mxu0 0.0
        %3733 = vmatpush1.msra.mxu0 0.0
        %3734 = vmatprep.subr.mxu0 0.0
        %3735 = vmatpush1.msra.mxu0 0.0
        %3736 = vmatprep.subr.mxu0 0.0
        %3737 = vmatpush1.msra.mxu0 0.0
        %3738 = vmatprep.subr.mxu0 0.0
        %3739 = vmatpush1.msra.mxu0 0.0
        %3740 = vmatprep.subr.mxu0 0.0
        %3741 = vmatpush1.msra.mxu0 0.0
        %3742 = vmatprep.subr.mxu0 0.0
        %3743 = vmatpush1.msra.mxu0 0.0
        %3744 = vmatprep.subr.mxu0 0.0
        %3745 = vmatpush1.msra.mxu0 0.0
        %3746 = vmatprep.subr.mxu0 0.0
        %3747 = vmatpush1.msra.mxu0 0.0
        %3748 = vmatprep.subr.mxu0 0.0
        %3749 = vmatpush1.msra.mxu0 0.0
        %3750 = vmatprep.subr.mxu0 0.0
        %3751 = vmatpush1.msra.mxu0 0.0
        %3752 = vmatprep.mubr.f32.mxu0 0.0
        %3753 = vmatmul.mubr.f32.gmra.mrb[0].mxu0 %v3686
        %v3754 = vpop.f32.mrb[0].mxu0
        %v3755 = vadd.f32 0.0, %v3754
        %v3756 = vpop.f32.mrb[0].mxu0
        %3757 = vdwg.mxu0
        %3758 = vrot.lane.b32.xlu0 %v3442, 112
        %v3759 = vpop.permute.xlu0 %3758
        %v3760 = vsel %vm775, %v3759, 0
        %3762 = vmatprep.subr.mxu0 0.0
        %3763 = vmatpush1.xpose.msra.mxu0 %v1897
        %3764 = vmatprep.subr.mxu0 0.0
        %3765 = vmatpush1.xpose.msra.mxu0 0.0
        %3766 = vmatprep.subr.mxu0 0.0
        %3767 = vmatpush1.xpose.msra.mxu0 0.0
        %3768 = vmatprep.subr.mxu0 0.0
        %3769 = vmatpush1.xpose.msra.mxu0 0.0
        %3770 = vmatprep.subr.mxu0 0.0
        %3771 = vmatpush1.xpose.msra.mxu0 0.0
        %3772 = vmatprep.subr.mxu0 0.0
        %3773 = vmatpush1.xpose.msra.mxu0 0.0
        %3774 = vmatprep.subr.mxu0 0.0
        %3775 = vmatpush1.xpose.msra.mxu0 0.0
        %3776 = vmatprep.subr.mxu0 0.0
        %3777 = vmatpush1.xpose.msra.mxu0 0.0
        %3778 = vmatprep.subr.mxu0 0.0
        %3779 = vmatpush1.xpose.msra.mxu0 0.0
        %3780 = vmatprep.subr.mxu0 0.0
        %3781 = vmatpush1.xpose.msra.mxu0 0.0
        %3782 = vmatprep.subr.mxu0 0.0
        %3783 = vmatpush1.xpose.msra.mxu0 0.0
        %3784 = vmatprep.subr.mxu0 0.0
        %3785 = vmatpush1.xpose.msra.mxu0 0.0
        %3786 = vmatprep.subr.mxu0 0.0
        %3787 = vmatpush1.xpose.msra.mxu0 0.0
        %3788 = vmatprep.subr.mxu0 0.0
        %3789 = vmatpush1.xpose.msra.mxu0 0.0
        %3790 = vmatprep.subr.mxu0 0.0
        %3791 = vmatpush1.xpose.msra.mxu0 0.0
        %3792 = vmatprep.subr.mxu0 0.0
        %3793 = vmatpush1.xpose.msra.mxu0 0.0
        %3794 = vmatprep.subr.mxu0 0.0
        %3795 = vmatpush1.xpose.msra.mxu0 0.0
        %3796 = vmatprep.subr.mxu0 0.0
        %3797 = vmatpush1.xpose.msra.mxu0 0.0
        %3798 = vmatprep.subr.mxu0 0.0
        %3799 = vmatpush1.xpose.msra.mxu0 0.0
        %3800 = vmatprep.subr.mxu0 0.0
        %3801 = vmatpush1.xpose.msra.mxu0 0.0
        %3802 = vmatprep.subr.mxu0 0.0
        %3803 = vmatpush1.xpose.msra.mxu0 0.0
        %3804 = vmatprep.subr.mxu0 0.0
        %3805 = vmatpush1.xpose.msra.mxu0 0.0
        %3806 = vmatprep.subr.mxu0 0.0
        %3807 = vmatpush1.xpose.msra.mxu0 0.0
        %3808 = vmatprep.subr.mxu0 0.0
        %3809 = vmatpush1.xpose.msra.mxu0 0.0
        %3810 = vmatprep.subr.mxu0 0.0
        %3811 = vmatpush1.xpose.msra.mxu0 0.0
        %3812 = vmatprep.subr.mxu0 0.0
        %3813 = vmatpush1.xpose.msra.mxu0 0.0
        %3814 = vmatprep.subr.mxu0 0.0
        %3815 = vmatpush1.xpose.msra.mxu0 0.0
        %3816 = vmatprep.subr.mxu0 0.0
        %3817 = vmatpush1.xpose.msra.mxu0 0.0
        %3818 = vmatprep.subr.mxu0 0.0
        %3819 = vmatpush1.xpose.msra.mxu0 0.0
        %3820 = vmatprep.subr.mxu0 0.0
        %3821 = vmatpush1.xpose.msra.mxu0 0.0
        %3822 = vmatprep.subr.mxu0 0.0
        %3823 = vmatpush1.xpose.msra.mxu0 0.0
        %3824 = vmatprep.subr.mxu0 0.0
        %3825 = vmatpush1.xpose.msra.mxu0 0.0
        %3826 = vmatprep.mubr.f32.mxu0 0.0
        %3827 = vmatmul.mubr.f32.gmra.mrb[0].mxu0 %v3760
        %v3828 = vpop.f32.mrb[0].mxu0
        %v3829 = vadd.f32 0.0, %v3828
        %v3830 = vpop.f32.mrb[0].mxu0
        %3831 = vdwg.mxu0
        %v3832 = vsel %vm775, %v3829, -inf
        %3833 = vmax.xlane.f32.xlu0 %v3832
        %v3834 = vpop.xlane.xlu0 %3833
        %v3835 = vsub.f32 %v3829, %v3834
        %v3836 = vmul.f32 %v3835, 1.442695
        %v3837 = vpow.pop %v3836
        %v3838 = vsel %vm775, %v3837, 0.0
        %3839 = vadd.xlane.f32.xlu0 %v3838
        %v3840 = vpop.xlane.xlu0 %3839
        %v3841 = vrcp.pop %v3840
        %v3842 = vmul.f32 %v3837, %v3841
        %v3844 = vsel %vm775, %v3842, 0
        %3846 = vmatprep.subr.mxu0 0.0
        %3847 = vmatpush1.msra.mxu0 %v1981
        %3848 = vmatprep.subr.mxu0 0.0
        %3849 = vmatpush1.msra.mxu0 0.0
        %3850 = vmatprep.subr.mxu0 0.0
        %3851 = vmatpush1.msra.mxu0 0.0
        %3852 = vmatprep.subr.mxu0 0.0
        %3853 = vmatpush1.msra.mxu0 0.0
        %3854 = vmatprep.subr.mxu0 0.0
        %3855 = vmatpush1.msra.mxu0 0.0
        %3856 = vmatprep.subr.mxu0 0.0
        %3857 = vmatpush1.msra.mxu0 0.0
        %3858 = vmatprep.subr.mxu0 0.0
        %3859 = vmatpush1.msra.mxu0 0.0
        %3860 = vmatprep.subr.mxu0 0.0
        %3861 = vmatpush1.msra.mxu0 0.0
        %3862 = vmatprep.subr.mxu0 0.0
        %3863 = vmatpush1.msra.mxu0 0.0
        %3864 = vmatprep.subr.mxu0 0.0
        %3865 = vmatpush1.msra.mxu0 0.0
        %3866 = vmatprep.subr.mxu0 0.0
        %3867 = vmatpush1.msra.mxu0 0.0
        %3868 = vmatprep.subr.mxu0 0.0
        %3869 = vmatpush1.msra.mxu0 0.0
        %3870 = vmatprep.subr.mxu0 0.0
        %3871 = vmatpush1.msra.mxu0 0.0
        %3872 = vmatprep.subr.mxu0 0.0
        %3873 = vmatpush1.msra.mxu0 0.0
        %3874 = vmatprep.subr.mxu0 0.0
        %3875 = vmatpush1.msra.mxu0 0.0
        %3876 = vmatprep.subr.mxu0 0.0
        %3877 = vmatpush1.msra.mxu0 0.0
        %3878 = vmatprep.subr.mxu0 0.0
        %3879 = vmatpush1.msra.mxu0 0.0
        %3880 = vmatprep.subr.mxu0 0.0
        %3881 = vmatpush1.msra.mxu0 0.0
        %3882 = vmatprep.subr.mxu0 0.0
        %3883 = vmatpush1.msra.mxu0 0.0
        %3884 = vmatprep.subr.mxu0 0.0
        %3885 = vmatpush1.msra.mxu0 0.0
        %3886 = vmatprep.subr.mxu0 0.0
        %3887 = vmatpush1.msra.mxu0 0.0
        %3888 = vmatprep.subr.mxu0 0.0
        %3889 = vmatpush1.msra.mxu0 0.0
        %3890 = vmatprep.subr.mxu0 0.0
        %3891 = vmatpush1.msra.mxu0 0.0
        %3892 = vmatprep.subr.mxu0 0.0
        %3893 = vmatpush1.msra.mxu0 0.0
        %3894 = vmatprep.subr.mxu0 0.0
        %3895 = vmatpush1.msra.mxu0 0.0
        %3896 = vmatprep.subr.mxu0 0.0
        %3897 = vmatpush1.msra.mxu0 0.0
        %3898 = vmatprep.subr.mxu0 0.0
        %3899 = vmatpush1.msra.mxu0 0.0
        %3900 = vmatprep.subr.mxu0 0.0
        %3901 = vmatpush1.msra.mxu0 0.0
        %3902 = vmatprep.subr.mxu0 0.0
        %3903 = vmatpush1.msra.mxu0 0.0
        %3904 = vmatprep.subr.mxu0 0.0
        %3905 = vmatpush1.msra.mxu0 0.0
        %3906 = vmatprep.subr.mxu0 0.0
        %3907 = vmatpush1.msra.mxu0 0.0
        %3908 = vmatprep.subr.mxu0 0.0
        %3909 = vmatpush1.msra.mxu0 0.0
        %3910 = vmatprep.mubr.f32.mxu0 0.0
        %3911 = vmatmul.mubr.f32.gmra.mrb[0].mxu0 %v3844
        %v3912 = vpop.f32.mrb[0].mxu0
        %v3913 = vadd.f32 0.0, %v3912
        %v3914 = vpop.f32.mrb[0].mxu0
        %3915 = vdwg.mxu0
        %3916 = vrot.lane.b32.xlu0 %v3442, 104
        %v3917 = vpop.permute.xlu0 %3916
        %v3918 = vsel %vm775, %v3917, 0
        %3920 = vmatprep.subr.mxu0 0.0
        %3921 = vmatpush1.xpose.msra.mxu0 %v2062
        %3922 = vmatprep.subr.mxu0 0.0
        %3923 = vmatpush1.xpose.msra.mxu0 0.0
        %3924 = vmatprep.subr.mxu0 0.0
        %3925 = vmatpush1.xpose.msra.mxu0 0.0
        %3926 = vmatprep.subr.mxu0 0.0
        %3927 = vmatpush1.xpose.msra.mxu0 0.0
        %3928 = vmatprep.subr.mxu0 0.0
        %3929 = vmatpush1.xpose.msra.mxu0 0.0
        %3930 = vmatprep.subr.mxu0 0.0
        %3931 = vmatpush1.xpose.msra.mxu0 0.0
        %3932 = vmatprep.subr.mxu0 0.0
        %3933 = vmatpush1.xpose.msra.mxu0 0.0
        %3934 = vmatprep.subr.mxu0 0.0
        %3935 = vmatpush1.xpose.msra.mxu0 0.0
        %3936 = vmatprep.subr.mxu0 0.0
        %3937 = vmatpush1.xpose.msra.mxu0 0.0
        %3938 = vmatprep.subr.mxu0 0.0
        %3939 = vmatpush1.xpose.msra.mxu0 0.0
        %3940 = vmatprep.subr.mxu0 0.0
        %3941 = vmatpush1.xpose.msra.mxu0 0.0
        %3942 = vmatprep.subr.mxu0 0.0
        %3943 = vmatpush1.xpose.msra.mxu0 0.0
        %3944 = vmatprep.subr.mxu0 0.0
        %3945 = vmatpush1.xpose.msra.mxu0 0.0
        %3946 = vmatprep.subr.mxu0 0.0
        %3947 = vmatpush1.xpose.msra.mxu0 0.0
        %3948 = vmatprep.subr.mxu0 0.0
        %3949 = vmatpush1.xpose.msra.mxu0 0.0
        %3950 = vmatprep.subr.mxu0 0.0
        %3951 = vmatpush1.xpose.msra.mxu0 0.0
        %3952 = vmatprep.subr.mxu0 0.0
        %3953 = vmatpush1.xpose.msra.mxu0 0.0
        %3954 = vmatprep.subr.mxu0 0.0
        %3955 = vmatpush1.xpose.msra.mxu0 0.0
        %3956 = vmatprep.subr.mxu0 0.0
        %3957 = vmatpush1.xpose.msra.mxu0 0.0
        %3958 = vmatprep.subr.mxu0 0.0
        %3959 = vmatpush1.xpose.msra.mxu0 0.0
        %3960 = vmatprep.subr.mxu0 0.0
        %3961 = vmatpush1.xpose.msra.mxu0 0.0
        %3962 = vmatprep.subr.mxu0 0.0
        %3963 = vmatpush1.xpose.msra.mxu0 0.0
        %3964 = vmatprep.subr.mxu0 0.0
        %3965 = vmatpush1.xpose.msra.mxu0 0.0
        %3966 = vmatprep.subr.mxu0 0.0
        %3967 = vmatpush1.xpose.msra.mxu0 0.0
        %3968 = vmatprep.subr.mxu0 0.0
        %3969 = vmatpush1.xpose.msra.mxu0 0.0
        %3970 = vmatprep.subr.mxu0 0.0
        %3971 = vmatpush1.xpose.msra.mxu0 0.0
        %3972 = vmatprep.subr.mxu0 0.0
        %3973 = vmatpush1.xpose.msra.mxu0 0.0
        %3974 = vmatprep.subr.mxu0 0.0
        %3975 = vmatpush1.xpose.msra.mxu0 0.0
        %3976 = vmatprep.subr.mxu0 0.0
        %3977 = vmatpush1.xpose.msra.mxu0 0.0
        %3978 = vmatprep.subr.mxu0 0.0
        %3979 = vmatpush1.xpose.msra.mxu0 0.0
        %3980 = vmatprep.subr.mxu0 0.0
        %3981 = vmatpush1.xpose.msra.mxu0 0.0
        %3982 = vmatprep.subr.mxu0 0.0
        %3983 = vmatpush1.xpose.msra.mxu0 0.0
        %3984 = vmatprep.mubr.f32.mxu0 0.0
        %3985 = vmatmul.mubr.f32.gmra.mrb[0].mxu0 %v3918
        %v3986 = vpop.f32.mrb[0].mxu0
        %v3987 = vadd.f32 0.0, %v3986
        %v3988 = vpop.f32.mrb[0].mxu0
        %3989 = vdwg.mxu0
        %v3990 = vsel %vm775, %v3987, -inf
        %3991 = vmax.xlane.f32.xlu0 %v3990
        %v3992 = vpop.xlane.xlu0 %3991
        %v3993 = vsub.f32 %v3987, %v3992
        %v3994 = vmul.f32 %v3993, 1.442695
        %v3995 = vpow.pop %v3994
        %v3996 = vsel %vm775, %v3995, 0.0
        %3997 = vadd.xlane.f32.xlu0 %v3996
        %v3998 = vpop.xlane.xlu0 %3997
        %v3999 = vrcp.pop %v3998
        %v4000 = vmul.f32 %v3995, %v3999
        %v4002 = vsel %vm775, %v4000, 0
        %4004 = vmatprep.subr.mxu0 0.0
        %4005 = vmatpush1.msra.mxu0 %v2146
        %4006 = vmatprep.subr.mxu0 0.0
        %4007 = vmatpush1.msra.mxu0 0.0
        %4008 = vmatprep.subr.mxu0 0.0
        %4009 = vmatpush1.msra.mxu0 0.0
        %4010 = vmatprep.subr.mxu0 0.0
        %4011 = vmatpush1.msra.mxu0 0.0
        %4012 = vmatprep.subr.mxu0 0.0
        %4013 = vmatpush1.msra.mxu0 0.0
        %4014 = vmatprep.subr.mxu0 0.0
        %4015 = vmatpush1.msra.mxu0 0.0
        %4016 = vmatprep.subr.mxu0 0.0
        %4017 = vmatpush1.msra.mxu0 0.0
        %4018 = vmatprep.subr.mxu0 0.0
        %4019 = vmatpush1.msra.mxu0 0.0
        %4020 = vmatprep.subr.mxu0 0.0
        %4021 = vmatpush1.msra.mxu0 0.0
        %4022 = vmatprep.subr.mxu0 0.0
        %4023 = vmatpush1.msra.mxu0 0.0
        %4024 = vmatprep.subr.mxu0 0.0
        %4025 = vmatpush1.msra.mxu0 0.0
        %4026 = vmatprep.subr.mxu0 0.0
        %4027 = vmatpush1.msra.mxu0 0.0
        %4028 = vmatprep.subr.mxu0 0.0
        %4029 = vmatpush1.msra.mxu0 0.0
        %4030 = vmatprep.subr.mxu0 0.0
        %4031 = vmatpush1.msra.mxu0 0.0
        %4032 = vmatprep.subr.mxu0 0.0
        %4033 = vmatpush1.msra.mxu0 0.0
        %4034 = vmatprep.subr.mxu0 0.0
        %4035 = vmatpush1.msra.mxu0 0.0
        %4036 = vmatprep.subr.mxu0 0.0
        %4037 = vmatpush1.msra.mxu0 0.0
        %4038 = vmatprep.subr.mxu0 0.0
        %4039 = vmatpush1.msra.mxu0 0.0
        %4040 = vmatprep.subr.mxu0 0.0
        %4041 = vmatpush1.msra.mxu0 0.0
        %4042 = vmatprep.subr.mxu0 0.0
        %4043 = vmatpush1.msra.mxu0 0.0
        %4044 = vmatprep.subr.mxu0 0.0
        %4045 = vmatpush1.msra.mxu0 0.0
        %4046 = vmatprep.subr.mxu0 0.0
        %4047 = vmatpush1.msra.mxu0 0.0
        %4048 = vmatprep.subr.mxu0 0.0
        %4049 = vmatpush1.msra.mxu0 0.0
        %4050 = vmatprep.subr.mxu0 0.0
        %4051 = vmatpush1.msra.mxu0 0.0
        %4052 = vmatprep.subr.mxu0 0.0
        %4053 = vmatpush1.msra.mxu0 0.0
        %4054 = vmatprep.subr.mxu0 0.0
        %4055 = vmatpush1.msra.mxu0 0.0
        %4056 = vmatprep.subr.mxu0 0.0
        %4057 = vmatpush1.msra.mxu0 0.0
        %4058 = vmatprep.subr.mxu0 0.0
        %4059 = vmatpush1.msra.mxu0 0.0
        %4060 = vmatprep.subr.mxu0 0.0
        %4061 = vmatpush1.msra.mxu0 0.0
        %4062 = vmatprep.subr.mxu0 0.0
        %4063 = vmatpush1.msra.mxu0 0.0
        %4064 = vmatprep.subr.mxu0 0.0
        %4065 = vmatpush1.msra.mxu0 0.0
        %4066 = vmatprep.subr.mxu0 0.0
        %4067 = vmatpush1.msra.mxu0 0.0
        %4068 = vmatprep.mubr.f32.mxu0 0.0
        %4069 = vmatmul.mubr.f32.gmra.mrb[0].mxu0 %v4002
        %v4070 = vpop.f32.mrb[0].mxu0
        %v4071 = vadd.f32 0.0, %v4070
        %v4072 = vpop.f32.mrb[0].mxu0
        %4073 = vdwg.mxu0
        %4075 = vrot.lane.b32.xlu0 %v3755, 8
        %v4076 = vpop.permute.xlu0 %4075
        %4079 = vrot.lane.b32.xlu0 %v3913, 16
        %v4080 = vpop.permute.xlu0 %4079
        %4083 = vrot.lane.b32.xlu0 %v4071, 24
        %v4084 = vpop.permute.xlu0 %4083
        %v4086 = vsel %vm775, %v3597, %v4076
        %v4087 = vsel %vm1446, %v4086, %v4080
        %v4088 = vsel %vm1448, %v4087, %v4084
        %s4089 = scalar_lea.vmem %s10, 32
        %v4090 = vld [vmem:[%s4089] sm:$0xff]
        %v4091 = vld [vmem:[%s4089 + $0x8] sm:$0xff]
        %v4092 = vld [vmem:[%s4089 + $0x10] sm:$0xff]
        %v4093 = vld [vmem:[%s4089 + $0x18] sm:$0xff]
        %v4095 = vsel %vm665, %v4088, 0
        %4097 = vmatprep.subr.mxu0 0.0
        %4098 = vmatpush1.msra.mxu0 %v4090
        %4099 = vmatprep.subr.mxu0 0.0
        %4100 = vmatpush1.msra.mxu0 %v4091
        %4101 = vmatprep.subr.mxu0 0.0
        %4102 = vmatpush1.msra.mxu0 %v4092
        %4103 = vmatprep.subr.mxu0 0.0
        %4104 = vmatpush1.msra.mxu0 %v4093
        %4105 = vmatprep.subr.mxu0 0.0
        %4106 = vmatpush1.msra.mxu0 0.0
        %4107 = vmatprep.subr.mxu0 0.0
        %4108 = vmatpush1.msra.mxu0 0.0
        %4109 = vmatprep.subr.mxu0 0.0
        %4110 = vmatpush1.msra.mxu0 0.0
        %4111 = vmatprep.subr.mxu0 0.0
        %4112 = vmatpush1.msra.mxu0 0.0
        %4113 = vmatprep.subr.mxu0 0.0
        %4114 = vmatpush1.msra.mxu0 0.0
        %4115 = vmatprep.subr.mxu0 0.0
        %4116 = vmatpush1.msra.mxu0 0.0
        %4117 = vmatprep.subr.mxu0 0.0
        %4118 = vmatpush1.msra.mxu0 0.0
        %4119 = vmatprep.subr.mxu0 0.0
        %4120 = vmatpush1.msra.mxu0 0.0
        %4121 = vmatprep.subr.mxu0 0.0
        %4122 = vmatpush1.msra.mxu0 0.0
        %4123 = vmatprep.subr.mxu0 0.0
        %4124 = vmatpush1.msra.mxu0 0.0
        %4125 = vmatprep.subr.mxu0 0.0
        %4126 = vmatpush1.msra.mxu0 0.0
        %4127 = vmatprep.subr.mxu0 0.0
        %4128 = vmatpush1.msra.mxu0 0.0
        %4129 = vmatprep.subr.mxu0 0.0
        %4130 = vmatpush1.msra.mxu0 0.0
        %4131 = vmatprep.subr.mxu0 0.0
        %4132 = vmatpush1.msra.mxu0 0.0
        %4133 = vmatprep.subr.mxu0 0.0
        %4134 = vmatpush1.msra.mxu0 0.0
        %4135 = vmatprep.subr.mxu0 0.0
        %4136 = vmatpush1.msra.mxu0 0.0
        %4137 = vmatprep.subr.mxu0 0.0
        %4138 = vmatpush1.msra.mxu0 0.0
        %4139 = vmatprep.subr.mxu0 0.0
        %4140 = vmatpush1.msra.mxu0 0.0
        %4141 = vmatprep.subr.mxu0 0.0
        %4142 = vmatpush1.msra.mxu0 0.0
        %4143 = vmatprep.subr.mxu0 0.0
        %4144 = vmatpush1.msra.mxu0 0.0
        %4145 = vmatprep.subr.mxu0 0.0
        %4146 = vmatpush1.msra.mxu0 0.0
        %4147 = vmatprep.subr.mxu0 0.0
        %4148 = vmatpush1.msra.mxu0 0.0
        %4149 = vmatprep.subr.mxu0 0.0
        %4150 = vmatpush1.msra.mxu0 0.0
        %4151 = vmatprep.subr.mxu0 0.0
        %4152 = vmatpush1.msra.mxu0 0.0
        %4153 = vmatprep.subr.mxu0 0.0
        %4154 = vmatpush1.msra.mxu0 0.0
        %4155 = vmatprep.subr.mxu0 0.0
        %4156 = vmatpush1.msra.mxu0 0.0
        %4157 = vmatprep.subr.mxu0 0.0
        %4158 = vmatpush1.msra.mxu0 0.0
        %4159 = vmatprep.subr.mxu0 0.0
        %4160 = vmatpush1.msra.mxu0 0.0
        %4161 = vmatprep.mubr.f32.mxu0 0.0
        %4162 = vmatmul.mubr.f32.gmra.mrb[0].mxu0 %v4095
        %v4163 = vpop.f32.mrb[0].mxu0
        %v4164 = vadd.f32 0.0, %v4163
        %v4165 = vpop.f32.mrb[0].mxu0
        %4166 = vdwg.mxu0
        %v4167 = vadd.f32 %v3411, %v4164
        %s4168 = scalar_lea.vmem %s11, 1
        %v4169 = vld [vmem:[%s4168] sm:$0x1]
        %v4171 = vlaneseq
        %v4172 = vshrl.u32 %v4171, 7
        %v4173 = vsub.s32 0, %v4172
        %v4174 = vrot.slane %v4169, %v4173
        %v4176 = vadd.f32 %v4167, %v4174
        %s4177 = scalar_lea.vmem %s12, 1
        %v4178 = vld [vmem:[%s4177] sm:$0x1]
        %s4179 = scalar_lea.vmem %s13, 1
        %v4180 = vld [vmem:[%s4179] sm:$0x1]
        %v4181 = vsel %vm665, %v4176, 0.0
        %4182 = vadd.xlane.f32.xlu0 %v4181
        %v4183 = vpop.xlane.xlu0 %4182
        %v4184 = vmul.f32 %v4183, %v669
        %v4185 = vsub.f32 %v4176, %v4184
        %v4186 = vmul.f32 %v4185, %v4185
        %v4187 = vsel %vm665, %v4186, 0.0
        %4188 = vadd.xlane.f32.xlu0 %v4187
        %v4189 = vpop.xlane.xlu0 %4188
        %v4190 = vmul.f32 %v4189, %v669
        %v4191 = vadd.f32 %v4190, 1e-05
        %v4192 = vrsqrt.pop %v4191
        %v4193 = vmul.f32 %v4185, %v4192
        %v4195 = vlaneseq
        %v4196 = vshrl.u32 %v4195, 7
        %v4197 = vsub.s32 0, %v4196
        %v4198 = vrot.slane %v4178, %v4197
        %v4200 = vmul.f32 %v4193, %v4198
        %v4202 = vlaneseq
        %v4203 = vshrl.u32 %v4202, 7
        %v4204 = vsub.s32 0, %v4203
        %v4205 = vrot.slane %v4180, %v4204
        %v4207 = vadd.f32 %v4200, %v4205
        %s4208 = scalar_lea.vmem %s14, 32
        %v4209 = vld [vmem:[%s4208] sm:$0xff]
        %v4210 = vld [vmem:[%s4208 + $0x8] sm:$0xff]
        %v4211 = vld [vmem:[%s4208 + $0x10] sm:$0xff]
        %v4212 = vld [vmem:[%s4208 + $0x18] sm:$0xff]
        %s4213 = scalar_lea.vmem %s15, 1
        %v4214 = vld [vmem:[%s4213] sm:$0x1]
        %v4216 = vlaneseq
        %v4217 = vshrl.u32 %v4216, 7
        %v4218 = vsub.s32 0, %v4217
        %v4219 = vrot.slane %v4214, %v4218
        %v4222 = vsel %vm665, %v4207, 0
        %4224 = vmatprep.subr.mxu0 0.0
        %4225 = vmatpush1.msra.mxu0 %v4209
        %4226 = vmatprep.subr.mxu0 0.0
        %4227 = vmatpush1.msra.mxu0 %v4210
        %4228 = vmatprep.subr.mxu0 0.0
        %4229 = vmatpush1.msra.mxu0 %v4211
        %4230 = vmatprep.subr.mxu0 0.0
        %4231 = vmatpush1.msra.mxu0 %v4212
        %4232 = vmatprep.subr.mxu0 0.0
        %4233 = vmatpush1.msra.mxu0 0.0
        %4234 = vmatprep.subr.mxu0 0.0
        %4235 = vmatpush1.msra.mxu0 0.0
        %4236 = vmatprep.subr.mxu0 0.0
        %4237 = vmatpush1.msra.mxu0 0.0
        %4238 = vmatprep.subr.mxu0 0.0
        %4239 = vmatpush1.msra.mxu0 0.0
        %4240 = vmatprep.subr.mxu0 0.0
        %4241 = vmatpush1.msra.mxu0 0.0
        %4242 = vmatprep.subr.mxu0 0.0
        %4243 = vmatpush1.msra.mxu0 0.0
        %4244 = vmatprep.subr.mxu0 0.0
        %4245 = vmatpush1.msra.mxu0 0.0
        %4246 = vmatprep.subr.mxu0 0.0
        %4247 = vmatpush1.msra.mxu0 0.0
        %4248 = vmatprep.subr.mxu0 0.0
        %4249 = vmatpush1.msra.mxu0 0.0
        %4250 = vmatprep.subr.mxu0 0.0
        %4251 = vmatpush1.msra.mxu0 0.0
        %4252 = vmatprep.subr.mxu0 0.0
        %4253 = vmatpush1.msra.mxu0 0.0
        %4254 = vmatprep.subr.mxu0 0.0
        %4255 = vmatpush1.msra.mxu0 0.0
        %4256 = vmatprep.subr.mxu0 0.0
        %4257 = vmatpush1.msra.mxu0 0.0
        %4258 = vmatprep.subr.mxu0 0.0
        %4259 = vmatpush1.msra.mxu0 0.0
        %4260 = vmatprep.subr.mxu0 0.0
        %4261 = vmatpush1.msra.mxu0 0.0
        %4262 = vmatprep.subr.mxu0 0.0
        %4263 = vmatpush1.msra.mxu0 0.0
        %4264 = vmatprep.subr.mxu0 0.0
        %4265 = vmatpush1.msra.mxu0 0.0
        %4266 = vmatprep.subr.mxu0 0.0
        %4267 = vmatpush1.msra.mxu0 0.0
        %4268 = vmatprep.subr.mxu0 0.0
        %4269 = vmatpush1.msra.mxu0 0.0
        %4270 = vmatprep.subr.mxu0 0.0
        %4271 = vmatpush1.msra.mxu0 0.0
        %4272 = vmatprep.subr.mxu0 0.0
        %4273 = vmatpush1.msra.mxu0 0.0
        %4274 = vmatprep.subr.mxu0 0.0
        %4275 = vmatpush1.msra.mxu0 0.0
        %4276 = vmatprep.subr.mxu0 0.0
        %4277 = vmatpush1.msra.mxu0 0.0
        %4278 = vmatprep.subr.mxu0 0.0
        %4279 = vmatpush1.msra.mxu0 0.0
        %4280 = vmatprep.subr.mxu0 0.0
        %4281 = vmatpush1.msra.mxu0 0.0
        %4282 = vmatprep.subr.mxu0 0.0
        %4283 = vmatpush1.msra.mxu0 0.0
        %4284 = vmatprep.subr.mxu0 0.0
        %4285 = vmatpush1.msra.mxu0 0.0
        %4286 = vmatprep.subr.mxu0 0.0
        %4287 = vmatpush1.msra.mxu0 0.0
        %4288 = vmatprep.mubr.f32.mxu0 0.0
        %4289 = vmatmul.mubr.f32.gmra.mrb[0].mxu0 %v4222
        %v4290 = vpop.f32.mrb[0].mxu0
        %v4291 = vadd.f32 %v4219, %v4290
        %v4292 = vpop.f32.mrb[0].mxu0
        %4293 = vdwg.mxu0
        %v4294 = vmul.f32 %v4291, 0.5
        %v4295 = vmul.f32 %v4291, 0.044715
        %v4296 = vmul.f32 %v4295, %v4291
        %v4297 = vmul.f32 %v4296, %v4291
        %v4298 = vadd.f32 %v4291, %v4297
        %v4299 = vmul.f32 %v4298, 0.7978846
        %v4300 = vtanh.pop %v4299
        %v4301 = vadd.f32 %v4300, 1.0
        %v4302 = vmul.f32 %v4294, %v4301
        %s4303 = scalar_lea.vmem %s16, 128
        %v4304 = vld [vmem:[%s4303] sm:$0xff]
        %v4305 = vld [vmem:[%s4303 + $0x8] sm:$0xff]
        %v4306 = vld [vmem:[%s4303 + $0x10] sm:$0xff]
        %v4307 = vld [vmem:[%s4303 + $0x18] sm:$0xff]
        %v4308 = vld [vmem:[%s4303 + $0x20] sm:$0xff]
        %v4309 = vld [vmem:[%s4303 + $0x28] sm:$0xff]
        %v4310 = vld [vmem:[%s4303 + $0x30] sm:$0xff]
        %v4311 = vld [vmem:[%s4303 + $0x38] sm:$0xff]
        %v4312 = vld [vmem:[%s4303 + $0x40] sm:$0xff]
        %v4313 = vld [vmem:[%s4303 + $0x48] sm:$0xff]
        %v4314 = vld [vmem:[%s4303 + $0x50] sm:$0xff]
        %v4315 = vld [vmem:[%s4303 + $0x58] sm:$0xff]
        %v4316 = vld [vmem:[%s4303 + $0x60] sm:$0xff]
        %v4317 = vld [vmem:[%s4303 + $0x68] sm:$0xff]
        %v4318 = vld [vmem:[%s4303 + $0x70] sm:$0xff]
        %v4319 = vld [vmem:[%s4303 + $0x78] sm:$0xff]
        %4320 = vmatprep.subr.mxu0 0.0
        %4321 = vmatpush1.msra.mxu0 %v4304
        %4322 = vmatprep.subr.mxu0 0.0
        %4323 = vmatpush1.msra.mxu0 %v4305
        %4324 = vmatprep.subr.mxu0 0.0
        %4325 = vmatpush1.msra.mxu0 %v4306
        %4326 = vmatprep.subr.mxu0 0.0
        %4327 = vmatpush1.msra.mxu0 %v4307
        %4328 = vmatprep.subr.mxu0 0.0
        %4329 = vmatpush1.msra.mxu0 %v4308
        %4330 = vmatprep.subr.mxu0 0.0
        %4331 = vmatpush1.msra.mxu0 %v4309
        %4332 = vmatprep.subr.mxu0 0.0
        %4333 = vmatpush1.msra.mxu0 %v4310
        %4334 = vmatprep.subr.mxu0 0.0
        %4335 = vmatpush1.msra.mxu0 %v4311
        %4336 = vmatprep.subr.mxu0 0.0
        %4337 = vmatpush1.msra.mxu0 %v4312
        %4338 = vmatprep.subr.mxu0 0.0
        %4339 = vmatpush1.msra.mxu0 %v4313
        %4340 = vmatprep.subr.mxu0 0.0
        %4341 = vmatpush1.msra.mxu0 %v4314
        %4342 = vmatprep.subr.mxu0 0.0
        %4343 = vmatpush1.msra.mxu0 %v4315
        %4344 = vmatprep.subr.mxu0 0.0
        %4345 = vmatpush1.msra.mxu0 %v4316
        %4346 = vmatprep.subr.mxu0 0.0
        %4347 = vmatpush1.msra.mxu0 %v4317
        %4348 = vmatprep.subr.mxu0 0.0
        %4349 = vmatpush1.msra.mxu0 %v4318
        %4350 = vmatprep.subr.mxu0 0.0
        %4351 = vmatpush1.msra.mxu0 %v4319
        %4352 = vmatprep.subr.mxu0 0.0
        %4353 = vmatpush1.msra.mxu0 0.0
        %4354 = vmatprep.subr.mxu0 0.0
        %4355 = vmatpush1.msra.mxu0 0.0
        %4356 = vmatprep.subr.mxu0 0.0
        %4357 = vmatpush1.msra.mxu0 0.0
        %4358 = vmatprep.subr.mxu0 0.0
        %4359 = vmatpush1.msra.mxu0 0.0
        %4360 = vmatprep.subr.mxu0 0.0
        %4361 = vmatpush1.msra.mxu0 0.0
        %4362 = vmatprep.subr.mxu0 0.0
        %4363 = vmatpush1.msra.mxu0 0.0
        %4364 = vmatprep.subr.mxu0 0.0
        %4365 = vmatpush1.msra.mxu0 0.0
        %4366 = vmatprep.subr.mxu0 0.0
        %4367 = vmatpush1.msra.mxu0 0.0
        %4368 = vmatprep.subr.mxu0 0.0
        %4369 = vmatpush1.msra.mxu0 0.0
        %4370 = vmatprep.subr.mxu0 0.0
        %4371 = vmatpush1.msra.mxu0 0.0
        %4372 = vmatprep.subr.mxu0 0.0
        %4373 = vmatpush1.msra.mxu0 0.0
        %4374 = vmatprep.subr.mxu0 0.0
        %4375 = vmatpush1.msra.mxu0 0.0
        %4376 = vmatprep.subr.mxu0 0.0
        %4377 = vmatpush1.msra.mxu0 0.0
        %4378 = vmatprep.subr.mxu0 0.0
        %4379 = vmatpush1.msra.mxu0 0.0
        %4380 = vmatprep.subr.mxu0 0.0
        %4381 = vmatpush1.msra.mxu0 0.0
        %4382 = vmatprep.subr.mxu0 0.0
        %4383 = vmatpush1.msra.mxu0 0.0
        %4384 = vmatprep.mubr.f32.mxu0 0.0
        %4385 = vmatmul.mubr.f32.gmra.mrb[0].mxu0 %v4302
        %v4386 = vpop.f32.mrb[0].mxu0
        %v4387 = vadd.f32 0.0, %v4386
        %v4388 = vpop.f32.mrb[0].mxu0
        %4389 = vdwg.mxu0
        %v4390 = vadd.f32 %v4176, %v4387
        %s4391 = scalar_lea.vmem %s17, 1
        %v4392 = vld [vmem:[%s4391] sm:$0x1]
        %v4394 = vlaneseq
        %v4395 = vshrl.u32 %v4394, 7
        %v4396 = vsub.s32 0, %v4395
        %v4397 = vrot.slane %v4392, %v4396
        %v4399 = vadd.f32 %v4390, %v4397
        %v4400 = vld [vmem:[%s18] sm:$0x1]
        %v4401 = vld [vmem:[%s19] sm:$0x1]
        %v4402 = vsel %vm665, %v4399, 0.0
        %4403 = vadd.xlane.f32.xlu0 %v4402
        %v4404 = vpop.xlane.xlu0 %4403
        %v4405 = vmul.f32 %v4404, %v669
        %v4406 = vsub.f32 %v4399, %v4405
        %v4407 = vmul.f32 %v4406, %v4406
        %v4408 = vsel %vm665, %v4407, 0.0
        %4409 = vadd.xlane.f32.xlu0 %v4408
        %v4410 = vpop.xlane.xlu0 %4409
        %v4411 = vmul.f32 %v4410, %v669
        %v4412 = vadd.f32 %v4411, 1e-05
        %v4413 = vrsqrt.pop %v4412
        %v4414 = vmul.f32 %v4406, %v4413
        %v4416 = vlaneseq
        %v4417 = vshrl.u32 %v4416, 7
        %v4418 = vsub.s32 0, %v4417
        %v4419 = vrot.slane %v4400, %v4418
        %v4421 = vmul.f32 %v4414, %v4419
        %v4423 = vlaneseq
        %v4424 = vshrl.u32 %v4423, 7
        %v4425 = vsub.s32 0, %v4424
        %v4426 = vrot.slane %v4401, %v4425
        %v4428 = vadd.f32 %v4421, %v4426
        %4429 = vst.msk [vmem:[%s646] sm:$0xff] %vm665, %v4428
        %s4430 = sand.u32 %s477, 1
        %s4431 = scalar_lea.sflag [#allocation3], %s4430
        %s4432 = sand.u32 %s477, 1
        %s4433 = smul.addr %s4432, 8
        %s4434 = scalar_lea.vmem [#allocation2], %s4433
        // Predicated region
        $region101: #{tpu_custom_call.1} parent=99 // pred_check
          %p4435 = pneg %p487
        $region102: #{tpu_custom_call.1} parent=99 // pred_check_branch
          %4437 = sbr.rel (%p4435) target = $region104
        $region103: #{tpu_custom_call.1} parent=99 // pred_region
          %s4439 = ssub.s32 128, 128
          %4440 = vsyncadd %s4431, %s4439
          %s4441 = smul.addr %s34, 128
          %s4442 = scalar_lea.hbm %s20, %s4441
          %s4444 = sshll.u32 %s4434, 4
          %s4445 = int_to_ptr.vmem [resolvable:$true] %s4444
          %4447 = dma.vmem_to_hbm [thread:$0]  %s4445, 128, %s4442, %s4431
        $region104: #{tpu_custom_call.1} parent=99 // pred_fallthru
          _
      $region100: #{tpu_custom_call.1} parent=5 // pred_fallthru
        _
      %p4448 = scmp.le.s32.totalorder 2, %s29
      // Predicated region
      $region105: #{tpu_custom_call.1} parent=5 // pred_check
        %p4449 = pneg %p4448
      $region106: #{tpu_custom_call.1} parent=5 // pred_check_branch
        %4451 = sbr.rel (%p4449) target = $region108
      $region107: #{tpu_custom_call.1} parent=5 // pred_region
        %s4452 = ssub.s32 %s29, 2
        // Predicated region
        $region109: #{tpu_custom_call.1} parent=107 // pred_check
          %p4453 = pneg %p493
        $region110: #{tpu_custom_call.1} parent=107 // pred_check_branch
          %4455 = sbr.rel (%p4453) target = $region112
        $region111: #{tpu_custom_call.1} parent=107 // pred_region
          %s4456 = sand.u32 %s478, 1
          %s4457 = scalar_lea.sflag [#allocation3], %s4456
          %s4458 = sand.u32 %s478, 1
          %s4459 = smul.addr %s4458, 8
          %s4460 = scalar_lea.vmem [#allocation2], %s4459
          %4461 = dma.done %s4457, 128
        $region112: #{tpu_custom_call.1} parent=107 // pred_fallthru
          _
      $region108: #{tpu_custom_call.1} parent=5 // pred_fallthru
        _
    $region6: #{tpu_custom_call.1} parent=1 // loop_footer
      %s33 = sadd.s32 1, %s29
    $region7: #{tpu_custom_call.1} parent=1 // loop_footer_branch
      %28 = sbr.rel target = $region3
    $region8: #{tpu_custom_call.1} parent=1 // loop_exit
      _
    %4462 = vsyncpa [#allocation3], 1
    %s4463 = scalar_lea.sflag [#allocation3], 1
    %4464 = vsyncpa %s4463, 1

</llo_original>
